<compile_context>
chip_gen: v5e
topology: v5e:2x2
jax: 0.10.0
libtpu: 0.0.40
codegen_flags: <defaults>
</compile_context>

<pallas_src>
import functools
import math

import jax
import jax.numpy as jnp
from jax.experimental import pallas as pl
from jax.experimental.pallas import tpu as pltpu


# -----------------------------------------------------------------------------
# Fused LSTM layer kernel: per-time-block input projection prologue + TT
# unrolled recurrent steps, carry (h, c[, sum]) resident in VMEM scratch.
# -----------------------------------------------------------------------------
def _lstm_layer_kernel(x_ref, w_ih_ref, b_ref, w_hh_ref, *refs,
                       emit_hseq, seq_len, tt):
    if emit_hseq:
        hseq_ref, gin_sc, h_sc, c_sc = refs
        mean_ref = sum_sc = None
    else:
        mean_ref, gin_sc, h_sc, c_sc, sum_sc = refs
        hseq_ref = None

    blk = pl.program_id(0)
    nblk = pl.num_programs(0)
    B, H = h_sc.shape
    E = x_ref.shape[-1]

    @pl.when(blk == 0)
    def _init():
        h_sc[...] = jnp.zeros_like(h_sc)
        c_sc[...] = jnp.zeros_like(c_sc)
        if not emit_hseq:
            sum_sc[...] = jnp.zeros_like(sum_sc)

    # Prologue: fused, time-independent input projection for this time block.
    #   gin = x_block @ W_ih^T + (b_ih + b_hh)            (TT*B, 4H) f32
    # Lands in VMEM scratch so it is NOT kept live in vregs across the
    # unrolled recurrence below.
    gin_sc[...] = (
        jnp.dot(x_ref[...].reshape(tt * B, E), w_ih_ref[...],
                preferred_element_type=jnp.float32)
        + b_ref[...]
    )

    def _sigmoid(z):
        # sigmoid(z) = 0.5 * tanh(0.5 z) + 0.5  -> single EUP op per gate.
        return 0.5 * jnp.tanh(0.5 * z) + 0.5

    # Static unroll over the TT timesteps of this block (TT is small; full
    # LLO scheduling visibility).  Only h @ W_hh^T + gate math is serial.
    for s in range(tt):
        # NOTE: w_hh_ref[...] is deliberately read inside the loop — a cheap
        # VMEM reload per step instead of pinning 256 KiB of vregs (spill).
        gates = gin_sc[pl.ds(s * B, B), :] + jnp.dot(
            h_sc[...], w_hh_ref[...], preferred_element_type=jnp.float32)

        # PyTorch gate order: i, f, g, o (128-aligned slices since H % 128==0).
        i_g = _sigmoid(gates[:, 0 * H:1 * H])
        f_g = _sigmoid(gates[:, 1 * H:2 * H])
        g_g = jnp.tanh(gates[:, 2 * H:3 * H])
        o_g = _sigmoid(gates[:, 3 * H:4 * H])

        c_new = f_g * c_sc[...] + i_g * g_g
        h_new = o_g * jnp.tanh(c_new)

        c_sc[...] = c_new
        h_sc[...] = h_new

        if emit_hseq:
            hseq_ref[s] = h_new.astype(hseq_ref.dtype)
        else:
            sum_sc[...] = sum_sc[...] + h_new

    if not emit_hseq:
        @pl.when(blk == nblk - 1)
        def _finalize():
            mean_ref[...] = (sum_sc[...] * (1.0 / seq_len)).astype(mean_ref.dtype)


def _pick_tt(T, B, E, H, budget_bytes=8 << 20):
    """Largest divisor-of-T time block whose VMEM footprint fits a
    conservative budget (safe across v5e/v6e/v7x scoped-VMEM defaults)."""
    G = 4 * H
    fixed = (E * G + H * G + G + 3 * B * H) * 4          # resident weights + carries
    for cand in (32, 16, 8, 4, 2, 1):
        if T % cand:
            continue
        # double-buffered x stream + double-buffered h_seq out + gin scratch
        stream = (2 * cand * B * E + 2 * cand * B * H + cand * B * G) * 4
        if fixed + stream <= budget_bytes:
            return cand
    return 1


def lstm_layer_pallas(x, w_ih_t, b, w_hh_t, *, emit_hseq):
    """One LSTM layer.

    x: (T, B, E) f32, w_ih_t: (E, 4H) f32, b: (1, 4H) f32, w_hh_t: (H, 4H) f32.
    Returns h_seq (T, B, H) if emit_hseq else the time-mean h_mean (B, H).
    """
    T, B, E = x.shape
    H = w_hh_t.shape[0]
    G = 4 * H
    tt = _pick_tt(T, B, E, H)

    kernel = functools.partial(
        _lstm_layer_kernel, emit_hseq=emit_hseq, seq_len=T, tt=tt)

    in_specs = [
        pl.BlockSpec((tt, B, E), lambda i: (i, 0, 0)),   # streamed x block
        pl.BlockSpec((E, G), lambda i: (0, 0)),          # W_ih^T (resident)
        pl.BlockSpec((1, G), lambda i: (0, 0)),          # combined bias
        pl.BlockSpec((H, G), lambda i: (0, 0)),          # W_hh^T (resident)
    ]
    scratch = [
        pltpu.VMEM((tt * B, G), jnp.float32),            # gin prologue result
        pltpu.VMEM((B, H), jnp.float32),                 # h carry
        pltpu.VMEM((B, H), jnp.float32),                 # c carry
    ]
    if emit_hseq:
        out_shape = jax.ShapeDtypeStruct((T, B, H), jnp.float32)
        out_specs = pl.BlockSpec((tt, B, H), lambda i: (i, 0, 0))
    else:
        out_shape = jax.ShapeDtypeStruct((B, H), jnp.float32)
        out_specs = pl.BlockSpec((B, H), lambda i: (0, 0))    # resident accumulator
        scratch = scratch + [pltpu.VMEM((B, H), jnp.float32)]  # time-sum

    return pl.pallas_call(
        kernel,
        out_shape=out_shape,
        grid_spec=pltpu.PrefetchScalarGridSpec(
            num_scalar_prefetch=0,
            grid=(T // tt,),
            in_specs=in_specs,
            out_specs=out_specs,
            scratch_shapes=scratch,
        ),
        compiler_params=pltpu.CompilerParams(
            # Time axis is a recurrence -> "arbitrary".
            # TODO(synk): on v7x (2 TCs) with B_pad >= 16, add a leading
            # batch-block grid axis marked "parallel"; for large H set
            # vmem_limit_bytes and/or pipeline_mode=pl.Buffered(1) on W_hh.
            dimension_semantics=("arbitrary",),
        ),
    )(x, w_ih_t, b, w_hh_t)


# -----------------------------------------------------------------------------
# SentenceEmbedding wrapper: embedding lookup -> stacked LSTM -> mean over time.
# -----------------------------------------------------------------------------
class Config:
    def __init__(self, embed_size, embed_dim, hidden_dim, layers, dropout,
                 encoder_type="LSTMEncoder"):
        self.embed_size = embed_size
        self.embed_dim = embed_dim
        self.hidden_dim = hidden_dim
        self.layers = layers
        self.dropout = dropout
        self.encoder_type = encoder_type


def init_params(key, config):
    """Embedding table + per-layer nn.LSTM parameters:
       weight_ih (4H, in), weight_hh (4H, H), bias_ih (4H,), bias_hh (4H,)."""
    H = config.hidden_dim
    bound = 1.0 / math.sqrt(H)
    key, k_emb = jax.random.split(key)
    embed_table = jax.random.normal(
        k_emb, (config.embed_size, config.embed_dim), jnp.float32)
    lstm_params = []
    in_dim = config.embed_dim
    for _ in range(config.layers):
        key, k1, k2, k3, k4 = jax.random.split(key, 5)
        w_ih = jax.random.uniform(k1, (4 * H, in_dim), jnp.float32, -bound, bound)
        w_hh = jax.random.uniform(k2, (4 * H, H), jnp.float32, -bound, bound)
        b_ih = jax.random.uniform(k3, (4 * H,), jnp.float32, -bound, bound)
        b_hh = jax.random.uniform(k4, (4 * H,), jnp.float32, -bound, bound)
        lstm_params.append((w_ih, w_hh, b_ih, b_hh))
        in_dim = H
    return embed_table, lstm_params


def sentence_embedding_forward(embed_table, lstm_params, input_sentence):
    """input_sentence: (seq_len, batch) int token ids -> (batch, hidden_dim)."""
    T, B = input_sentence.shape

    # Pad batch to a multiple of 8 (vreg sublane count); batch rows are
    # independent, padded rows are sliced off at the end.
    B_pad = ((B + 7) // 8) * 8
    ids = input_sentence
    if B_pad != B:
        ids = jnp.pad(ids, ((0, 0), (0, B_pad - B)))

    # nn.Embedding: XLA gather (see TODO at top).
    x = jnp.take(embed_table, ids, axis=0).astype(jnp.float32)   # (T, B_pad, E)

    # TODO(synk): casting x / W_ih^T / W_hh^T to bf16 (keeping f32 accumulation
    # and f32 h/c state) would cut MXU passes ~3x but loosens the 1e-4 check.
    n_layers = len(lstm_params)
    h_mean = None
    for li, (w_ih, w_hh, b_ih, b_hh) in enumerate(lstm_params):
        H = w_hh.shape[1]
        w_ih_t = jnp.asarray(w_ih, jnp.float32).T                 # (in, 4H)
        w_hh_t = jnp.asarray(w_hh, jnp.float32).T                 # (H, 4H)
        b = (jnp.asarray(b_ih, jnp.float32)
             + jnp.asarray(b_hh, jnp.float32)).reshape(1, 4 * H)

        last = (li == n_layers - 1)
        if last:
            h_mean = lstm_layer_pallas(x, w_ih_t, b, w_hh_t, emit_hseq=False)
        else:
            x = lstm_layer_pallas(x, w_ih_t, b, w_hh_t, emit_hseq=True)

    return h_mean[:B]


# -----------------------------------------------------------------------------
# Pure-JAX reference (embedding + lax.scan LSTM) for correctness check.
# -----------------------------------------------------------------------------
def _lstm_layer_ref(x, w_ih, w_hh, b_ih, b_hh):
    _, B, _ = x.shape
    H = w_hh.shape[1]
    b = b_ih + b_hh

    def step(carry, x_t):
        h, c = carry
        gates = x_t @ w_ih.T + h @ w_hh.T + b
        i = jax.nn.sigmoid(gates[:, 0 * H:1 * H])
        f = jax.nn.sigmoid(gates[:, 1 * H:2 * H])
        g = jnp.tanh(gates[:, 2 * H:3 * H])
        o = jax.nn.sigmoid(gates[:, 3 * H:4 * H])
        c = f * c + i * g
        h = o * jnp.tanh(c)
        return (h, c), h

    h0 = jnp.zeros((B, H), jnp.float32)
    c0 = jnp.zeros((B, H), jnp.float32)
    _, h_seq = jax.lax.scan(step, (h0, c0), x)
    return h_seq


def sentence_embedding_ref(embed_table, lstm_params, input_sentence):
    x = jnp.take(embed_table, input_sentence, axis=0).astype(jnp.float32)
    for (w_ih, w_hh, b_ih, b_hh) in lstm_params:
        x = _lstm_layer_ref(x, w_ih, w_hh, b_ih, b_hh)
    return x.mean(0)


# -----------------------------------------------------------------------------
if __name__ == "__main__":
    seq_len, batch = 16, 8
    config = Config(embed_size=100, embed_dim=128, hidden_dim=128,
                    layers=2, dropout=0.0, encoder_type="LSTMEncoder")

    key = jax.random.PRNGKey(0)
    k_params, k_ids = jax.random.split(key)
    embed_table, lstm_params = init_params(k_params, config)
    input_sentence = jax.random.randint(
        k_ids, (seq_len, batch), 0, config.embed_size, dtype=jnp.int32)

    out = sentence_embedding_forward(embed_table, lstm_params, input_sentence)
    out = jax.block_until_ready(out)
    assert out.shape == (batch, config.hidden_dim)

    ref = jax.block_until_ready(
        sentence_embedding_ref(embed_table, lstm_params, input_sentence))
    assert jnp.allclose(out, ref, atol=1e-4, rtol=1e-4), "mismatch vs JAX reference"

    print("KERNEL_OK")
</pallas_src>

<mosaic_0001>
module attributes {stable_mosaic.version = 11 : i64} {
  func.func @_lstm_layer_kernel(%arg0: i32, %arg1: memref<16x8x128xf32, #tpu.memory_space<vmem>>, %arg2: memref<128x512xf32, #tpu.memory_space<vmem>>, %arg3: memref<1x512xf32, #tpu.memory_space<vmem>>, %arg4: memref<128x512xf32, #tpu.memory_space<vmem>>, %arg5: memref<16x8x128xf32, #tpu.memory_space<vmem>>, %arg6: memref<128x512xf32, #tpu.memory_space<vmem>>, %arg7: memref<8x128xf32, #tpu.memory_space<vmem>>, %arg8: memref<8x128xf32, #tpu.memory_space<vmem>>) attributes {dimension_semantics = [#tpu.dimension_semantics<arbitrary>], iteration_bounds = array<i64: 1>, scalar_prefetch = 0 : i64, scratch_operands = 3 : i64, tpu.core_type = #tpu.core_type<tc>, window_params = [{transform_indices = @transform_0, window_bounds = array<i64: 16, 8, 128>}, {pipeline_mode = #tpu.pipeline_mode<synchronous>, transform_indices = @transform_1, window_bounds = array<i64: 128, 512>}, {pipeline_mode = #tpu.pipeline_mode<synchronous>, transform_indices = @transform_2, window_bounds = array<i64: 1, 512>}, {pipeline_mode = #tpu.pipeline_mode<synchronous>, transform_indices = @transform_3, window_bounds = array<i64: 128, 512>}, {transform_indices = @transform_4, window_bounds = array<i64: 16, 8, 128>}]} {
    %c0_i32 = arith.constant 0 : i32
    %0 = arith.cmpi eq, %arg0, %c0_i32 : i32
    %1 = arith.extui %0 : i1 to i32
    %c0_i32_0 = arith.constant 0 : i32
    %2 = arith.cmpi ne, %1, %c0_i32_0 : i32
    scf.if %2 {
      %cst_380 = arith.constant 0.000000e+00 : f32
      %683 = vector.broadcast %cst_380 : f32 to vector<8x128xf32>
      %c0_381 = arith.constant 0 : index
      %c0_382 = arith.constant 0 : index
      %684 = vector.load %arg7[%c0_381, %c0_382] : memref<8x128xf32, #tpu.memory_space<vmem>>, vector<8x128xf32>
      tpu.vector_store %arg7[%c0_381, %c0_382], %683 {strides = array<i32>} : memref<8x128xf32, #tpu.memory_space<vmem>>, vector<8x128xf32>,
      %cst_383 = arith.constant 0.000000e+00 : f32
      %685 = vector.broadcast %cst_383 : f32 to vector<8x128xf32>
      %c0_384 = arith.constant 0 : index
      %c0_385 = arith.constant 0 : index
      %686 = vector.load %arg8[%c0_384, %c0_385] : memref<8x128xf32, #tpu.memory_space<vmem>>, vector<8x128xf32>
      tpu.vector_store %arg8[%c0_384, %c0_385], %685 {strides = array<i32>} : memref<8x128xf32, #tpu.memory_space<vmem>>, vector<8x128xf32>,
    } else {
    }
    %c0 = arith.constant 0 : index
    %c0_1 = arith.constant 0 : index
    %c0_2 = arith.constant 0 : index
    %3 = vector.load %arg1[%c0, %c0_1, %c0_2] : memref<16x8x128xf32, #tpu.memory_space<vmem>>, vector<16x8x128xf32>
    %4 = vector.shape_cast %3 : vector<16x8x128xf32> to vector<128x128xf32>
    %c0_3 = arith.constant 0 : index
    %c0_4 = arith.constant 0 : index
    %5 = vector.load %arg2[%c0_3, %c0_4] : memref<128x512xf32, #tpu.memory_space<vmem>>, vector<128x512xf32>
    %cst = arith.constant dense<0.000000e+00> : vector<128x512xf32>
    %6 = tpu.matmul %4, %5, %cst {dimension_numbers = #tpu.dot_dimension_numbers<[1], [0], [0], [1], [0, 0, 1, 1], [], []>} : vector<128x128xf32>, vector<128x512xf32>, vector<128x512xf32> -> vector<128x512xf32>
    %c0_5 = arith.constant 0 : index
    %c0_6 = arith.constant 0 : index
    %7 = vector.load %arg3[%c0_5, %c0_6] : memref<1x512xf32, #tpu.memory_space<vmem>>, vector<1x512xf32>
    %8 = vector.broadcast %7 : vector<1x512xf32> to vector<128x512xf32>
    %9 = arith.addf %6, %8 : vector<128x512xf32>
    %c0_7 = arith.constant 0 : index
    %c0_8 = arith.constant 0 : index
    %10 = vector.load %arg6[%c0_7, %c0_8] : memref<128x512xf32, #tpu.memory_space<vmem>>, vector<128x512xf32>
    tpu.vector_store %arg6[%c0_7, %c0_8], %9 {strides = array<i32>} : memref<128x512xf32, #tpu.memory_space<vmem>>, vector<128x512xf32>,
    %c0_9 = arith.constant 0 : index
    %c0_10 = arith.constant 0 : index
    %11 = vector.load %arg6[%c0_9, %c0_10] : memref<128x512xf32, #tpu.memory_space<vmem>>, vector<8x512xf32>
    %c0_11 = arith.constant 0 : index
    %c0_12 = arith.constant 0 : index
    %12 = vector.load %arg7[%c0_11, %c0_12] : memref<8x128xf32, #tpu.memory_space<vmem>>, vector<8x128xf32>
    %c0_13 = arith.constant 0 : index
    %c0_14 = arith.constant 0 : index
    %13 = vector.load %arg4[%c0_13, %c0_14] : memref<128x512xf32, #tpu.memory_space<vmem>>, vector<128x512xf32>
    %cst_15 = arith.constant dense<0.000000e+00> : vector<8x512xf32>
    %14 = tpu.matmul %12, %13, %cst_15 {dimension_numbers = #tpu.dot_dimension_numbers<[1], [0], [0], [1], [0, 0, 1, 1], [], []>} : vector<8x128xf32>, vector<128x512xf32>, vector<8x512xf32> -> vector<8x512xf32>
    %15 = arith.addf %11, %14 : vector<8x512xf32>
    %16 = vector.extract_strided_slice %15 {offsets = [0, 0], sizes = [8, 128], strides = [1, 1]} : vector<8x512xf32> to vector<8x128xf32>
    %cst_16 = arith.constant 5.000000e-01 : f32
    %17 = vector.broadcast %cst_16 : f32 to vector<8x128xf32>
    %18 = arith.mulf %17, %16 : vector<8x128xf32>
    %19 = math.tanh %18 : vector<8x128xf32>
    %cst_17 = arith.constant 5.000000e-01 : f32
    %20 = vector.broadcast %cst_17 : f32 to vector<8x128xf32>
    %21 = arith.mulf %20, %19 : vector<8x128xf32>
    %cst_18 = arith.constant 5.000000e-01 : f32
    %22 = vector.broadcast %cst_18 : f32 to vector<8x128xf32>
    %23 = arith.addf %21, %22 : vector<8x128xf32>
    %24 = vector.extract_strided_slice %15 {offsets = [0, 128], sizes = [8, 128], strides = [1, 1]} : vector<8x512xf32> to vector<8x128xf32>
    %cst_19 = arith.constant 5.000000e-01 : f32
    %25 = vector.broadcast %cst_19 : f32 to vector<8x128xf32>
    %26 = arith.mulf %25, %24 : vector<8x128xf32>
    %27 = math.tanh %26 : vector<8x128xf32>
    %cst_20 = arith.constant 5.000000e-01 : f32
    %28 = vector.broadcast %cst_20 : f32 to vector<8x128xf32>
    %29 = arith.mulf %28, %27 : vector<8x128xf32>
    %cst_21 = arith.constant 5.000000e-01 : f32
    %30 = vector.broadcast %cst_21 : f32 to vector<8x128xf32>
    %31 = arith.addf %29, %30 : vector<8x128xf32>
    %32 = vector.extract_strided_slice %15 {offsets = [0, 256], sizes = [8, 128], strides = [1, 1]} : vector<8x512xf32> to vector<8x128xf32>
    %33 = math.tanh %32 : vector<8x128xf32>
    %34 = vector.extract_strided_slice %15 {offsets = [0, 384], sizes = [8, 128], strides = [1, 1]} : vector<8x512xf32> to vector<8x128xf32>
    %cst_22 = arith.constant 5.000000e-01 : f32
    %35 = vector.broadcast %cst_22 : f32 to vector<8x128xf32>
    %36 = arith.mulf %35, %34 : vector<8x128xf32>
    %37 = math.tanh %36 : vector<8x128xf32>
    %cst_23 = arith.constant 5.000000e-01 : f32
    %38 = vector.broadcast %cst_23 : f32 to vector<8x128xf32>
    %39 = arith.mulf %38, %37 : vector<8x128xf32>
    %cst_24 = arith.constant 5.000000e-01 : f32
    %40 = vector.broadcast %cst_24 : f32 to vector<8x128xf32>
    %41 = arith.addf %39, %40 : vector<8x128xf32>
    %c0_25 = arith.constant 0 : index
    %c0_26 = arith.constant 0 : index
    %42 = vector.load %arg8[%c0_25, %c0_26] : memref<8x128xf32, #tpu.memory_space<vmem>>, vector<8x128xf32>
    %43 = arith.mulf %31, %42 : vector<8x128xf32>
    %44 = arith.mulf %23, %33 : vector<8x128xf32>
    %45 = arith.addf %43, %44 : vector<8x128xf32>
    %46 = math.tanh %45 : vector<8x128xf32>
    %47 = arith.mulf %41, %46 : vector<8x128xf32>
    %c0_27 = arith.constant 0 : index
    %c0_28 = arith.constant 0 : index
    %48 = vector.load %arg8[%c0_27, %c0_28] : memref<8x128xf32, #tpu.memory_space<vmem>>, vector<8x128xf32>
    tpu.vector_store %arg8[%c0_27, %c0_28], %45 {strides = array<i32>} : memref<8x128xf32, #tpu.memory_space<vmem>>, vector<8x128xf32>,
    %c0_29 = arith.constant 0 : index
    %c0_30 = arith.constant 0 : index
    %49 = vector.load %arg7[%c0_29, %c0_30] : memref<8x128xf32, #tpu.memory_space<vmem>>, vector<8x128xf32>
    tpu.vector_store %arg7[%c0_29, %c0_30], %47 {strides = array<i32>} : memref<8x128xf32, #tpu.memory_space<vmem>>, vector<8x128xf32>,
    %c0_31 = arith.constant 0 : index
    %c0_32 = arith.constant 0 : index
    %c0_33 = arith.constant 0 : index
    %50 = vector.load %arg5[%c0_31, %c0_32, %c0_33] : memref<16x8x128xf32, #tpu.memory_space<vmem>>, vector<1x8x128xf32>
    %51 = vector.shape_cast %50 : vector<1x8x128xf32> to vector<8x128xf32>
    %52 = vector.shape_cast %47 : vector<8x128xf32> to vector<1x8x128xf32>
    tpu.vector_store %arg5[%c0_31, %c0_32, %c0_33], %52 {strides = array<i32>} : memref<16x8x128xf32, #tpu.memory_space<vmem>>, vector<1x8x128xf32>,
    %c8 = arith.constant 8 : index
    %c0_34 = arith.constant 0 : index
    %53 = vector.load %arg6[%c8, %c0_34] : memref<128x512xf32, #tpu.memory_space<vmem>>, vector<8x512xf32>
    %c0_35 = arith.constant 0 : index
    %c0_36 = arith.constant 0 : index
    %54 = vector.load %arg7[%c0_35, %c0_36] : memref<8x128xf32, #tpu.memory_space<vmem>>, vector<8x128xf32>
    %c0_37 = arith.constant 0 : index
    %c0_38 = arith.constant 0 : index
    %55 = vector.load %arg4[%c0_37, %c0_38] : memref<128x512xf32, #tpu.memory_space<vmem>>, vector<128x512xf32>
    %cst_39 = arith.constant dense<0.000000e+00> : vector<8x512xf32>
    %56 = tpu.matmul %54, %55, %cst_39 {dimension_numbers = #tpu.dot_dimension_numbers<[1], [0], [0], [1], [0, 0, 1, 1], [], []>} : vector<8x128xf32>, vector<128x512xf32>, vector<8x512xf32> -> vector<8x512xf32>
    %57 = arith.addf %53, %56 : vector<8x512xf32>
    %58 = vector.extract_strided_slice %57 {offsets = [0, 0], sizes = [8, 128], strides = [1, 1]} : vector<8x512xf32> to vector<8x128xf32>
    %cst_40 = arith.constant 5.000000e-01 : f32
    %59 = vector.broadcast %cst_40 : f32 to vector<8x128xf32>
    %60 = arith.mulf %59, %58 : vector<8x128xf32>
    %61 = math.tanh %60 : vector<8x128xf32>
    %cst_41 = arith.constant 5.000000e-01 : f32
    %62 = vector.broadcast %cst_41 : f32 to vector<8x128xf32>
    %63 = arith.mulf %62, %61 : vector<8x128xf32>
    %cst_42 = arith.constant 5.000000e-01 : f32
    %64 = vector.broadcast %cst_42 : f32 to vector<8x128xf32>
    %65 = arith.addf %63, %64 : vector<8x128xf32>
    %66 = vector.extract_strided_slice %57 {offsets = [0, 128], sizes = [8, 128], strides = [1, 1]} : vector<8x512xf32> to vector<8x128xf32>
    %cst_43 = arith.constant 5.000000e-01 : f32
    %67 = vector.broadcast %cst_43 : f32 to vector<8x128xf32>
    %68 = arith.mulf %67, %66 : vector<8x128xf32>
    %69 = math.tanh %68 : vector<8x128xf32>
    %cst_44 = arith.constant 5.000000e-01 : f32
    %70 = vector.broadcast %cst_44 : f32 to vector<8x128xf32>
    %71 = arith.mulf %70, %69 : vector<8x128xf32>
    %cst_45 = arith.constant 5.000000e-01 : f32
    %72 = vector.broadcast %cst_45 : f32 to vector<8x128xf32>
    %73 = arith.addf %71, %72 : vector<8x128xf32>
    %74 = vector.extract_strided_slice %57 {offsets = [0, 256], sizes = [8, 128], strides = [1, 1]} : vector<8x512xf32> to vector<8x128xf32>
    %75 = math.tanh %74 : vector<8x128xf32>
    %76 = vector.extract_strided_slice %57 {offsets = [0, 384], sizes = [8, 128], strides = [1, 1]} : vector<8x512xf32> to vector<8x128xf32>
    %cst_46 = arith.constant 5.000000e-01 : f32
    %77 = vector.broadcast %cst_46 : f32 to vector<8x128xf32>
    %78 = arith.mulf %77, %76 : vector<8x128xf32>
    %79 = math.tanh %78 : vector<8x128xf32>
    %cst_47 = arith.constant 5.000000e-01 : f32
    %80 = vector.broadcast %cst_47 : f32 to vector<8x128xf32>
    %81 = arith.mulf %80, %79 : vector<8x128xf32>
    %cst_48 = arith.constant 5.000000e-01 : f32
    %82 = vector.broadcast %cst_48 : f32 to vector<8x128xf32>
    %83 = arith.addf %81, %82 : vector<8x128xf32>
    %c0_49 = arith.constant 0 : index
    %c0_50 = arith.constant 0 : index
    %84 = vector.load %arg8[%c0_49, %c0_50] : memref<8x128xf32, #tpu.memory_space<vmem>>, vector<8x128xf32>
    %85 = arith.mulf %73, %84 : vector<8x128xf32>
    %86 = arith.mulf %65, %75 : vector<8x128xf32>
    %87 = arith.addf %85, %86 : vector<8x128xf32>
    %88 = math.tanh %87 : vector<8x128xf32>
    %89 = arith.mulf %83, %88 : vector<8x128xf32>
    %c0_51 = arith.constant 0 : index
    %c0_52 = arith.constant 0 : index
    %90 = vector.load %arg8[%c0_51, %c0_52] : memref<8x128xf32, #tpu.memory_space<vmem>>, vector<8x128xf32>
    tpu.vector_store %arg8[%c0_51, %c0_52], %87 {strides = array<i32>} : memref<8x128xf32, #tpu.memory_space<vmem>>, vector<8x128xf32>,
    %c0_53 = arith.constant 0 : index
    %c0_54 = arith.constant 0 : index
    %91 = vector.load %arg7[%c0_53, %c0_54] : memref<8x128xf32, #tpu.memory_space<vmem>>, vector<8x128xf32>
    tpu.vector_store %arg7[%c0_53, %c0_54], %89 {strides = array<i32>} : memref<8x128xf32, #tpu.memory_space<vmem>>, vector<8x128xf32>,
    %c1 = arith.constant 1 : index
    %c0_55 = arith.constant 0 : index
    %c0_56 = arith.constant 0 : index
    %92 = vector.load %arg5[%c1, %c0_55, %c0_56] : memref<16x8x128xf32, #tpu.memory_space<vmem>>, vector<1x8x128xf32>
    %93 = vector.shape_cast %92 : vector<1x8x128xf32> to vector<8x128xf32>
    %94 = vector.shape_cast %89 : vector<8x128xf32> to vector<1x8x128xf32>
    tpu.vector_store %arg5[%c1, %c0_55, %c0_56], %94 {strides = array<i32>} : memref<16x8x128xf32, #tpu.memory_space<vmem>>, vector<1x8x128xf32>,
    %c16 = arith.constant 16 : index
    %c0_57 = arith.constant 0 : index
    %95 = vector.load %arg6[%c16, %c0_57] : memref<128x512xf32, #tpu.memory_space<vmem>>, vector<8x512xf32>
    %c0_58 = arith.constant 0 : index
    %c0_59 = arith.constant 0 : index
    %96 = vector.load %arg7[%c0_58, %c0_59] : memref<8x128xf32, #tpu.memory_space<vmem>>, vector<8x128xf32>
    %c0_60 = arith.constant 0 : index
    %c0_61 = arith.constant 0 : index
    %97 = vector.load %arg4[%c0_60, %c0_61] : memref<128x512xf32, #tpu.memory_space<vmem>>, vector<128x512xf32>
    %cst_62 = arith.constant dense<0.000000e+00> : vector<8x512xf32>
    %98 = tpu.matmul %96, %97, %cst_62 {dimension_numbers = #tpu.dot_dimension_numbers<[1], [0], [0], [1], [0, 0, 1, 1], [], []>} : vector<8x128xf32>, vector<128x512xf32>, vector<8x512xf32> -> vector<8x512xf32>
    %99 = arith.addf %95, %98 : vector<8x512xf32>
    %100 = vector.extract_strided_slice %99 {offsets = [0, 0], sizes = [8, 128], strides = [1, 1]} : vector<8x512xf32> to vector<8x128xf32>
    %cst_63 = arith.constant 5.000000e-01 : f32
    %101 = vector.broadcast %cst_63 : f32 to vector<8x128xf32>
    %102 = arith.mulf %101, %100 : vector<8x128xf32>
    %103 = math.tanh %102 : vector<8x128xf32>
    %cst_64 = arith.constant 5.000000e-01 : f32
    %104 = vector.broadcast %cst_64 : f32 to vector<8x128xf32>
    %105 = arith.mulf %104, %103 : vector<8x128xf32>
    %cst_65 = arith.constant 5.000000e-01 : f32
    %106 = vector.broadcast %cst_65 : f32 to vector<8x128xf32>
    %107 = arith.addf %105, %106 : vector<8x128xf32>
    %108 = vector.extract_strided_slice %99 {offsets = [0, 128], sizes = [8, 128], strides = [1, 1]} : vector<8x512xf32> to vector<8x128xf32>
    %cst_66 = arith.constant 5.000000e-01 : f32
    %109 = vector.broadcast %cst_66 : f32 to vector<8x128xf32>
    %110 = arith.mulf %109, %108 : vector<8x128xf32>
    %111 = math.tanh %110 : vector<8x128xf32>
    %cst_67 = arith.constant 5.000000e-01 : f32
    %112 = vector.broadcast %cst_67 : f32 to vector<8x128xf32>
    %113 = arith.mulf %112, %111 : vector<8x128xf32>
    %cst_68 = arith.constant 5.000000e-01 : f32
    %114 = vector.broadcast %cst_68 : f32 to vector<8x128xf32>
    %115 = arith.addf %113, %114 : vector<8x128xf32>
    %116 = vector.extract_strided_slice %99 {offsets = [0, 256], sizes = [8, 128], strides = [1, 1]} : vector<8x512xf32> to vector<8x128xf32>
    %117 = math.tanh %116 : vector<8x128xf32>
    %118 = vector.extract_strided_slice %99 {offsets = [0, 384], sizes = [8, 128], strides = [1, 1]} : vector<8x512xf32> to vector<8x128xf32>
    %cst_69 = arith.constant 5.000000e-01 : f32
    %119 = vector.broadcast %cst_69 : f32 to vector<8x128xf32>
    %120 = arith.mulf %119, %118 : vector<8x128xf32>
    %121 = math.tanh %120 : vector<8x128xf32>
    %cst_70 = arith.constant 5.000000e-01 : f32
    %122 = vector.broadcast %cst_70 : f32 to vector<8x128xf32>
    %123 = arith.mulf %122, %121 : vector<8x128xf32>
    %cst_71 = arith.constant 5.000000e-01 : f32
    %124 = vector.broadcast %cst_71 : f32 to vector<8x128xf32>
    %125 = arith.addf %123, %124 : vector<8x128xf32>
    %c0_72 = arith.constant 0 : index
    %c0_73 = arith.constant 0 : index
    %126 = vector.load %arg8[%c0_72, %c0_73] : memref<8x128xf32, #tpu.memory_space<vmem>>, vector<8x128xf32>
    %127 = arith.mulf %115, %126 : vector<8x128xf32>
    %128 = arith.mulf %107, %117 : vector<8x128xf32>
    %129 = arith.addf %127, %128 : vector<8x128xf32>
    %130 = math.tanh %129 : vector<8x128xf32>
    %131 = arith.mulf %125, %130 : vector<8x128xf32>
    %c0_74 = arith.constant 0 : index
    %c0_75 = arith.constant 0 : index
    %132 = vector.load %arg8[%c0_74, %c0_75] : memref<8x128xf32, #tpu.memory_space<vmem>>, vector<8x128xf32>
    tpu.vector_store %arg8[%c0_74, %c0_75], %129 {strides = array<i32>} : memref<8x128xf32, #tpu.memory_space<vmem>>, vector<8x128xf32>,
    %c0_76 = arith.constant 0 : index
    %c0_77 = arith.constant 0 : index
    %133 = vector.load %arg7[%c0_76, %c0_77] : memref<8x128xf32, #tpu.memory_space<vmem>>, vector<8x128xf32>
    tpu.vector_store %arg7[%c0_76, %c0_77], %131 {strides = array<i32>} : memref<8x128xf32, #tpu.memory_space<vmem>>, vector<8x128xf32>,
    %c2 = arith.constant 2 : index
    %c0_78 = arith.constant 0 : index
    %c0_79 = arith.constant 0 : index
    %134 = vector.load %arg5[%c2, %c0_78, %c0_79] : memref<16x8x128xf32, #tpu.memory_space<vmem>>, vector<1x8x128xf32>
    %135 = vector.shape_cast %134 : vector<1x8x128xf32> to vector<8x128xf32>
    %136 = vector.shape_cast %131 : vector<8x128xf32> to vector<1x8x128xf32>
    tpu.vector_store %arg5[%c2, %c0_78, %c0_79], %136 {strides = array<i32>} : memref<16x8x128xf32, #tpu.memory_space<vmem>>, vector<1x8x128xf32>,
    %c24 = arith.constant 24 : index
    %c0_80 = arith.constant 0 : index
    %137 = vector.load %arg6[%c24, %c0_80] : memref<128x512xf32, #tpu.memory_space<vmem>>, vector<8x512xf32>
    %c0_81 = arith.constant 0 : index
    %c0_82 = arith.constant 0 : index
    %138 = vector.load %arg7[%c0_81, %c0_82] : memref<8x128xf32, #tpu.memory_space<vmem>>, vector<8x128xf32>
    %c0_83 = arith.constant 0 : index
    %c0_84 = arith.constant 0 : index
    %139 = vector.load %arg4[%c0_83, %c0_84] : memref<128x512xf32, #tpu.memory_space<vmem>>, vector<128x512xf32>
    %cst_85 = arith.constant dense<0.000000e+00> : vector<8x512xf32>
    %140 = tpu.matmul %138, %139, %cst_85 {dimension_numbers = #tpu.dot_dimension_numbers<[1], [0], [0], [1], [0, 0, 1, 1], [], []>} : vector<8x128xf32>, vector<128x512xf32>, vector<8x512xf32> -> vector<8x512xf32>
    %141 = arith.addf %137, %140 : vector<8x512xf32>
    %142 = vector.extract_strided_slice %141 {offsets = [0, 0], sizes = [8, 128], strides = [1, 1]} : vector<8x512xf32> to vector<8x128xf32>
    %cst_86 = arith.constant 5.000000e-01 : f32
    %143 = vector.broadcast %cst_86 : f32 to vector<8x128xf32>
    %144 = arith.mulf %143, %142 : vector<8x128xf32>
    %145 = math.tanh %144 : vector<8x128xf32>
    %cst_87 = arith.constant 5.000000e-01 : f32
    %146 = vector.broadcast %cst_87 : f32 to vector<8x128xf32>
    %147 = arith.mulf %146, %145 : vector<8x128xf32>
    %cst_88 = arith.constant 5.000000e-01 : f32
    %148 = vector.broadcast %cst_88 : f32 to vector<8x128xf32>
    %149 = arith.addf %147, %148 : vector<8x128xf32>
    %150 = vector.extract_strided_slice %141 {offsets = [0, 128], sizes = [8, 128], strides = [1, 1]} : vector<8x512xf32> to vector<8x128xf32>
    %cst_89 = arith.constant 5.000000e-01 : f32
    %151 = vector.broadcast %cst_89 : f32 to vector<8x128xf32>
    %152 = arith.mulf %151, %150 : vector<8x128xf32>
    %153 = math.tanh %152 : vector<8x128xf32>
    %cst_90 = arith.constant 5.000000e-01 : f32
    %154 = vector.broadcast %cst_90 : f32 to vector<8x128xf32>
    %155 = arith.mulf %154, %153 : vector<8x128xf32>
    %cst_91 = arith.constant 5.000000e-01 : f32
    %156 = vector.broadcast %cst_91 : f32 to vector<8x128xf32>
    %157 = arith.addf %155, %156 : vector<8x128xf32>
    %158 = vector.extract_strided_slice %141 {offsets = [0, 256], sizes = [8, 128], strides = [1, 1]} : vector<8x512xf32> to vector<8x128xf32>
    %159 = math.tanh %158 : vector<8x128xf32>
    %160 = vector.extract_strided_slice %141 {offsets = [0, 384], sizes = [8, 128], strides = [1, 1]} : vector<8x512xf32> to vector<8x128xf32>
    %cst_92 = arith.constant 5.000000e-01 : f32
    %161 = vector.broadcast %cst_92 : f32 to vector<8x128xf32>
    %162 = arith.mulf %161, %160 : vector<8x128xf32>
    %163 = math.tanh %162 : vector<8x128xf32>
    %cst_93 = arith.constant 5.000000e-01 : f32
    %164 = vector.broadcast %cst_93 : f32 to vector<8x128xf32>
    %165 = arith.mulf %164, %163 : vector<8x128xf32>
    %cst_94 = arith.constant 5.000000e-01 : f32
    %166 = vector.broadcast %cst_94 : f32 to vector<8x128xf32>
    %167 = arith.addf %165, %166 : vector<8x128xf32>
    %c0_95 = arith.constant 0 : index
    %c0_96 = arith.constant 0 : index
    %168 = vector.load %arg8[%c0_95, %c0_96] : memref<8x128xf32, #tpu.memory_space<vmem>>, vector<8x128xf32>
    %169 = arith.mulf %157, %168 : vector<8x128xf32>
    %170 = arith.mulf %149, %159 : vector<8x128xf32>
    %171 = arith.addf %169, %170 : vector<8x128xf32>
    %172 = math.tanh %171 : vector<8x128xf32>
    %173 = arith.mulf %167, %172 : vector<8x128xf32>
    %c0_97 = arith.constant 0 : index
    %c0_98 = arith.constant 0 : index
    %174 = vector.load %arg8[%c0_97, %c0_98] : memref<8x128xf32, #tpu.memory_space<vmem>>, vector<8x128xf32>
    tpu.vector_store %arg8[%c0_97, %c0_98], %171 {strides = array<i32>} : memref<8x128xf32, #tpu.memory_space<vmem>>, vector<8x128xf32>,
    %c0_99 = arith.constant 0 : index
    %c0_100 = arith.constant 0 : index
    %175 = vector.load %arg7[%c0_99, %c0_100] : memref<8x128xf32, #tpu.memory_space<vmem>>, vector<8x128xf32>
    tpu.vector_store %arg7[%c0_99, %c0_100], %173 {strides = array<i32>} : memref<8x128xf32, #tpu.memory_space<vmem>>, vector<8x128xf32>,
    %c3 = arith.constant 3 : index
    %c0_101 = arith.constant 0 : index
    %c0_102 = arith.constant 0 : index
    %176 = vector.load %arg5[%c3, %c0_101, %c0_102] : memref<16x8x128xf32, #tpu.memory_space<vmem>>, vector<1x8x128xf32>
    %177 = vector.shape_cast %176 : vector<1x8x128xf32> to vector<8x128xf32>
    %178 = vector.shape_cast %173 : vector<8x128xf32> to vector<1x8x128xf32>
    tpu.vector_store %arg5[%c3, %c0_101, %c0_102], %178 {strides = array<i32>} : memref<16x8x128xf32, #tpu.memory_space<vmem>>, vector<1x8x128xf32>,
    %c32 = arith.constant 32 : index
    %c0_103 = arith.constant 0 : index
    %179 = vector.load %arg6[%c32, %c0_103] : memref<128x512xf32, #tpu.memory_space<vmem>>, vector<8x512xf32>
    %c0_104 = arith.constant 0 : index
    %c0_105 = arith.constant 0 : index
    %180 = vector.load %arg7[%c0_104, %c0_105] : memref<8x128xf32, #tpu.memory_space<vmem>>, vector<8x128xf32>
    %c0_106 = arith.constant 0 : index
    %c0_107 = arith.constant 0 : index
    %181 = vector.load %arg4[%c0_106, %c0_107] : memref<128x512xf32, #tpu.memory_space<vmem>>, vector<128x512xf32>
    %cst_108 = arith.constant dense<0.000000e+00> : vector<8x512xf32>
    %182 = tpu.matmul %180, %181, %cst_108 {dimension_numbers = #tpu.dot_dimension_numbers<[1], [0], [0], [1], [0, 0, 1, 1], [], []>} : vector<8x128xf32>, vector<128x512xf32>, vector<8x512xf32> -> vector<8x512xf32>
    %183 = arith.addf %179, %182 : vector<8x512xf32>
    %184 = vector.extract_strided_slice %183 {offsets = [0, 0], sizes = [8, 128], strides = [1, 1]} : vector<8x512xf32> to vector<8x128xf32>
    %cst_109 = arith.constant 5.000000e-01 : f32
    %185 = vector.broadcast %cst_109 : f32 to vector<8x128xf32>
    %186 = arith.mulf %185, %184 : vector<8x128xf32>
    %187 = math.tanh %186 : vector<8x128xf32>
    %cst_110 = arith.constant 5.000000e-01 : f32
    %188 = vector.broadcast %cst_110 : f32 to vector<8x128xf32>
    %189 = arith.mulf %188, %187 : vector<8x128xf32>
    %cst_111 = arith.constant 5.000000e-01 : f32
    %190 = vector.broadcast %cst_111 : f32 to vector<8x128xf32>
    %191 = arith.addf %189, %190 : vector<8x128xf32>
    %192 = vector.extract_strided_slice %183 {offsets = [0, 128], sizes = [8, 128], strides = [1, 1]} : vector<8x512xf32> to vector<8x128xf32>
    %cst_112 = arith.constant 5.000000e-01 : f32
    %193 = vector.broadcast %cst_112 : f32 to vector<8x128xf32>
    %194 = arith.mulf %193, %192 : vector<8x128xf32>
    %195 = math.tanh %194 : vector<8x128xf32>
    %cst_113 = arith.constant 5.000000e-01 : f32
    %196 = vector.broadcast %cst_113 : f32 to vector<8x128xf32>
    %197 = arith.mulf %196, %195 : vector<8x128xf32>
    %cst_114 = arith.constant 5.000000e-01 : f32
    %198 = vector.broadcast %cst_114 : f32 to vector<8x128xf32>
    %199 = arith.addf %197, %198 : vector<8x128xf32>
    %200 = vector.extract_strided_slice %183 {offsets = [0, 256], sizes = [8, 128], strides = [1, 1]} : vector<8x512xf32> to vector<8x128xf32>
    %201 = math.tanh %200 : vector<8x128xf32>
    %202 = vector.extract_strided_slice %183 {offsets = [0, 384], sizes = [8, 128], strides = [1, 1]} : vector<8x512xf32> to vector<8x128xf32>
    %cst_115 = arith.constant 5.000000e-01 : f32
    %203 = vector.broadcast %cst_115 : f32 to vector<8x128xf32>
    %204 = arith.mulf %203, %202 : vector<8x128xf32>
    %205 = math.tanh %204 : vector<8x128xf32>
    %cst_116 = arith.constant 5.000000e-01 : f32
    %206 = vector.broadcast %cst_116 : f32 to vector<8x128xf32>
    %207 = arith.mulf %206, %205 : vector<8x128xf32>
    %cst_117 = arith.constant 5.000000e-01 : f32
    %208 = vector.broadcast %cst_117 : f32 to vector<8x128xf32>
    %209 = arith.addf %207, %208 : vector<8x128xf32>
    %c0_118 = arith.constant 0 : index
    %c0_119 = arith.constant 0 : index
    %210 = vector.load %arg8[%c0_118, %c0_119] : memref<8x128xf32, #tpu.memory_space<vmem>>, vector<8x128xf32>
    %211 = arith.mulf %199, %210 : vector<8x128xf32>
    %212 = arith.mulf %191, %201 : vector<8x128xf32>
    %213 = arith.addf %211, %212 : vector<8x128xf32>
    %214 = math.tanh %213 : vector<8x128xf32>
    %215 = arith.mulf %209, %214 : vector<8x128xf32>
    %c0_120 = arith.constant 0 : index
    %c0_121 = arith.constant 0 : index
    %216 = vector.load %arg8[%c0_120, %c0_121] : memref<8x128xf32, #tpu.memory_space<vmem>>, vector<8x128xf32>
    tpu.vector_store %arg8[%c0_120, %c0_121], %213 {strides = array<i32>} : memref<8x128xf32, #tpu.memory_space<vmem>>, vector<8x128xf32>,
    %c0_122 = arith.constant 0 : index
    %c0_123 = arith.constant 0 : index
    %217 = vector.load %arg7[%c0_122, %c0_123] : memref<8x128xf32, #tpu.memory_space<vmem>>, vector<8x128xf32>
    tpu.vector_store %arg7[%c0_122, %c0_123], %215 {strides = array<i32>} : memref<8x128xf32, #tpu.memory_space<vmem>>, vector<8x128xf32>,
    %c4 = arith.constant 4 : index
    %c0_124 = arith.constant 0 : index
    %c0_125 = arith.constant 0 : index
    %218 = vector.load %arg5[%c4, %c0_124, %c0_125] : memref<16x8x128xf32, #tpu.memory_space<vmem>>, vector<1x8x128xf32>
    %219 = vector.shape_cast %218 : vector<1x8x128xf32> to vector<8x128xf32>
    %220 = vector.shape_cast %215 : vector<8x128xf32> to vector<1x8x128xf32>
    tpu.vector_store %arg5[%c4, %c0_124, %c0_125], %220 {strides = array<i32>} : memref<16x8x128xf32, #tpu.memory_space<vmem>>, vector<1x8x128xf32>,
    %c40 = arith.constant 40 : index
    %c0_126 = arith.constant 0 : index
    %221 = vector.load %arg6[%c40, %c0_126] : memref<128x512xf32, #tpu.memory_space<vmem>>, vector<8x512xf32>
    %c0_127 = arith.constant 0 : index
    %c0_128 = arith.constant 0 : index
    %222 = vector.load %arg7[%c0_127, %c0_128] : memref<8x128xf32, #tpu.memory_space<vmem>>, vector<8x128xf32>
    %c0_129 = arith.constant 0 : index
    %c0_130 = arith.constant 0 : index
    %223 = vector.load %arg4[%c0_129, %c0_130] : memref<128x512xf32, #tpu.memory_space<vmem>>, vector<128x512xf32>
    %cst_131 = arith.constant dense<0.000000e+00> : vector<8x512xf32>
    %224 = tpu.matmul %222, %223, %cst_131 {dimension_numbers = #tpu.dot_dimension_numbers<[1], [0], [0], [1], [0, 0, 1, 1], [], []>} : vector<8x128xf32>, vector<128x512xf32>, vector<8x512xf32> -> vector<8x512xf32>
    %225 = arith.addf %221, %224 : vector<8x512xf32>
    %226 = vector.extract_strided_slice %225 {offsets = [0, 0], sizes = [8, 128], strides = [1, 1]} : vector<8x512xf32> to vector<8x128xf32>
    %cst_132 = arith.constant 5.000000e-01 : f32
    %227 = vector.broadcast %cst_132 : f32 to vector<8x128xf32>
    %228 = arith.mulf %227, %226 : vector<8x128xf32>
    %229 = math.tanh %228 : vector<8x128xf32>
    %cst_133 = arith.constant 5.000000e-01 : f32
    %230 = vector.broadcast %cst_133 : f32 to vector<8x128xf32>
    %231 = arith.mulf %230, %229 : vector<8x128xf32>
    %cst_134 = arith.constant 5.000000e-01 : f32
    %232 = vector.broadcast %cst_134 : f32 to vector<8x128xf32>
    %233 = arith.addf %231, %232 : vector<8x128xf32>
    %234 = vector.extract_strided_slice %225 {offsets = [0, 128], sizes = [8, 128], strides = [1, 1]} : vector<8x512xf32> to vector<8x128xf32>
    %cst_135 = arith.constant 5.000000e-01 : f32
    %235 = vector.broadcast %cst_135 : f32 to vector<8x128xf32>
    %236 = arith.mulf %235, %234 : vector<8x128xf32>
    %237 = math.tanh %236 : vector<8x128xf32>
    %cst_136 = arith.constant 5.000000e-01 : f32
    %238 = vector.broadcast %cst_136 : f32 to vector<8x128xf32>
    %239 = arith.mulf %238, %237 : vector<8x128xf32>
    %cst_137 = arith.constant 5.000000e-01 : f32
    %240 = vector.broadcast %cst_137 : f32 to vector<8x128xf32>
    %241 = arith.addf %239, %240 : vector<8x128xf32>
    %242 = vector.extract_strided_slice %225 {offsets = [0, 256], sizes = [8, 128], strides = [1, 1]} : vector<8x512xf32> to vector<8x128xf32>
    %243 = math.tanh %242 : vector<8x128xf32>
    %244 = vector.extract_strided_slice %225 {offsets = [0, 384], sizes = [8, 128], strides = [1, 1]} : vector<8x512xf32> to vector<8x128xf32>
    %cst_138 = arith.constant 5.000000e-01 : f32
    %245 = vector.broadcast %cst_138 : f32 to vector<8x128xf32>
    %246 = arith.mulf %245, %244 : vector<8x128xf32>
    %247 = math.tanh %246 : vector<8x128xf32>
    %cst_139 = arith.constant 5.000000e-01 : f32
    %248 = vector.broadcast %cst_139 : f32 to vector<8x128xf32>
    %249 = arith.mulf %248, %247 : vector<8x128xf32>
    %cst_140 = arith.constant 5.000000e-01 : f32
    %250 = vector.broadcast %cst_140 : f32 to vector<8x128xf32>
    %251 = arith.addf %249, %250 : vector<8x128xf32>
    %c0_141 = arith.constant 0 : index
    %c0_142 = arith.constant 0 : index
    %252 = vector.load %arg8[%c0_141, %c0_142] : memref<8x128xf32, #tpu.memory_space<vmem>>, vector<8x128xf32>
    %253 = arith.mulf %241, %252 : vector<8x128xf32>
    %254 = arith.mulf %233, %243 : vector<8x128xf32>
    %255 = arith.addf %253, %254 : vector<8x128xf32>
    %256 = math.tanh %255 : vector<8x128xf32>
    %257 = arith.mulf %251, %256 : vector<8x128xf32>
    %c0_143 = arith.constant 0 : index
    %c0_144 = arith.constant 0 : index
    %258 = vector.load %arg8[%c0_143, %c0_144] : memref<8x128xf32, #tpu.memory_space<vmem>>, vector<8x128xf32>
    tpu.vector_store %arg8[%c0_143, %c0_144], %255 {strides = array<i32>} : memref<8x128xf32, #tpu.memory_space<vmem>>, vector<8x128xf32>,
    %c0_145 = arith.constant 0 : index
    %c0_146 = arith.constant 0 : index
    %259 = vector.load %arg7[%c0_145, %c0_146] : memref<8x128xf32, #tpu.memory_space<vmem>>, vector<8x128xf32>
    tpu.vector_store %arg7[%c0_145, %c0_146], %257 {strides = array<i32>} : memref<8x128xf32, #tpu.memory_space<vmem>>, vector<8x128xf32>,
    %c5 = arith.constant 5 : index
    %c0_147 = arith.constant 0 : index
    %c0_148 = arith.constant 0 : index
    %260 = vector.load %arg5[%c5, %c0_147, %c0_148] : memref<16x8x128xf32, #tpu.memory_space<vmem>>, vector<1x8x128xf32>
    %261 = vector.shape_cast %260 : vector<1x8x128xf32> to vector<8x128xf32>
    %262 = vector.shape_cast %257 : vector<8x128xf32> to vector<1x8x128xf32>
    tpu.vector_store %arg5[%c5, %c0_147, %c0_148], %262 {strides = array<i32>} : memref<16x8x128xf32, #tpu.memory_space<vmem>>, vector<1x8x128xf32>,
    %c48 = arith.constant 48 : index
    %c0_149 = arith.constant 0 : index
    %263 = vector.load %arg6[%c48, %c0_149] : memref<128x512xf32, #tpu.memory_space<vmem>>, vector<8x512xf32>
    %c0_150 = arith.constant 0 : index
    %c0_151 = arith.constant 0 : index
    %264 = vector.load %arg7[%c0_150, %c0_151] : memref<8x128xf32, #tpu.memory_space<vmem>>, vector<8x128xf32>
    %c0_152 = arith.constant 0 : index
    %c0_153 = arith.constant 0 : index
    %265 = vector.load %arg4[%c0_152, %c0_153] : memref<128x512xf32, #tpu.memory_space<vmem>>, vector<128x512xf32>
    %cst_154 = arith.constant dense<0.000000e+00> : vector<8x512xf32>
    %266 = tpu.matmul %264, %265, %cst_154 {dimension_numbers = #tpu.dot_dimension_numbers<[1], [0], [0], [1], [0, 0, 1, 1], [], []>} : vector<8x128xf32>, vector<128x512xf32>, vector<8x512xf32> -> vector<8x512xf32>
    %267 = arith.addf %263, %266 : vector<8x512xf32>
    %268 = vector.extract_strided_slice %267 {offsets = [0, 0], sizes = [8, 128], strides = [1, 1]} : vector<8x512xf32> to vector<8x128xf32>
    %cst_155 = arith.constant 5.000000e-01 : f32
    %269 = vector.broadcast %cst_155 : f32 to vector<8x128xf32>
    %270 = arith.mulf %269, %268 : vector<8x128xf32>
    %271 = math.tanh %270 : vector<8x128xf32>
    %cst_156 = arith.constant 5.000000e-01 : f32
    %272 = vector.broadcast %cst_156 : f32 to vector<8x128xf32>
    %273 = arith.mulf %272, %271 : vector<8x128xf32>
    %cst_157 = arith.constant 5.000000e-01 : f32
    %274 = vector.broadcast %cst_157 : f32 to vector<8x128xf32>
    %275 = arith.addf %273, %274 : vector<8x128xf32>
    %276 = vector.extract_strided_slice %267 {offsets = [0, 128], sizes = [8, 128], strides = [1, 1]} : vector<8x512xf32> to vector<8x128xf32>
    %cst_158 = arith.constant 5.000000e-01 : f32
    %277 = vector.broadcast %cst_158 : f32 to vector<8x128xf32>
    %278 = arith.mulf %277, %276 : vector<8x128xf32>
    %279 = math.tanh %278 : vector<8x128xf32>
    %cst_159 = arith.constant 5.000000e-01 : f32
    %280 = vector.broadcast %cst_159 : f32 to vector<8x128xf32>
    %281 = arith.mulf %280, %279 : vector<8x128xf32>
    %cst_160 = arith.constant 5.000000e-01 : f32
    %282 = vector.broadcast %cst_160 : f32 to vector<8x128xf32>
    %283 = arith.addf %281, %282 : vector<8x128xf32>
    %284 = vector.extract_strided_slice %267 {offsets = [0, 256], sizes = [8, 128], strides = [1, 1]} : vector<8x512xf32> to vector<8x128xf32>
    %285 = math.tanh %284 : vector<8x128xf32>
    %286 = vector.extract_strided_slice %267 {offsets = [0, 384], sizes = [8, 128], strides = [1, 1]} : vector<8x512xf32> to vector<8x128xf32>
    %cst_161 = arith.constant 5.000000e-01 : f32
    %287 = vector.broadcast %cst_161 : f32 to vector<8x128xf32>
    %288 = arith.mulf %287, %286 : vector<8x128xf32>
    %289 = math.tanh %288 : vector<8x128xf32>
    %cst_162 = arith.constant 5.000000e-01 : f32
    %290 = vector.broadcast %cst_162 : f32 to vector<8x128xf32>
    %291 = arith.mulf %290, %289 : vector<8x128xf32>
    %cst_163 = arith.constant 5.000000e-01 : f32
    %292 = vector.broadcast %cst_163 : f32 to vector<8x128xf32>
    %293 = arith.addf %291, %292 : vector<8x128xf32>
    %c0_164 = arith.constant 0 : index
    %c0_165 = arith.constant 0 : index
    %294 = vector.load %arg8[%c0_164, %c0_165] : memref<8x128xf32, #tpu.memory_space<vmem>>, vector<8x128xf32>
    %295 = arith.mulf %283, %294 : vector<8x128xf32>
    %296 = arith.mulf %275, %285 : vector<8x128xf32>
    %297 = arith.addf %295, %296 : vector<8x128xf32>
    %298 = math.tanh %297 : vector<8x128xf32>
    %299 = arith.mulf %293, %298 : vector<8x128xf32>
    %c0_166 = arith.constant 0 : index
    %c0_167 = arith.constant 0 : index
    %300 = vector.load %arg8[%c0_166, %c0_167] : memref<8x128xf32, #tpu.memory_space<vmem>>, vector<8x128xf32>
    tpu.vector_store %arg8[%c0_166, %c0_167], %297 {strides = array<i32>} : memref<8x128xf32, #tpu.memory_space<vmem>>, vector<8x128xf32>,
    %c0_168 = arith.constant 0 : index
    %c0_169 = arith.constant 0 : index
    %301 = vector.load %arg7[%c0_168, %c0_169] : memref<8x128xf32, #tpu.memory_space<vmem>>, vector<8x128xf32>
    tpu.vector_store %arg7[%c0_168, %c0_169], %299 {strides = array<i32>} : memref<8x128xf32, #tpu.memory_space<vmem>>, vector<8x128xf32>,
    %c6 = arith.constant 6 : index
    %c0_170 = arith.constant 0 : index
    %c0_171 = arith.constant 0 : index
    %302 = vector.load %arg5[%c6, %c0_170, %c0_171] : memref<16x8x128xf32, #tpu.memory_space<vmem>>, vector<1x8x128xf32>
    %303 = vector.shape_cast %302 : vector<1x8x128xf32> to vector<8x128xf32>
    %304 = vector.shape_cast %299 : vector<8x128xf32> to vector<1x8x128xf32>
    tpu.vector_store %arg5[%c6, %c0_170, %c0_171], %304 {strides = array<i32>} : memref<16x8x128xf32, #tpu.memory_space<vmem>>, vector<1x8x128xf32>,
    %c56 = arith.constant 56 : index
    %c0_172 = arith.constant 0 : index
    %305 = vector.load %arg6[%c56, %c0_172] : memref<128x512xf32, #tpu.memory_space<vmem>>, vector<8x512xf32>
    %c0_173 = arith.constant 0 : index
    %c0_174 = arith.constant 0 : index
    %306 = vector.load %arg7[%c0_173, %c0_174] : memref<8x128xf32, #tpu.memory_space<vmem>>, vector<8x128xf32>
    %c0_175 = arith.constant 0 : index
    %c0_176 = arith.constant 0 : index
    %307 = vector.load %arg4[%c0_175, %c0_176] : memref<128x512xf32, #tpu.memory_space<vmem>>, vector<128x512xf32>
    %cst_177 = arith.constant dense<0.000000e+00> : vector<8x512xf32>
    %308 = tpu.matmul %306, %307, %cst_177 {dimension_numbers = #tpu.dot_dimension_numbers<[1], [0], [0], [1], [0, 0, 1, 1], [], []>} : vector<8x128xf32>, vector<128x512xf32>, vector<8x512xf32> -> vector<8x512xf32>
    %309 = arith.addf %305, %308 : vector<8x512xf32>
    %310 = vector.extract_strided_slice %309 {offsets = [0, 0], sizes = [8, 128], strides = [1, 1]} : vector<8x512xf32> to vector<8x128xf32>
    %cst_178 = arith.constant 5.000000e-01 : f32
    %311 = vector.broadcast %cst_178 : f32 to vector<8x128xf32>
    %312 = arith.mulf %311, %310 : vector<8x128xf32>
    %313 = math.tanh %312 : vector<8x128xf32>
    %cst_179 = arith.constant 5.000000e-01 : f32
    %314 = vector.broadcast %cst_179 : f32 to vector<8x128xf32>
    %315 = arith.mulf %314, %313 : vector<8x128xf32>
    %cst_180 = arith.constant 5.000000e-01 : f32
    %316 = vector.broadcast %cst_180 : f32 to vector<8x128xf32>
    %317 = arith.addf %315, %316 : vector<8x128xf32>
    %318 = vector.extract_strided_slice %309 {offsets = [0, 128], sizes = [8, 128], strides = [1, 1]} : vector<8x512xf32> to vector<8x128xf32>
    %cst_181 = arith.constant 5.000000e-01 : f32
    %319 = vector.broadcast %cst_181 : f32 to vector<8x128xf32>
    %320 = arith.mulf %319, %318 : vector<8x128xf32>
    %321 = math.tanh %320 : vector<8x128xf32>
    %cst_182 = arith.constant 5.000000e-01 : f32
    %322 = vector.broadcast %cst_182 : f32 to vector<8x128xf32>
    %323 = arith.mulf %322, %321 : vector<8x128xf32>
    %cst_183 = arith.constant 5.000000e-01 : f32
    %324 = vector.broadcast %cst_183 : f32 to vector<8x128xf32>
    %325 = arith.addf %323, %324 : vector<8x128xf32>
    %326 = vector.extract_strided_slice %309 {offsets = [0, 256], sizes = [8, 128], strides = [1, 1]} : vector<8x512xf32> to vector<8x128xf32>
    %327 = math.tanh %326 : vector<8x128xf32>
    %328 = vector.extract_strided_slice %309 {offsets = [0, 384], sizes = [8, 128], strides = [1, 1]} : vector<8x512xf32> to vector<8x128xf32>
    %cst_184 = arith.constant 5.000000e-01 : f32
    %329 = vector.broadcast %cst_184 : f32 to vector<8x128xf32>
    %330 = arith.mulf %329, %328 : vector<8x128xf32>
    %331 = math.tanh %330 : vector<8x128xf32>
    %cst_185 = arith.constant 5.000000e-01 : f32
    %332 = vector.broadcast %cst_185 : f32 to vector<8x128xf32>
    %333 = arith.mulf %332, %331 : vector<8x128xf32>
    %cst_186 = arith.constant 5.000000e-01 : f32
    %334 = vector.broadcast %cst_186 : f32 to vector<8x128xf32>
    %335 = arith.addf %333, %334 : vector<8x128xf32>
    %c0_187 = arith.constant 0 : index
    %c0_188 = arith.constant 0 : index
    %336 = vector.load %arg8[%c0_187, %c0_188] : memref<8x128xf32, #tpu.memory_space<vmem>>, vector<8x128xf32>
    %337 = arith.mulf %325, %336 : vector<8x128xf32>
    %338 = arith.mulf %317, %327 : vector<8x128xf32>
    %339 = arith.addf %337, %338 : vector<8x128xf32>
    %340 = math.tanh %339 : vector<8x128xf32>
    %341 = arith.mulf %335, %340 : vector<8x128xf32>
    %c0_189 = arith.constant 0 : index
    %c0_190 = arith.constant 0 : index
    %342 = vector.load %arg8[%c0_189, %c0_190] : memref<8x128xf32, #tpu.memory_space<vmem>>, vector<8x128xf32>
    tpu.vector_store %arg8[%c0_189, %c0_190], %339 {strides = array<i32>} : memref<8x128xf32, #tpu.memory_space<vmem>>, vector<8x128xf32>,
    %c0_191 = arith.constant 0 : index
    %c0_192 = arith.constant 0 : index
    %343 = vector.load %arg7[%c0_191, %c0_192] : memref<8x128xf32, #tpu.memory_space<vmem>>, vector<8x128xf32>
    tpu.vector_store %arg7[%c0_191, %c0_192], %341 {strides = array<i32>} : memref<8x128xf32, #tpu.memory_space<vmem>>, vector<8x128xf32>,
    %c7 = arith.constant 7 : index
    %c0_193 = arith.constant 0 : index
    %c0_194 = arith.constant 0 : index
    %344 = vector.load %arg5[%c7, %c0_193, %c0_194] : memref<16x8x128xf32, #tpu.memory_space<vmem>>, vector<1x8x128xf32>
    %345 = vector.shape_cast %344 : vector<1x8x128xf32> to vector<8x128xf32>
    %346 = vector.shape_cast %341 : vector<8x128xf32> to vector<1x8x128xf32>
    tpu.vector_store %arg5[%c7, %c0_193, %c0_194], %346 {strides = array<i32>} : memref<16x8x128xf32, #tpu.memory_space<vmem>>, vector<1x8x128xf32>,
    %c64 = arith.constant 64 : index
    %c0_195 = arith.constant 0 : index
    %347 = vector.load %arg6[%c64, %c0_195] : memref<128x512xf32, #tpu.memory_space<vmem>>, vector<8x512xf32>
    %c0_196 = arith.constant 0 : index
    %c0_197 = arith.constant 0 : index
    %348 = vector.load %arg7[%c0_196, %c0_197] : memref<8x128xf32, #tpu.memory_space<vmem>>, vector<8x128xf32>
    %c0_198 = arith.constant 0 : index
    %c0_199 = arith.constant 0 : index
    %349 = vector.load %arg4[%c0_198, %c0_199] : memref<128x512xf32, #tpu.memory_space<vmem>>, vector<128x512xf32>
    %cst_200 = arith.constant dense<0.000000e+00> : vector<8x512xf32>
    %350 = tpu.matmul %348, %349, %cst_200 {dimension_numbers = #tpu.dot_dimension_numbers<[1], [0], [0], [1], [0, 0, 1, 1], [], []>} : vector<8x128xf32>, vector<128x512xf32>, vector<8x512xf32> -> vector<8x512xf32>
    %351 = arith.addf %347, %350 : vector<8x512xf32>
    %352 = vector.extract_strided_slice %351 {offsets = [0, 0], sizes = [8, 128], strides = [1, 1]} : vector<8x512xf32> to vector<8x128xf32>
    %cst_201 = arith.constant 5.000000e-01 : f32
    %353 = vector.broadcast %cst_201 : f32 to vector<8x128xf32>
    %354 = arith.mulf %353, %352 : vector<8x128xf32>
    %355 = math.tanh %354 : vector<8x128xf32>
    %cst_202 = arith.constant 5.000000e-01 : f32
    %356 = vector.broadcast %cst_202 : f32 to vector<8x128xf32>
    %357 = arith.mulf %356, %355 : vector<8x128xf32>
    %cst_203 = arith.constant 5.000000e-01 : f32
    %358 = vector.broadcast %cst_203 : f32 to vector<8x128xf32>
    %359 = arith.addf %357, %358 : vector<8x128xf32>
    %360 = vector.extract_strided_slice %351 {offsets = [0, 128], sizes = [8, 128], strides = [1, 1]} : vector<8x512xf32> to vector<8x128xf32>
    %cst_204 = arith.constant 5.000000e-01 : f32
    %361 = vector.broadcast %cst_204 : f32 to vector<8x128xf32>
    %362 = arith.mulf %361, %360 : vector<8x128xf32>
    %363 = math.tanh %362 : vector<8x128xf32>
    %cst_205 = arith.constant 5.000000e-01 : f32
    %364 = vector.broadcast %cst_205 : f32 to vector<8x128xf32>
    %365 = arith.mulf %364, %363 : vector<8x128xf32>
    %cst_206 = arith.constant 5.000000e-01 : f32
    %366 = vector.broadcast %cst_206 : f32 to vector<8x128xf32>
    %367 = arith.addf %365, %366 : vector<8x128xf32>
    %368 = vector.extract_strided_slice %351 {offsets = [0, 256], sizes = [8, 128], strides = [1, 1]} : vector<8x512xf32> to vector<8x128xf32>
    %369 = math.tanh %368 : vector<8x128xf32>
    %370 = vector.extract_strided_slice %351 {offsets = [0, 384], sizes = [8, 128], strides = [1, 1]} : vector<8x512xf32> to vector<8x128xf32>
    %cst_207 = arith.constant 5.000000e-01 : f32
    %371 = vector.broadcast %cst_207 : f32 to vector<8x128xf32>
    %372 = arith.mulf %371, %370 : vector<8x128xf32>
    %373 = math.tanh %372 : vector<8x128xf32>
    %cst_208 = arith.constant 5.000000e-01 : f32
    %374 = vector.broadcast %cst_208 : f32 to vector<8x128xf32>
    %375 = arith.mulf %374, %373 : vector<8x128xf32>
    %cst_209 = arith.constant 5.000000e-01 : f32
    %376 = vector.broadcast %cst_209 : f32 to vector<8x128xf32>
    %377 = arith.addf %375, %376 : vector<8x128xf32>
    %c0_210 = arith.constant 0 : index
    %c0_211 = arith.constant 0 : index
    %378 = vector.load %arg8[%c0_210, %c0_211] : memref<8x128xf32, #tpu.memory_space<vmem>>, vector<8x128xf32>
    %379 = arith.mulf %367, %378 : vector<8x128xf32>
    %380 = arith.mulf %359, %369 : vector<8x128xf32>
    %381 = arith.addf %379, %380 : vector<8x128xf32>
    %382 = math.tanh %381 : vector<8x128xf32>
    %383 = arith.mulf %377, %382 : vector<8x128xf32>
    %c0_212 = arith.constant 0 : index
    %c0_213 = arith.constant 0 : index
    %384 = vector.load %arg8[%c0_212, %c0_213] : memref<8x128xf32, #tpu.memory_space<vmem>>, vector<8x128xf32>
    tpu.vector_store %arg8[%c0_212, %c0_213], %381 {strides = array<i32>} : memref<8x128xf32, #tpu.memory_space<vmem>>, vector<8x128xf32>,
    %c0_214 = arith.constant 0 : index
    %c0_215 = arith.constant 0 : index
    %385 = vector.load %arg7[%c0_214, %c0_215] : memref<8x128xf32, #tpu.memory_space<vmem>>, vector<8x128xf32>
    tpu.vector_store %arg7[%c0_214, %c0_215], %383 {strides = array<i32>} : memref<8x128xf32, #tpu.memory_space<vmem>>, vector<8x128xf32>,
    %c8_216 = arith.constant 8 : index
    %c0_217 = arith.constant 0 : index
    %c0_218 = arith.constant 0 : index
    %386 = vector.load %arg5[%c8_216, %c0_217, %c0_218] : memref<16x8x128xf32, #tpu.memory_space<vmem>>, vector<1x8x128xf32>
    %387 = vector.shape_cast %386 : vector<1x8x128xf32> to vector<8x128xf32>
    %388 = vector.shape_cast %383 : vector<8x128xf32> to vector<1x8x128xf32>
    tpu.vector_store %arg5[%c8_216, %c0_217, %c0_218], %388 {strides = array<i32>} : memref<16x8x128xf32, #tpu.memory_space<vmem>>, vector<1x8x128xf32>,
    %c72 = arith.constant 72 : index
    %c0_219 = arith.constant 0 : index
    %389 = vector.load %arg6[%c72, %c0_219] : memref<128x512xf32, #tpu.memory_space<vmem>>, vector<8x512xf32>
    %c0_220 = arith.constant 0 : index
    %c0_221 = arith.constant 0 : index
    %390 = vector.load %arg7[%c0_220, %c0_221] : memref<8x128xf32, #tpu.memory_space<vmem>>, vector<8x128xf32>
    %c0_222 = arith.constant 0 : index
    %c0_223 = arith.constant 0 : index
    %391 = vector.load %arg4[%c0_222, %c0_223] : memref<128x512xf32, #tpu.memory_space<vmem>>, vector<128x512xf32>
    %cst_224 = arith.constant dense<0.000000e+00> : vector<8x512xf32>
    %392 = tpu.matmul %390, %391, %cst_224 {dimension_numbers = #tpu.dot_dimension_numbers<[1], [0], [0], [1], [0, 0, 1, 1], [], []>} : vector<8x128xf32>, vector<128x512xf32>, vector<8x512xf32> -> vector<8x512xf32>
    %393 = arith.addf %389, %392 : vector<8x512xf32>
    %394 = vector.extract_strided_slice %393 {offsets = [0, 0], sizes = [8, 128], strides = [1, 1]} : vector<8x512xf32> to vector<8x128xf32>
    %cst_225 = arith.constant 5.000000e-01 : f32
    %395 = vector.broadcast %cst_225 : f32 to vector<8x128xf32>
    %396 = arith.mulf %395, %394 : vector<8x128xf32>
    %397 = math.tanh %396 : vector<8x128xf32>
    %cst_226 = arith.constant 5.000000e-01 : f32
    %398 = vector.broadcast %cst_226 : f32 to vector<8x128xf32>
    %399 = arith.mulf %398, %397 : vector<8x128xf32>
    %cst_227 = arith.constant 5.000000e-01 : f32
    %400 = vector.broadcast %cst_227 : f32 to vector<8x128xf32>
    %401 = arith.addf %399, %400 : vector<8x128xf32>
    %402 = vector.extract_strided_slice %393 {offsets = [0, 128], sizes = [8, 128], strides = [1, 1]} : vector<8x512xf32> to vector<8x128xf32>
    %cst_228 = arith.constant 5.000000e-01 : f32
    %403 = vector.broadcast %cst_228 : f32 to vector<8x128xf32>
    %404 = arith.mulf %403, %402 : vector<8x128xf32>
    %405 = math.tanh %404 : vector<8x128xf32>
    %cst_229 = arith.constant 5.000000e-01 : f32
    %406 = vector.broadcast %cst_229 : f32 to vector<8x128xf32>
    %407 = arith.mulf %406, %405 : vector<8x128xf32>
    %cst_230 = arith.constant 5.000000e-01 : f32
    %408 = vector.broadcast %cst_230 : f32 to vector<8x128xf32>
    %409 = arith.addf %407, %408 : vector<8x128xf32>
    %410 = vector.extract_strided_slice %393 {offsets = [0, 256], sizes = [8, 128], strides = [1, 1]} : vector<8x512xf32> to vector<8x128xf32>
    %411 = math.tanh %410 : vector<8x128xf32>
    %412 = vector.extract_strided_slice %393 {offsets = [0, 384], sizes = [8, 128], strides = [1, 1]} : vector<8x512xf32> to vector<8x128xf32>
    %cst_231 = arith.constant 5.000000e-01 : f32
    %413 = vector.broadcast %cst_231 : f32 to vector<8x128xf32>
    %414 = arith.mulf %413, %412 : vector<8x128xf32>
    %415 = math.tanh %414 : vector<8x128xf32>
    %cst_232 = arith.constant 5.000000e-01 : f32
    %416 = vector.broadcast %cst_232 : f32 to vector<8x128xf32>
    %417 = arith.mulf %416, %415 : vector<8x128xf32>
    %cst_233 = arith.constant 5.000000e-01 : f32
    %418 = vector.broadcast %cst_233 : f32 to vector<8x128xf32>
    %419 = arith.addf %417, %418 : vector<8x128xf32>
    %c0_234 = arith.constant 0 : index
    %c0_235 = arith.constant 0 : index
    %420 = vector.load %arg8[%c0_234, %c0_235] : memref<8x128xf32, #tpu.memory_space<vmem>>, vector<8x128xf32>
    %421 = arith.mulf %409, %420 : vector<8x128xf32>
    %422 = arith.mulf %401, %411 : vector<8x128xf32>
    %423 = arith.addf %421, %422 : vector<8x128xf32>
    %424 = math.tanh %423 : vector<8x128xf32>
    %425 = arith.mulf %419, %424 : vector<8x128xf32>
    %c0_236 = arith.constant 0 : index
    %c0_237 = arith.constant 0 : index
    %426 = vector.load %arg8[%c0_236, %c0_237] : memref<8x128xf32, #tpu.memory_space<vmem>>, vector<8x128xf32>
    tpu.vector_store %arg8[%c0_236, %c0_237], %423 {strides = array<i32>} : memref<8x128xf32, #tpu.memory_space<vmem>>, vector<8x128xf32>,
    %c0_238 = arith.constant 0 : index
    %c0_239 = arith.constant 0 : index
    %427 = vector.load %arg7[%c0_238, %c0_239] : memref<8x128xf32, #tpu.memory_space<vmem>>, vector<8x128xf32>
    tpu.vector_store %arg7[%c0_238, %c0_239], %425 {strides = array<i32>} : memref<8x128xf32, #tpu.memory_space<vmem>>, vector<8x128xf32>,
    %c9 = arith.constant 9 : index
    %c0_240 = arith.constant 0 : index
    %c0_241 = arith.constant 0 : index
    %428 = vector.load %arg5[%c9, %c0_240, %c0_241] : memref<16x8x128xf32, #tpu.memory_space<vmem>>, vector<1x8x128xf32>
    %429 = vector.shape_cast %428 : vector<1x8x128xf32> to vector<8x128xf32>
    %430 = vector.shape_cast %425 : vector<8x128xf32> to vector<1x8x128xf32>
    tpu.vector_store %arg5[%c9, %c0_240, %c0_241], %430 {strides = array<i32>} : memref<16x8x128xf32, #tpu.memory_space<vmem>>, vector<1x8x128xf32>,
    %c80 = arith.constant 80 : index
    %c0_242 = arith.constant 0 : index
    %431 = vector.load %arg6[%c80, %c0_242] : memref<128x512xf32, #tpu.memory_space<vmem>>, vector<8x512xf32>
    %c0_243 = arith.constant 0 : index
    %c0_244 = arith.constant 0 : index
    %432 = vector.load %arg7[%c0_243, %c0_244] : memref<8x128xf32, #tpu.memory_space<vmem>>, vector<8x128xf32>
    %c0_245 = arith.constant 0 : index
    %c0_246 = arith.constant 0 : index
    %433 = vector.load %arg4[%c0_245, %c0_246] : memref<128x512xf32, #tpu.memory_space<vmem>>, vector<128x512xf32>
    %cst_247 = arith.constant dense<0.000000e+00> : vector<8x512xf32>
    %434 = tpu.matmul %432, %433, %cst_247 {dimension_numbers = #tpu.dot_dimension_numbers<[1], [0], [0], [1], [0, 0, 1, 1], [], []>} : vector<8x128xf32>, vector<128x512xf32>, vector<8x512xf32> -> vector<8x512xf32>
    %435 = arith.addf %431, %434 : vector<8x512xf32>
    %436 = vector.extract_strided_slice %435 {offsets = [0, 0], sizes = [8, 128], strides = [1, 1]} : vector<8x512xf32> to vector<8x128xf32>
    %cst_248 = arith.constant 5.000000e-01 : f32
    %437 = vector.broadcast %cst_248 : f32 to vector<8x128xf32>
    %438 = arith.mulf %437, %436 : vector<8x128xf32>
    %439 = math.tanh %438 : vector<8x128xf32>
    %cst_249 = arith.constant 5.000000e-01 : f32
    %440 = vector.broadcast %cst_249 : f32 to vector<8x128xf32>
    %441 = arith.mulf %440, %439 : vector<8x128xf32>
    %cst_250 = arith.constant 5.000000e-01 : f32
    %442 = vector.broadcast %cst_250 : f32 to vector<8x128xf32>
    %443 = arith.addf %441, %442 : vector<8x128xf32>
    %444 = vector.extract_strided_slice %435 {offsets = [0, 128], sizes = [8, 128], strides = [1, 1]} : vector<8x512xf32> to vector<8x128xf32>
    %cst_251 = arith.constant 5.000000e-01 : f32
    %445 = vector.broadcast %cst_251 : f32 to vector<8x128xf32>
    %446 = arith.mulf %445, %444 : vector<8x128xf32>
    %447 = math.tanh %446 : vector<8x128xf32>
    %cst_252 = arith.constant 5.000000e-01 : f32
    %448 = vector.broadcast %cst_252 : f32 to vector<8x128xf32>
    %449 = arith.mulf %448, %447 : vector<8x128xf32>
    %cst_253 = arith.constant 5.000000e-01 : f32
    %450 = vector.broadcast %cst_253 : f32 to vector<8x128xf32>
    %451 = arith.addf %449, %450 : vector<8x128xf32>
    %452 = vector.extract_strided_slice %435 {offsets = [0, 256], sizes = [8, 128], strides = [1, 1]} : vector<8x512xf32> to vector<8x128xf32>
    %453 = math.tanh %452 : vector<8x128xf32>
    %454 = vector.extract_strided_slice %435 {offsets = [0, 384], sizes = [8, 128], strides = [1, 1]} : vector<8x512xf32> to vector<8x128xf32>
    %cst_254 = arith.constant 5.000000e-01 : f32
    %455 = vector.broadcast %cst_254 : f32 to vector<8x128xf32>
    %456 = arith.mulf %455, %454 : vector<8x128xf32>
    %457 = math.tanh %456 : vector<8x128xf32>
    %cst_255 = arith.constant 5.000000e-01 : f32
    %458 = vector.broadcast %cst_255 : f32 to vector<8x128xf32>
    %459 = arith.mulf %458, %457 : vector<8x128xf32>
    %cst_256 = arith.constant 5.000000e-01 : f32
    %460 = vector.broadcast %cst_256 : f32 to vector<8x128xf32>
    %461 = arith.addf %459, %460 : vector<8x128xf32>
    %c0_257 = arith.constant 0 : index
    %c0_258 = arith.constant 0 : index
    %462 = vector.load %arg8[%c0_257, %c0_258] : memref<8x128xf32, #tpu.memory_space<vmem>>, vector<8x128xf32>
    %463 = arith.mulf %451, %462 : vector<8x128xf32>
    %464 = arith.mulf %443, %453 : vector<8x128xf32>
    %465 = arith.addf %463, %464 : vector<8x128xf32>
    %466 = math.tanh %465 : vector<8x128xf32>
    %467 = arith.mulf %461, %466 : vector<8x128xf32>
    %c0_259 = arith.constant 0 : index
    %c0_260 = arith.constant 0 : index
    %468 = vector.load %arg8[%c0_259, %c0_260] : memref<8x128xf32, #tpu.memory_space<vmem>>, vector<8x128xf32>
    tpu.vector_store %arg8[%c0_259, %c0_260], %465 {strides = array<i32>} : memref<8x128xf32, #tpu.memory_space<vmem>>, vector<8x128xf32>,
    %c0_261 = arith.constant 0 : index
    %c0_262 = arith.constant 0 : index
    %469 = vector.load %arg7[%c0_261, %c0_262] : memref<8x128xf32, #tpu.memory_space<vmem>>, vector<8x128xf32>
    tpu.vector_store %arg7[%c0_261, %c0_262], %467 {strides = array<i32>} : memref<8x128xf32, #tpu.memory_space<vmem>>, vector<8x128xf32>,
    %c10 = arith.constant 10 : index
    %c0_263 = arith.constant 0 : index
    %c0_264 = arith.constant 0 : index
    %470 = vector.load %arg5[%c10, %c0_263, %c0_264] : memref<16x8x128xf32, #tpu.memory_space<vmem>>, vector<1x8x128xf32>
    %471 = vector.shape_cast %470 : vector<1x8x128xf32> to vector<8x128xf32>
    %472 = vector.shape_cast %467 : vector<8x128xf32> to vector<1x8x128xf32>
    tpu.vector_store %arg5[%c10, %c0_263, %c0_264], %472 {strides = array<i32>} : memref<16x8x128xf32, #tpu.memory_space<vmem>>, vector<1x8x128xf32>,
    %c88 = arith.constant 88 : index
    %c0_265 = arith.constant 0 : index
    %473 = vector.load %arg6[%c88, %c0_265] : memref<128x512xf32, #tpu.memory_space<vmem>>, vector<8x512xf32>
    %c0_266 = arith.constant 0 : index
    %c0_267 = arith.constant 0 : index
    %474 = vector.load %arg7[%c0_266, %c0_267] : memref<8x128xf32, #tpu.memory_space<vmem>>, vector<8x128xf32>
    %c0_268 = arith.constant 0 : index
    %c0_269 = arith.constant 0 : index
    %475 = vector.load %arg4[%c0_268, %c0_269] : memref<128x512xf32, #tpu.memory_space<vmem>>, vector<128x512xf32>
    %cst_270 = arith.constant dense<0.000000e+00> : vector<8x512xf32>
    %476 = tpu.matmul %474, %475, %cst_270 {dimension_numbers = #tpu.dot_dimension_numbers<[1], [0], [0], [1], [0, 0, 1, 1], [], []>} : vector<8x128xf32>, vector<128x512xf32>, vector<8x512xf32> -> vector<8x512xf32>
    %477 = arith.addf %473, %476 : vector<8x512xf32>
    %478 = vector.extract_strided_slice %477 {offsets = [0, 0], sizes = [8, 128], strides = [1, 1]} : vector<8x512xf32> to vector<8x128xf32>
    %cst_271 = arith.constant 5.000000e-01 : f32
    %479 = vector.broadcast %cst_271 : f32 to vector<8x128xf32>
    %480 = arith.mulf %479, %478 : vector<8x128xf32>
    %481 = math.tanh %480 : vector<8x128xf32>
    %cst_272 = arith.constant 5.000000e-01 : f32
    %482 = vector.broadcast %cst_272 : f32 to vector<8x128xf32>
    %483 = arith.mulf %482, %481 : vector<8x128xf32>
    %cst_273 = arith.constant 5.000000e-01 : f32
    %484 = vector.broadcast %cst_273 : f32 to vector<8x128xf32>
    %485 = arith.addf %483, %484 : vector<8x128xf32>
    %486 = vector.extract_strided_slice %477 {offsets = [0, 128], sizes = [8, 128], strides = [1, 1]} : vector<8x512xf32> to vector<8x128xf32>
    %cst_274 = arith.constant 5.000000e-01 : f32
    %487 = vector.broadcast %cst_274 : f32 to vector<8x128xf32>
    %488 = arith.mulf %487, %486 : vector<8x128xf32>
    %489 = math.tanh %488 : vector<8x128xf32>
    %cst_275 = arith.constant 5.000000e-01 : f32
    %490 = vector.broadcast %cst_275 : f32 to vector<8x128xf32>
    %491 = arith.mulf %490, %489 : vector<8x128xf32>
    %cst_276 = arith.constant 5.000000e-01 : f32
    %492 = vector.broadcast %cst_276 : f32 to vector<8x128xf32>
    %493 = arith.addf %491, %492 : vector<8x128xf32>
    %494 = vector.extract_strided_slice %477 {offsets = [0, 256], sizes = [8, 128], strides = [1, 1]} : vector<8x512xf32> to vector<8x128xf32>
    %495 = math.tanh %494 : vector<8x128xf32>
    %496 = vector.extract_strided_slice %477 {offsets = [0, 384], sizes = [8, 128], strides = [1, 1]} : vector<8x512xf32> to vector<8x128xf32>
    %cst_277 = arith.constant 5.000000e-01 : f32
    %497 = vector.broadcast %cst_277 : f32 to vector<8x128xf32>
    %498 = arith.mulf %497, %496 : vector<8x128xf32>
    %499 = math.tanh %498 : vector<8x128xf32>
    %cst_278 = arith.constant 5.000000e-01 : f32
    %500 = vector.broadcast %cst_278 : f32 to vector<8x128xf32>
    %501 = arith.mulf %500, %499 : vector<8x128xf32>
    %cst_279 = arith.constant 5.000000e-01 : f32
    %502 = vector.broadcast %cst_279 : f32 to vector<8x128xf32>
    %503 = arith.addf %501, %502 : vector<8x128xf32>
    %c0_280 = arith.constant 0 : index
    %c0_281 = arith.constant 0 : index
    %504 = vector.load %arg8[%c0_280, %c0_281] : memref<8x128xf32, #tpu.memory_space<vmem>>, vector<8x128xf32>
    %505 = arith.mulf %493, %504 : vector<8x128xf32>
    %506 = arith.mulf %485, %495 : vector<8x128xf32>
    %507 = arith.addf %505, %506 : vector<8x128xf32>
    %508 = math.tanh %507 : vector<8x128xf32>
    %509 = arith.mulf %503, %508 : vector<8x128xf32>
    %c0_282 = arith.constant 0 : index
    %c0_283 = arith.constant 0 : index
    %510 = vector.load %arg8[%c0_282, %c0_283] : memref<8x128xf32, #tpu.memory_space<vmem>>, vector<8x128xf32>
    tpu.vector_store %arg8[%c0_282, %c0_283], %507 {strides = array<i32>} : memref<8x128xf32, #tpu.memory_space<vmem>>, vector<8x128xf32>,
    %c0_284 = arith.constant 0 : index
    %c0_285 = arith.constant 0 : index
    %511 = vector.load %arg7[%c0_284, %c0_285] : memref<8x128xf32, #tpu.memory_space<vmem>>, vector<8x128xf32>
    tpu.vector_store %arg7[%c0_284, %c0_285], %509 {strides = array<i32>} : memref<8x128xf32, #tpu.memory_space<vmem>>, vector<8x128xf32>,
    %c11 = arith.constant 11 : index
    %c0_286 = arith.constant 0 : index
    %c0_287 = arith.constant 0 : index
    %512 = vector.load %arg5[%c11, %c0_286, %c0_287] : memref<16x8x128xf32, #tpu.memory_space<vmem>>, vector<1x8x128xf32>
    %513 = vector.shape_cast %512 : vector<1x8x128xf32> to vector<8x128xf32>
    %514 = vector.shape_cast %509 : vector<8x128xf32> to vector<1x8x128xf32>
    tpu.vector_store %arg5[%c11, %c0_286, %c0_287], %514 {strides = array<i32>} : memref<16x8x128xf32, #tpu.memory_space<vmem>>, vector<1x8x128xf32>,
    %c96 = arith.constant 96 : index
    %c0_288 = arith.constant 0 : index
    %515 = vector.load %arg6[%c96, %c0_288] : memref<128x512xf32, #tpu.memory_space<vmem>>, vector<8x512xf32>
    %c0_289 = arith.constant 0 : index
    %c0_290 = arith.constant 0 : index
    %516 = vector.load %arg7[%c0_289, %c0_290] : memref<8x128xf32, #tpu.memory_space<vmem>>, vector<8x128xf32>
    %c0_291 = arith.constant 0 : index
    %c0_292 = arith.constant 0 : index
    %517 = vector.load %arg4[%c0_291, %c0_292] : memref<128x512xf32, #tpu.memory_space<vmem>>, vector<128x512xf32>
    %cst_293 = arith.constant dense<0.000000e+00> : vector<8x512xf32>
    %518 = tpu.matmul %516, %517, %cst_293 {dimension_numbers = #tpu.dot_dimension_numbers<[1], [0], [0], [1], [0, 0, 1, 1], [], []>} : vector<8x128xf32>, vector<128x512xf32>, vector<8x512xf32> -> vector<8x512xf32>
    %519 = arith.addf %515, %518 : vector<8x512xf32>
    %520 = vector.extract_strided_slice %519 {offsets = [0, 0], sizes = [8, 128], strides = [1, 1]} : vector<8x512xf32> to vector<8x128xf32>
    %cst_294 = arith.constant 5.000000e-01 : f32
    %521 = vector.broadcast %cst_294 : f32 to vector<8x128xf32>
    %522 = arith.mulf %521, %520 : vector<8x128xf32>
    %523 = math.tanh %522 : vector<8x128xf32>
    %cst_295 = arith.constant 5.000000e-01 : f32
    %524 = vector.broadcast %cst_295 : f32 to vector<8x128xf32>
    %525 = arith.mulf %524, %523 : vector<8x128xf32>
    %cst_296 = arith.constant 5.000000e-01 : f32
    %526 = vector.broadcast %cst_296 : f32 to vector<8x128xf32>
    %527 = arith.addf %525, %526 : vector<8x128xf32>
    %528 = vector.extract_strided_slice %519 {offsets = [0, 128], sizes = [8, 128], strides = [1, 1]} : vector<8x512xf32> to vector<8x128xf32>
    %cst_297 = arith.constant 5.000000e-01 : f32
    %529 = vector.broadcast %cst_297 : f32 to vector<8x128xf32>
    %530 = arith.mulf %529, %528 : vector<8x128xf32>
    %531 = math.tanh %530 : vector<8x128xf32>
    %cst_298 = arith.constant 5.000000e-01 : f32
    %532 = vector.broadcast %cst_298 : f32 to vector<8x128xf32>
    %533 = arith.mulf %532, %531 : vector<8x128xf32>
    %cst_299 = arith.constant 5.000000e-01 : f32
    %534 = vector.broadcast %cst_299 : f32 to vector<8x128xf32>
    %535 = arith.addf %533, %534 : vector<8x128xf32>
    %536 = vector.extract_strided_slice %519 {offsets = [0, 256], sizes = [8, 128], strides = [1, 1]} : vector<8x512xf32> to vector<8x128xf32>
    %537 = math.tanh %536 : vector<8x128xf32>
    %538 = vector.extract_strided_slice %519 {offsets = [0, 384], sizes = [8, 128], strides = [1, 1]} : vector<8x512xf32> to vector<8x128xf32>
    %cst_300 = arith.constant 5.000000e-01 : f32
    %539 = vector.broadcast %cst_300 : f32 to vector<8x128xf32>
    %540 = arith.mulf %539, %538 : vector<8x128xf32>
    %541 = math.tanh %540 : vector<8x128xf32>
    %cst_301 = arith.constant 5.000000e-01 : f32
    %542 = vector.broadcast %cst_301 : f32 to vector<8x128xf32>
    %543 = arith.mulf %542, %541 : vector<8x128xf32>
    %cst_302 = arith.constant 5.000000e-01 : f32
    %544 = vector.broadcast %cst_302 : f32 to vector<8x128xf32>
    %545 = arith.addf %543, %544 : vector<8x128xf32>
    %c0_303 = arith.constant 0 : index
    %c0_304 = arith.constant 0 : index
    %546 = vector.load %arg8[%c0_303, %c0_304] : memref<8x128xf32, #tpu.memory_space<vmem>>, vector<8x128xf32>
    %547 = arith.mulf %535, %546 : vector<8x128xf32>
    %548 = arith.mulf %527, %537 : vector<8x128xf32>
    %549 = arith.addf %547, %548 : vector<8x128xf32>
    %550 = math.tanh %549 : vector<8x128xf32>
    %551 = arith.mulf %545, %550 : vector<8x128xf32>
    %c0_305 = arith.constant 0 : index
    %c0_306 = arith.constant 0 : index
    %552 = vector.load %arg8[%c0_305, %c0_306] : memref<8x128xf32, #tpu.memory_space<vmem>>, vector<8x128xf32>
    tpu.vector_store %arg8[%c0_305, %c0_306], %549 {strides = array<i32>} : memref<8x128xf32, #tpu.memory_space<vmem>>, vector<8x128xf32>,
    %c0_307 = arith.constant 0 : index
    %c0_308 = arith.constant 0 : index
    %553 = vector.load %arg7[%c0_307, %c0_308] : memref<8x128xf32, #tpu.memory_space<vmem>>, vector<8x128xf32>
    tpu.vector_store %arg7[%c0_307, %c0_308], %551 {strides = array<i32>} : memref<8x128xf32, #tpu.memory_space<vmem>>, vector<8x128xf32>,
    %c12 = arith.constant 12 : index
    %c0_309 = arith.constant 0 : index
    %c0_310 = arith.constant 0 : index
    %554 = vector.load %arg5[%c12, %c0_309, %c0_310] : memref<16x8x128xf32, #tpu.memory_space<vmem>>, vector<1x8x128xf32>
    %555 = vector.shape_cast %554 : vector<1x8x128xf32> to vector<8x128xf32>
    %556 = vector.shape_cast %551 : vector<8x128xf32> to vector<1x8x128xf32>
    tpu.vector_store %arg5[%c12, %c0_309, %c0_310], %556 {strides = array<i32>} : memref<16x8x128xf32, #tpu.memory_space<vmem>>, vector<1x8x128xf32>,
    %c104 = arith.constant 104 : index
    %c0_311 = arith.constant 0 : index
    %557 = vector.load %arg6[%c104, %c0_311] : memref<128x512xf32, #tpu.memory_space<vmem>>, vector<8x512xf32>
    %c0_312 = arith.constant 0 : index
    %c0_313 = arith.constant 0 : index
    %558 = vector.load %arg7[%c0_312, %c0_313] : memref<8x128xf32, #tpu.memory_space<vmem>>, vector<8x128xf32>
    %c0_314 = arith.constant 0 : index
    %c0_315 = arith.constant 0 : index
    %559 = vector.load %arg4[%c0_314, %c0_315] : memref<128x512xf32, #tpu.memory_space<vmem>>, vector<128x512xf32>
    %cst_316 = arith.constant dense<0.000000e+00> : vector<8x512xf32>
    %560 = tpu.matmul %558, %559, %cst_316 {dimension_numbers = #tpu.dot_dimension_numbers<[1], [0], [0], [1], [0, 0, 1, 1], [], []>} : vector<8x128xf32>, vector<128x512xf32>, vector<8x512xf32> -> vector<8x512xf32>
    %561 = arith.addf %557, %560 : vector<8x512xf32>
    %562 = vector.extract_strided_slice %561 {offsets = [0, 0], sizes = [8, 128], strides = [1, 1]} : vector<8x512xf32> to vector<8x128xf32>
    %cst_317 = arith.constant 5.000000e-01 : f32
    %563 = vector.broadcast %cst_317 : f32 to vector<8x128xf32>
    %564 = arith.mulf %563, %562 : vector<8x128xf32>
    %565 = math.tanh %564 : vector<8x128xf32>
    %cst_318 = arith.constant 5.000000e-01 : f32
    %566 = vector.broadcast %cst_318 : f32 to vector<8x128xf32>
    %567 = arith.mulf %566, %565 : vector<8x128xf32>
    %cst_319 = arith.constant 5.000000e-01 : f32
    %568 = vector.broadcast %cst_319 : f32 to vector<8x128xf32>
    %569 = arith.addf %567, %568 : vector<8x128xf32>
    %570 = vector.extract_strided_slice %561 {offsets = [0, 128], sizes = [8, 128], strides = [1, 1]} : vector<8x512xf32> to vector<8x128xf32>
    %cst_320 = arith.constant 5.000000e-01 : f32
    %571 = vector.broadcast %cst_320 : f32 to vector<8x128xf32>
    %572 = arith.mulf %571, %570 : vector<8x128xf32>
    %573 = math.tanh %572 : vector<8x128xf32>
    %cst_321 = arith.constant 5.000000e-01 : f32
    %574 = vector.broadcast %cst_321 : f32 to vector<8x128xf32>
    %575 = arith.mulf %574, %573 : vector<8x128xf32>
    %cst_322 = arith.constant 5.000000e-01 : f32
    %576 = vector.broadcast %cst_322 : f32 to vector<8x128xf32>
    %577 = arith.addf %575, %576 : vector<8x128xf32>
    %578 = vector.extract_strided_slice %561 {offsets = [0, 256], sizes = [8, 128], strides = [1, 1]} : vector<8x512xf32> to vector<8x128xf32>
    %579 = math.tanh %578 : vector<8x128xf32>
    %580 = vector.extract_strided_slice %561 {offsets = [0, 384], sizes = [8, 128], strides = [1, 1]} : vector<8x512xf32> to vector<8x128xf32>
    %cst_323 = arith.constant 5.000000e-01 : f32
    %581 = vector.broadcast %cst_323 : f32 to vector<8x128xf32>
    %582 = arith.mulf %581, %580 : vector<8x128xf32>
    %583 = math.tanh %582 : vector<8x128xf32>
    %cst_324 = arith.constant 5.000000e-01 : f32
    %584 = vector.broadcast %cst_324 : f32 to vector<8x128xf32>
    %585 = arith.mulf %584, %583 : vector<8x128xf32>
    %cst_325 = arith.constant 5.000000e-01 : f32
    %586 = vector.broadcast %cst_325 : f32 to vector<8x128xf32>
    %587 = arith.addf %585, %586 : vector<8x128xf32>
    %c0_326 = arith.constant 0 : index
    %c0_327 = arith.constant 0 : index
    %588 = vector.load %arg8[%c0_326, %c0_327] : memref<8x128xf32, #tpu.memory_space<vmem>>, vector<8x128xf32>
    %589 = arith.mulf %577, %588 : vector<8x128xf32>
    %590 = arith.mulf %569, %579 : vector<8x128xf32>
    %591 = arith.addf %589, %590 : vector<8x128xf32>
    %592 = math.tanh %591 : vector<8x128xf32>
    %593 = arith.mulf %587, %592 : vector<8x128xf32>
    %c0_328 = arith.constant 0 : index
    %c0_329 = arith.constant 0 : index
    %594 = vector.load %arg8[%c0_328, %c0_329] : memref<8x128xf32, #tpu.memory_space<vmem>>, vector<8x128xf32>
    tpu.vector_store %arg8[%c0_328, %c0_329], %591 {strides = array<i32>} : memref<8x128xf32, #tpu.memory_space<vmem>>, vector<8x128xf32>,
    %c0_330 = arith.constant 0 : index
    %c0_331 = arith.constant 0 : index
    %595 = vector.load %arg7[%c0_330, %c0_331] : memref<8x128xf32, #tpu.memory_space<vmem>>, vector<8x128xf32>
    tpu.vector_store %arg7[%c0_330, %c0_331], %593 {strides = array<i32>} : memref<8x128xf32, #tpu.memory_space<vmem>>, vector<8x128xf32>,
    %c13 = arith.constant 13 : index
    %c0_332 = arith.constant 0 : index
    %c0_333 = arith.constant 0 : index
    %596 = vector.load %arg5[%c13, %c0_332, %c0_333] : memref<16x8x128xf32, #tpu.memory_space<vmem>>, vector<1x8x128xf32>
    %597 = vector.shape_cast %596 : vector<1x8x128xf32> to vector<8x128xf32>
    %598 = vector.shape_cast %593 : vector<8x128xf32> to vector<1x8x128xf32>
    tpu.vector_store %arg5[%c13, %c0_332, %c0_333], %598 {strides = array<i32>} : memref<16x8x128xf32, #tpu.memory_space<vmem>>, vector<1x8x128xf32>,
    %c112 = arith.constant 112 : index
    %c0_334 = arith.constant 0 : index
    %599 = vector.load %arg6[%c112, %c0_334] : memref<128x512xf32, #tpu.memory_space<vmem>>, vector<8x512xf32>
    %c0_335 = arith.constant 0 : index
    %c0_336 = arith.constant 0 : index
    %600 = vector.load %arg7[%c0_335, %c0_336] : memref<8x128xf32, #tpu.memory_space<vmem>>, vector<8x128xf32>
    %c0_337 = arith.constant 0 : index
    %c0_338 = arith.constant 0 : index
    %601 = vector.load %arg4[%c0_337, %c0_338] : memref<128x512xf32, #tpu.memory_space<vmem>>, vector<128x512xf32>
    %cst_339 = arith.constant dense<0.000000e+00> : vector<8x512xf32>
    %602 = tpu.matmul %600, %601, %cst_339 {dimension_numbers = #tpu.dot_dimension_numbers<[1], [0], [0], [1], [0, 0, 1, 1], [], []>} : vector<8x128xf32>, vector<128x512xf32>, vector<8x512xf32> -> vector<8x512xf32>
    %603 = arith.addf %599, %602 : vector<8x512xf32>
    %604 = vector.extract_strided_slice %603 {offsets = [0, 0], sizes = [8, 128], strides = [1, 1]} : vector<8x512xf32> to vector<8x128xf32>
    %cst_340 = arith.constant 5.000000e-01 : f32
    %605 = vector.broadcast %cst_340 : f32 to vector<8x128xf32>
    %606 = arith.mulf %605, %604 : vector<8x128xf32>
    %607 = math.tanh %606 : vector<8x128xf32>
    %cst_341 = arith.constant 5.000000e-01 : f32
    %608 = vector.broadcast %cst_341 : f32 to vector<8x128xf32>
    %609 = arith.mulf %608, %607 : vector<8x128xf32>
    %cst_342 = arith.constant 5.000000e-01 : f32
    %610 = vector.broadcast %cst_342 : f32 to vector<8x128xf32>
    %611 = arith.addf %609, %610 : vector<8x128xf32>
    %612 = vector.extract_strided_slice %603 {offsets = [0, 128], sizes = [8, 128], strides = [1, 1]} : vector<8x512xf32> to vector<8x128xf32>
    %cst_343 = arith.constant 5.000000e-01 : f32
    %613 = vector.broadcast %cst_343 : f32 to vector<8x128xf32>
    %614 = arith.mulf %613, %612 : vector<8x128xf32>
    %615 = math.tanh %614 : vector<8x128xf32>
    %cst_344 = arith.constant 5.000000e-01 : f32
    %616 = vector.broadcast %cst_344 : f32 to vector<8x128xf32>
    %617 = arith.mulf %616, %615 : vector<8x128xf32>
    %cst_345 = arith.constant 5.000000e-01 : f32
    %618 = vector.broadcast %cst_345 : f32 to vector<8x128xf32>
    %619 = arith.addf %617, %618 : vector<8x128xf32>
    %620 = vector.extract_strided_slice %603 {offsets = [0, 256], sizes = [8, 128], strides = [1, 1]} : vector<8x512xf32> to vector<8x128xf32>
    %621 = math.tanh %620 : vector<8x128xf32>
    %622 = vector.extract_strided_slice %603 {offsets = [0, 384], sizes = [8, 128], strides = [1, 1]} : vector<8x512xf32> to vector<8x128xf32>
    %cst_346 = arith.constant 5.000000e-01 : f32
    %623 = vector.broadcast %cst_346 : f32 to vector<8x128xf32>
    %624 = arith.mulf %623, %622 : vector<8x128xf32>
    %625 = math.tanh %624 : vector<8x128xf32>
    %cst_347 = arith.constant 5.000000e-01 : f32
    %626 = vector.broadcast %cst_347 : f32 to vector<8x128xf32>
    %627 = arith.mulf %626, %625 : vector<8x128xf32>
    %cst_348 = arith.constant 5.000000e-01 : f32
    %628 = vector.broadcast %cst_348 : f32 to vector<8x128xf32>
    %629 = arith.addf %627, %628 : vector<8x128xf32>
    %c0_349 = arith.constant 0 : index
    %c0_350 = arith.constant 0 : index
    %630 = vector.load %arg8[%c0_349, %c0_350] : memref<8x128xf32, #tpu.memory_space<vmem>>, vector<8x128xf32>
    %631 = arith.mulf %619, %630 : vector<8x128xf32>
    %632 = arith.mulf %611, %621 : vector<8x128xf32>
    %633 = arith.addf %631, %632 : vector<8x128xf32>
    %634 = math.tanh %633 : vector<8x128xf32>
    %635 = arith.mulf %629, %634 : vector<8x128xf32>
    %c0_351 = arith.constant 0 : index
    %c0_352 = arith.constant 0 : index
    %636 = vector.load %arg8[%c0_351, %c0_352] : memref<8x128xf32, #tpu.memory_space<vmem>>, vector<8x128xf32>
    tpu.vector_store %arg8[%c0_351, %c0_352], %633 {strides = array<i32>} : memref<8x128xf32, #tpu.memory_space<vmem>>, vector<8x128xf32>,
    %c0_353 = arith.constant 0 : index
    %c0_354 = arith.constant 0 : index
    %637 = vector.load %arg7[%c0_353, %c0_354] : memref<8x128xf32, #tpu.memory_space<vmem>>, vector<8x128xf32>
    tpu.vector_store %arg7[%c0_353, %c0_354], %635 {strides = array<i32>} : memref<8x128xf32, #tpu.memory_space<vmem>>, vector<8x128xf32>,
    %c14 = arith.constant 14 : index
    %c0_355 = arith.constant 0 : index
    %c0_356 = arith.constant 0 : index
    %638 = vector.load %arg5[%c14, %c0_355, %c0_356] : memref<16x8x128xf32, #tpu.memory_space<vmem>>, vector<1x8x128xf32>
    %639 = vector.shape_cast %638 : vector<1x8x128xf32> to vector<8x128xf32>
    %640 = vector.shape_cast %635 : vector<8x128xf32> to vector<1x8x128xf32>
    tpu.vector_store %arg5[%c14, %c0_355, %c0_356], %640 {strides = array<i32>} : memref<16x8x128xf32, #tpu.memory_space<vmem>>, vector<1x8x128xf32>,
    %c120 = arith.constant 120 : index
    %c0_357 = arith.constant 0 : index
    %641 = vector.load %arg6[%c120, %c0_357] : memref<128x512xf32, #tpu.memory_space<vmem>>, vector<8x512xf32>
    %c0_358 = arith.constant 0 : index
    %c0_359 = arith.constant 0 : index
    %642 = vector.load %arg7[%c0_358, %c0_359] : memref<8x128xf32, #tpu.memory_space<vmem>>, vector<8x128xf32>
    %c0_360 = arith.constant 0 : index
    %c0_361 = arith.constant 0 : index
    %643 = vector.load %arg4[%c0_360, %c0_361] : memref<128x512xf32, #tpu.memory_space<vmem>>, vector<128x512xf32>
    %cst_362 = arith.constant dense<0.000000e+00> : vector<8x512xf32>
    %644 = tpu.matmul %642, %643, %cst_362 {dimension_numbers = #tpu.dot_dimension_numbers<[1], [0], [0], [1], [0, 0, 1, 1], [], []>} : vector<8x128xf32>, vector<128x512xf32>, vector<8x512xf32> -> vector<8x512xf32>
    %645 = arith.addf %641, %644 : vector<8x512xf32>
    %646 = vector.extract_strided_slice %645 {offsets = [0, 0], sizes = [8, 128], strides = [1, 1]} : vector<8x512xf32> to vector<8x128xf32>
    %cst_363 = arith.constant 5.000000e-01 : f32
    %647 = vector.broadcast %cst_363 : f32 to vector<8x128xf32>
    %648 = arith.mulf %647, %646 : vector<8x128xf32>
    %649 = math.tanh %648 : vector<8x128xf32>
    %cst_364 = arith.constant 5.000000e-01 : f32
    %650 = vector.broadcast %cst_364 : f32 to vector<8x128xf32>
    %651 = arith.mulf %650, %649 : vector<8x128xf32>
    %cst_365 = arith.constant 5.000000e-01 : f32
    %652 = vector.broadcast %cst_365 : f32 to vector<8x128xf32>
    %653 = arith.addf %651, %652 : vector<8x128xf32>
    %654 = vector.extract_strided_slice %645 {offsets = [0, 128], sizes = [8, 128], strides = [1, 1]} : vector<8x512xf32> to vector<8x128xf32>
    %cst_366 = arith.constant 5.000000e-01 : f32
    %655 = vector.broadcast %cst_366 : f32 to vector<8x128xf32>
    %656 = arith.mulf %655, %654 : vector<8x128xf32>
    %657 = math.tanh %656 : vector<8x128xf32>
    %cst_367 = arith.constant 5.000000e-01 : f32
    %658 = vector.broadcast %cst_367 : f32 to vector<8x128xf32>
    %659 = arith.mulf %658, %657 : vector<8x128xf32>
    %cst_368 = arith.constant 5.000000e-01 : f32
    %660 = vector.broadcast %cst_368 : f32 to vector<8x128xf32>
    %661 = arith.addf %659, %660 : vector<8x128xf32>
    %662 = vector.extract_strided_slice %645 {offsets = [0, 256], sizes = [8, 128], strides = [1, 1]} : vector<8x512xf32> to vector<8x128xf32>
    %663 = math.tanh %662 : vector<8x128xf32>
    %664 = vector.extract_strided_slice %645 {offsets = [0, 384], sizes = [8, 128], strides = [1, 1]} : vector<8x512xf32> to vector<8x128xf32>
    %cst_369 = arith.constant 5.000000e-01 : f32
    %665 = vector.broadcast %cst_369 : f32 to vector<8x128xf32>
    %666 = arith.mulf %665, %664 : vector<8x128xf32>
    %667 = math.tanh %666 : vector<8x128xf32>
    %cst_370 = arith.constant 5.000000e-01 : f32
    %668 = vector.broadcast %cst_370 : f32 to vector<8x128xf32>
    %669 = arith.mulf %668, %667 : vector<8x128xf32>
    %cst_371 = arith.constant 5.000000e-01 : f32
    %670 = vector.broadcast %cst_371 : f32 to vector<8x128xf32>
    %671 = arith.addf %669, %670 : vector<8x128xf32>
    %c0_372 = arith.constant 0 : index
    %c0_373 = arith.constant 0 : index
    %672 = vector.load %arg8[%c0_372, %c0_373] : memref<8x128xf32, #tpu.memory_space<vmem>>, vector<8x128xf32>
    %673 = arith.mulf %661, %672 : vector<8x128xf32>
    %674 = arith.mulf %653, %663 : vector<8x128xf32>
    %675 = arith.addf %673, %674 : vector<8x128xf32>
    %676 = math.tanh %675 : vector<8x128xf32>
    %677 = arith.mulf %671, %676 : vector<8x128xf32>
    %c0_374 = arith.constant 0 : index
    %c0_375 = arith.constant 0 : index
    %678 = vector.load %arg8[%c0_374, %c0_375] : memref<8x128xf32, #tpu.memory_space<vmem>>, vector<8x128xf32>
    tpu.vector_store %arg8[%c0_374, %c0_375], %675 {strides = array<i32>} : memref<8x128xf32, #tpu.memory_space<vmem>>, vector<8x128xf32>,
    %c0_376 = arith.constant 0 : index
    %c0_377 = arith.constant 0 : index
    %679 = vector.load %arg7[%c0_376, %c0_377] : memref<8x128xf32, #tpu.memory_space<vmem>>, vector<8x128xf32>
    tpu.vector_store %arg7[%c0_376, %c0_377], %677 {strides = array<i32>} : memref<8x128xf32, #tpu.memory_space<vmem>>, vector<8x128xf32>,
    %c15 = arith.constant 15 : index
    %c0_378 = arith.constant 0 : index
    %c0_379 = arith.constant 0 : index
    %680 = vector.load %arg5[%c15, %c0_378, %c0_379] : memref<16x8x128xf32, #tpu.memory_space<vmem>>, vector<1x8x128xf32>
    %681 = vector.shape_cast %680 : vector<1x8x128xf32> to vector<8x128xf32>
    %682 = vector.shape_cast %677 : vector<8x128xf32> to vector<1x8x128xf32>
    tpu.vector_store %arg5[%c15, %c0_378, %c0_379], %682 {strides = array<i32>} : memref<16x8x128xf32, #tpu.memory_space<vmem>>, vector<1x8x128xf32>,
    return
  }
  func.func @transform_0(%arg0: i32) -> (i32, i32, i32) {
    %c0_i32 = arith.constant 0 : i32
    %c0_i32_0 = arith.constant 0 : i32
    %c0_i32_1 = arith.constant 0 : i32
    return %arg0, %c0_i32, %c0_i32_0 : i32, i32, i32
  }
  func.func @transform_1(%arg0: i32) -> (i32, i32) {
    %c0_i32 = arith.constant 0 : i32
    %c0_i32_0 = arith.constant 0 : i32
    %c0_i32_1 = arith.constant 0 : i32
    return %c0_i32, %c0_i32_0 : i32, i32
  }
  func.func @transform_2(%arg0: i32) -> (i32, i32) {
    %c0_i32 = arith.constant 0 : i32
    %c0_i32_0 = arith.constant 0 : i32
    %c0_i32_1 = arith.constant 0 : i32
    return %c0_i32, %c0_i32_0 : i32, i32
  }
  func.func @transform_3(%arg0: i32) -> (i32, i32) {
    %c0_i32 = arith.constant 0 : i32
    %c0_i32_0 = arith.constant 0 : i32
    %c0_i32_1 = arith.constant 0 : i32
    return %c0_i32, %c0_i32_0 : i32, i32
  }
  func.func @transform_4(%arg0: i32) -> (i32, i32, i32) {
    %c0_i32 = arith.constant 0 : i32
    %c0_i32_0 = arith.constant 0 : i32
    %c0_i32_1 = arith.constant 0 : i32
    return %arg0, %c0_i32, %c0_i32_0 : i32, i32, i32
  }
}

</mosaic_0001>

<llo_original>
// kernel: tpu_custom_call.1
$region0: #{tpu_custom_call.1}
  #allocation0 [shape = 'u32[]', space=smem, size = 0x4, offset = 0x4, fixed_abs, tag = 'smem constant byte address 0x4 - core index']
  #allocation1 [shape = 'u32[72,128]{1,0:T(1,128)}', space=vmem, size = 0x9000, scoped, tag = 'internal scratch']
  #allocation2 [shape = 'f32[128,512]{1,0:T(8,128)}', space=vmem, size = 0x40000, scoped, tag = 'scratch operand']
  #allocation3 [shape = 'f32[8,128]{1,0:T(8,128)}', space=vmem, size = 0x1000, scoped, tag = 'scratch operand']
  #allocation4 [shape = 'f32[8,128]{1,0:T(8,128)}', space=vmem, size = 0x1000, scoped, tag = 'scratch operand']
  %s0 = inlined_call_operand.hbm [shape: f32[16,8,128], index: 0, kind: input, shape index: {}]
  %s1 = inlined_call_operand.hbm [shape: f32[128,512], index: 1, kind: input, shape index: {}]
  %s2 = inlined_call_operand.hbm [shape: f32[1,512], index: 2, kind: input, shape index: {}]
  %s3 = inlined_call_operand.hbm [shape: f32[128,512], index: 3, kind: input, shape index: {}]
  %s4 = inlined_call_operand.hbm [shape: f32[16,8,128], index: 4, kind: output, shape index: {}]
  %s5 = sld [smem:[#allocation0]]
  $region46: #{tpu_custom_call.1} parent=0
    _
  %s7 = ssub.s32 1, %s5
  %s8 = scalar_select 0, %s7, %s5
  $region1: #{tpu_custom_call.1} parent=0
    #allocation5 [shape = 'u8[65536]{0}', space=vmem, size = 0x10000, scoped, tag = 'input window, operand 0, single buffered']
    #allocation6 [shape = 's32[1]{0}', space=sflag, size = 0x4, scoped, tag = 'scoped memory for tpu_custom_call.1']
    #allocation7 [shape = 's32[1]{0}', space=sflag, size = 0x4, scoped, tag = 'scoped memory for tpu_custom_call.1']
    #allocation8 [shape = 'u8[262144]{0}', space=vmem, size = 0x40000, scoped, tag = 'input window, operand 1, single buffered']
    #allocation9 [shape = 's32[1]{0}', space=sflag, size = 0x4, scoped, tag = 'scoped memory for tpu_custom_call.1']
    #allocation10 [shape = 'u8[2048]{0}', space=vmem, size = 0x800, scoped, tag = 'input window, operand 2, single buffered']
    #allocation11 [shape = 'u8[262144]{0}', space=vmem, size = 0x40000, scoped, tag = 'input window, operand 3, single buffered']
    #allocation12 [shape = 's32[1]{0}', space=sflag, size = 0x4, scoped, tag = 'scoped memory for tpu_custom_call.1']
    #allocation13 [shape = 'u8[65536]{0}', space=vmem, size = 0x10000, scoped, tag = 'output window, operand 0, single buffered']
    %9 = vsyncpa [#allocation6], 0
    %10 = vsyncpa [#allocation9], 0
    %11 = vsyncpa [#allocation12], 0
    %12 = vsyncpa [#allocation7], 0
    // Predicated region
    $region2: #{tpu_custom_call.1} parent=1 // pred_check
      _
    $region3: #{tpu_custom_call.1} parent=1 // pred_check_branch
      %14 = sbr.rel (0) target = $region5
    $region4: #{tpu_custom_call.1} parent=1 // pred_region
      %16 = vsyncadd [#allocation6], 0
      %s17 = sshll.u32 %s0, 4
      %s18 = int_to_ptr.hbm [resolvable:$true] %s17
      %s19 = sshll.u32 [#allocation5], 4
      %s20 = int_to_ptr.vmem [resolvable:$true] %s19
      %25 = dma.hbm_to_vmem [thread:$0]  %s18, 2048, %s20, [#allocation6], 128, 128, 8
    $region5: #{tpu_custom_call.1} parent=1 // pred_fallthru
      _
    // Predicated region
    $region6: #{tpu_custom_call.1} parent=1 // pred_check
      _
    $region7: #{tpu_custom_call.1} parent=1 // pred_check_branch
      %27 = sbr.rel (0) target = $region9
    $region8: #{tpu_custom_call.1} parent=1 // pred_region
      %29 = vsyncadd [#allocation9], 0
      %s30 = sshll.u32 %s1, 4
      %s31 = int_to_ptr.hbm [resolvable:$true] %s30
      %s32 = sshll.u32 [#allocation8], 4
      %s33 = int_to_ptr.vmem [resolvable:$true] %s32
      %38 = dma.hbm_to_vmem [thread:$0]  %s31, 8192, %s33, [#allocation9], 512, 512, 32
    $region9: #{tpu_custom_call.1} parent=1 // pred_fallthru
      _
    // Predicated region
    $region10: #{tpu_custom_call.1} parent=1 // pred_check
      _
    $region11: #{tpu_custom_call.1} parent=1 // pred_check_branch
      %40 = sbr.rel (0) target = $region13
    $region12: #{tpu_custom_call.1} parent=1 // pred_region
      %42 = vsyncadd [#allocation9], 0
      %s44 = sshll.u32 %s2, 4
      %s45 = int_to_ptr.hbm [resolvable:$true] %s44
      %s46 = sshll.u32 [#allocation10], 4
      %s47 = int_to_ptr.vmem [resolvable:$true] %s46
      %49 = dma.hbm_to_vmem [thread:$0]  %s45, 64, %s47, [#allocation9]
    $region13: #{tpu_custom_call.1} parent=1 // pred_fallthru
      _
    // Predicated region
    $region14: #{tpu_custom_call.1} parent=1 // pred_check
      _
    $region15: #{tpu_custom_call.1} parent=1 // pred_check_branch
      %51 = sbr.rel (0) target = $region17
    $region16: #{tpu_custom_call.1} parent=1 // pred_region
      %53 = vsyncadd [#allocation12], 0
      %s54 = sshll.u32 %s3, 4
      %s55 = int_to_ptr.hbm [resolvable:$true] %s54
      %s56 = sshll.u32 [#allocation11], 4
      %s57 = int_to_ptr.vmem [resolvable:$true] %s56
      %62 = dma.hbm_to_vmem [thread:$0]  %s55, 8192, %s57, [#allocation12], 512, 512, 32
    $region17: #{tpu_custom_call.1} parent=1 // pred_fallthru
      _
    // Predicated region
    $region18: #{tpu_custom_call.1} parent=1 // pred_check
      _
    $region19: #{tpu_custom_call.1} parent=1 // pred_check_branch
      %64 = sbr.rel (0) target = $region21
    $region20: #{tpu_custom_call.1} parent=1 // pred_region
      %66 = dma.done [#allocation6], 2048
    $region21: #{tpu_custom_call.1} parent=1 // pred_fallthru
      _
    // Predicated region
    $region22: #{tpu_custom_call.1} parent=1 // pred_check
      _
    $region23: #{tpu_custom_call.1} parent=1 // pred_check_branch
      %68 = sbr.rel (0) target = $region25
    $region24: #{tpu_custom_call.1} parent=1 // pred_region
      %70 = dma.done [#allocation9], 8192
    $region25: #{tpu_custom_call.1} parent=1 // pred_fallthru
      _
    // Predicated region
    $region26: #{tpu_custom_call.1} parent=1 // pred_check
      _
    $region27: #{tpu_custom_call.1} parent=1 // pred_check_branch
      %72 = sbr.rel (0) target = $region29
    $region28: #{tpu_custom_call.1} parent=1 // pred_region
      %74 = dma.done [#allocation9], 64
    $region29: #{tpu_custom_call.1} parent=1 // pred_fallthru
      _
    // Predicated region
    $region30: #{tpu_custom_call.1} parent=1 // pred_check
      _
    $region31: #{tpu_custom_call.1} parent=1 // pred_check_branch
      %76 = sbr.rel (0) target = $region33
    $region32: #{tpu_custom_call.1} parent=1 // pred_region
      %78 = dma.done [#allocation12], 8192
    $region33: #{tpu_custom_call.1} parent=1 // pred_fallthru
      _
    %p79 = scmp.eq.s32.totalorder 0, 0
    // Predicated region
    $region34: #{tpu_custom_call.1} parent=1 // pred_check
      %p80 = pneg %p79
    $region35: #{tpu_custom_call.1} parent=1 // pred_check_branch
      %82 = sbr.rel (%p80) target = $region37
    $region36: #{tpu_custom_call.1} parent=1 // pred_region
      %83 = vst [vmem:[#allocation3] sm:$0xff] 0.0
      %84 = vst [vmem:[#allocation4] sm:$0xff] 0.0
    $region37: #{tpu_custom_call.1} parent=1 // pred_fallthru
      _
    %v85 = vld [vmem:[#allocation5] sm:$0xff]
    %v86 = vld [vmem:[#allocation5 + $0x8] sm:$0xff]
    %v87 = vld [vmem:[#allocation5 + $0x10] sm:$0xff]
    %v88 = vld [vmem:[#allocation5 + $0x18] sm:$0xff]
    %v89 = vld [vmem:[#allocation5 + $0x20] sm:$0xff]
    %v90 = vld [vmem:[#allocation5 + $0x28] sm:$0xff]
    %v91 = vld [vmem:[#allocation5 + $0x30] sm:$0xff]
    %v92 = vld [vmem:[#allocation5 + $0x38] sm:$0xff]
    %v93 = vld [vmem:[#allocation5 + $0x40] sm:$0xff]
    %v94 = vld [vmem:[#allocation5 + $0x48] sm:$0xff]
    %v95 = vld [vmem:[#allocation5 + $0x50] sm:$0xff]
    %v96 = vld [vmem:[#allocation5 + $0x58] sm:$0xff]
    %v97 = vld [vmem:[#allocation5 + $0x60] sm:$0xff]
    %v98 = vld [vmem:[#allocation5 + $0x68] sm:$0xff]
    %v99 = vld [vmem:[#allocation5 + $0x70] sm:$0xff]
    %v100 = vld [vmem:[#allocation5 + $0x78] sm:$0xff]
    %v101 = vld [vmem:[#allocation8] sm:$0xff]
    %v102 = vld [vmem:[#allocation8 + $0x8] sm:$0xff]
    %v103 = vld [vmem:[#allocation8 + $0x10] sm:$0xff]
    %v104 = vld [vmem:[#allocation8 + $0x18] sm:$0xff]
    %v105 = vld [vmem:[#allocation8 + $0x20] sm:$0xff]
    %v106 = vld [vmem:[#allocation8 + $0x28] sm:$0xff]
    %v107 = vld [vmem:[#allocation8 + $0x30] sm:$0xff]
    %v108 = vld [vmem:[#allocation8 + $0x38] sm:$0xff]
    %v109 = vld [vmem:[#allocation8 + $0x40] sm:$0xff]
    %v110 = vld [vmem:[#allocation8 + $0x48] sm:$0xff]
    %v111 = vld [vmem:[#allocation8 + $0x50] sm:$0xff]
    %v112 = vld [vmem:[#allocation8 + $0x58] sm:$0xff]
    %v113 = vld [vmem:[#allocation8 + $0x60] sm:$0xff]
    %v114 = vld [vmem:[#allocation8 + $0x68] sm:$0xff]
    %v115 = vld [vmem:[#allocation8 + $0x70] sm:$0xff]
    %v116 = vld [vmem:[#allocation8 + $0x78] sm:$0xff]
    %v117 = vld [vmem:[#allocation8 + $0x80] sm:$0xff]
    %v118 = vld [vmem:[#allocation8 + $0x88] sm:$0xff]
    %v119 = vld [vmem:[#allocation8 + $0x90] sm:$0xff]
    %v120 = vld [vmem:[#allocation8 + $0x98] sm:$0xff]
    %v121 = vld [vmem:[#allocation8 + $0xa0] sm:$0xff]
    %v122 = vld [vmem:[#allocation8 + $0xa8] sm:$0xff]
    %v123 = vld [vmem:[#allocation8 + $0xb0] sm:$0xff]
    %v124 = vld [vmem:[#allocation8 + $0xb8] sm:$0xff]
    %v125 = vld [vmem:[#allocation8 + $0xc0] sm:$0xff]
    %v126 = vld [vmem:[#allocation8 + $0xc8] sm:$0xff]
    %v127 = vld [vmem:[#allocation8 + $0xd0] sm:$0xff]
    %v128 = vld [vmem:[#allocation8 + $0xd8] sm:$0xff]
    %v129 = vld [vmem:[#allocation8 + $0xe0] sm:$0xff]
    %v130 = vld [vmem:[#allocation8 + $0xe8] sm:$0xff]
    %v131 = vld [vmem:[#allocation8 + $0xf0] sm:$0xff]
    %v132 = vld [vmem:[#allocation8 + $0xf8] sm:$0xff]
    %v133 = vld [vmem:[#allocation8 + $0x100] sm:$0xff]
    %v134 = vld [vmem:[#allocation8 + $0x108] sm:$0xff]
    %v135 = vld [vmem:[#allocation8 + $0x110] sm:$0xff]
    %v136 = vld [vmem:[#allocation8 + $0x118] sm:$0xff]
    %v137 = vld [vmem:[#allocation8 + $0x120] sm:$0xff]
    %v138 = vld [vmem:[#allocation8 + $0x128] sm:$0xff]
    %v139 = vld [vmem:[#allocation8 + $0x130] sm:$0xff]
    %v140 = vld [vmem:[#allocation8 + $0x138] sm:$0xff]
    %v141 = vld [vmem:[#allocation8 + $0x140] sm:$0xff]
    %v142 = vld [vmem:[#allocation8 + $0x148] sm:$0xff]
    %v143 = vld [vmem:[#allocation8 + $0x150] sm:$0xff]
    %v144 = vld [vmem:[#allocation8 + $0x158] sm:$0xff]
    %v145 = vld [vmem:[#allocation8 + $0x160] sm:$0xff]
    %v146 = vld [vmem:[#allocation8 + $0x168] sm:$0xff]
    %v147 = vld [vmem:[#allocation8 + $0x170] sm:$0xff]
    %v148 = vld [vmem:[#allocation8 + $0x178] sm:$0xff]
    %v149 = vld [vmem:[#allocation8 + $0x180] sm:$0xff]
    %v150 = vld [vmem:[#allocation8 + $0x188] sm:$0xff]
    %v151 = vld [vmem:[#allocation8 + $0x190] sm:$0xff]
    %v152 = vld [vmem:[#allocation8 + $0x198] sm:$0xff]
    %v153 = vld [vmem:[#allocation8 + $0x1a0] sm:$0xff]
    %v154 = vld [vmem:[#allocation8 + $0x1a8] sm:$0xff]
    %v155 = vld [vmem:[#allocation8 + $0x1b0] sm:$0xff]
    %v156 = vld [vmem:[#allocation8 + $0x1b8] sm:$0xff]
    %v157 = vld [vmem:[#allocation8 + $0x1c0] sm:$0xff]
    %v158 = vld [vmem:[#allocation8 + $0x1c8] sm:$0xff]
    %v159 = vld [vmem:[#allocation8 + $0x1d0] sm:$0xff]
    %v160 = vld [vmem:[#allocation8 + $0x1d8] sm:$0xff]
    %v161 = vld [vmem:[#allocation8 + $0x1e0] sm:$0xff]
    %v162 = vld [vmem:[#allocation8 + $0x1e8] sm:$0xff]
    %v163 = vld [vmem:[#allocation8 + $0x1f0] sm:$0xff]
    %v164 = vld [vmem:[#allocation8 + $0x1f8] sm:$0xff]
    %v165 = vld [vmem:[#allocation10] sm:$0xf]
    %v167 = vperm.slane %v165, 0
    %v168 = vperm.slane %v165, 1
    %v169 = vperm.slane %v165, 2
    %v170 = vperm.slane %v165, 3
    %175 = vmatpush.msra.mxu0 %v161
    %176 = vmatpush.msra.mxu0 %v157
    %177 = vmatpush.msra.mxu0 %v153
    %178 = vmatpush.msra.mxu0 %v149
    %179 = vmatpush.msra.mxu0 %v145
    %180 = vmatpush.msra.mxu0 %v141
    %181 = vmatpush.msra.mxu0 %v137
    %182 = vmatpush.msra.mxu0 %v133
    %183 = vmatpush.msra.mxu0 %v129
    %184 = vmatpush.msra.mxu0 %v125
    %185 = vmatpush.msra.mxu0 %v121
    %186 = vmatpush.msra.mxu0 %v117
    %187 = vmatpush.msra.mxu0 %v113
    %188 = vmatpush.msra.mxu0 %v109
    %189 = vmatpush.msra.mxu0 %v105
    %190 = vmatpush.msra.mxu0 %v101
    %191 = vmatmul.f32.gmra.mxu0 %v85
    %v192 = vpop.f32.mrf.mxu0
    %v193 = vadd.f32 %v167, %v192
    %194 = vmatmul.f32.gmra.mxu0 %v86
    %v195 = vpop.f32.mrf.mxu0
    %v196 = vadd.f32 %v167, %v195
    %197 = vmatmul.f32.gmra.mxu0 %v87
    %v198 = vpop.f32.mrf.mxu0
    %v199 = vadd.f32 %v167, %v198
    %200 = vmatmul.f32.gmra.mxu0 %v88
    %v201 = vpop.f32.mrf.mxu0
    %v202 = vadd.f32 %v167, %v201
    %203 = vmatmul.f32.gmra.mxu0 %v89
    %v204 = vpop.f32.mrf.mxu0
    %v205 = vadd.f32 %v167, %v204
    %206 = vmatmul.f32.gmra.mxu0 %v90
    %v207 = vpop.f32.mrf.mxu0
    %v208 = vadd.f32 %v167, %v207
    %209 = vmatmul.f32.gmra.mxu0 %v91
    %v210 = vpop.f32.mrf.mxu0
    %v211 = vadd.f32 %v167, %v210
    %212 = vmatmul.f32.gmra.mxu0 %v92
    %v213 = vpop.f32.mrf.mxu0
    %v214 = vadd.f32 %v167, %v213
    %215 = vmatmul.f32.gmra.mxu0 %v93
    %v216 = vpop.f32.mrf.mxu0
    %v217 = vadd.f32 %v167, %v216
    %218 = vmatmul.f32.gmra.mxu0 %v94
    %v219 = vpop.f32.mrf.mxu0
    %v220 = vadd.f32 %v167, %v219
    %221 = vmatmul.f32.gmra.mxu0 %v95
    %v222 = vpop.f32.mrf.mxu0
    %v223 = vadd.f32 %v167, %v222
    %224 = vmatmul.f32.gmra.mxu0 %v96
    %v225 = vpop.f32.mrf.mxu0
    %v226 = vadd.f32 %v167, %v225
    %227 = vmatmul.f32.gmra.mxu0 %v97
    %v228 = vpop.f32.mrf.mxu0
    %v229 = vadd.f32 %v167, %v228
    %230 = vmatmul.f32.gmra.mxu0 %v98
    %v231 = vpop.f32.mrf.mxu0
    %v232 = vadd.f32 %v167, %v231
    %233 = vmatmul.f32.gmra.mxu0 %v99
    %v234 = vpop.f32.mrf.mxu0
    %v235 = vadd.f32 %v167, %v234
    %236 = vmatmul.f32.gmra.mxu0 %v100
    %v237 = vpop.f32.mrf.mxu0
    %v238 = vadd.f32 %v167, %v237
    %239 = vdwg.mxu0
    %240 = vmatpush.msra.mxu0 %v162
    %241 = vmatpush.msra.mxu0 %v158
    %242 = vmatpush.msra.mxu0 %v154
    %243 = vmatpush.msra.mxu0 %v150
    %244 = vmatpush.msra.mxu0 %v146
    %245 = vmatpush.msra.mxu0 %v142
    %246 = vmatpush.msra.mxu0 %v138
    %247 = vmatpush.msra.mxu0 %v134
    %248 = vmatpush.msra.mxu0 %v130
    %249 = vmatpush.msra.mxu0 %v126
    %250 = vmatpush.msra.mxu0 %v122
    %251 = vmatpush.msra.mxu0 %v118
    %252 = vmatpush.msra.mxu0 %v114
    %253 = vmatpush.msra.mxu0 %v110
    %254 = vmatpush.msra.mxu0 %v106
    %255 = vmatpush.msra.mxu0 %v102
    %256 = vmatmul.f32.gmra.mxu0 %v85
    %v257 = vpop.f32.mrf.mxu0
    %v258 = vadd.f32 %v168, %v257
    %259 = vmatmul.f32.gmra.mxu0 %v86
    %v260 = vpop.f32.mrf.mxu0
    %v261 = vadd.f32 %v168, %v260
    %262 = vmatmul.f32.gmra.mxu0 %v87
    %v263 = vpop.f32.mrf.mxu0
    %v264 = vadd.f32 %v168, %v263
    %265 = vmatmul.f32.gmra.mxu0 %v88
    %v266 = vpop.f32.mrf.mxu0
    %v267 = vadd.f32 %v168, %v266
    %268 = vmatmul.f32.gmra.mxu0 %v89
    %v269 = vpop.f32.mrf.mxu0
    %v270 = vadd.f32 %v168, %v269
    %271 = vmatmul.f32.gmra.mxu0 %v90
    %v272 = vpop.f32.mrf.mxu0
    %v273 = vadd.f32 %v168, %v272
    %274 = vmatmul.f32.gmra.mxu0 %v91
    %v275 = vpop.f32.mrf.mxu0
    %v276 = vadd.f32 %v168, %v275
    %277 = vmatmul.f32.gmra.mxu0 %v92
    %v278 = vpop.f32.mrf.mxu0
    %v279 = vadd.f32 %v168, %v278
    %280 = vmatmul.f32.gmra.mxu0 %v93
    %v281 = vpop.f32.mrf.mxu0
    %v282 = vadd.f32 %v168, %v281
    %283 = vmatmul.f32.gmra.mxu0 %v94
    %v284 = vpop.f32.mrf.mxu0
    %v285 = vadd.f32 %v168, %v284
    %286 = vmatmul.f32.gmra.mxu0 %v95
    %v287 = vpop.f32.mrf.mxu0
    %v288 = vadd.f32 %v168, %v287
    %289 = vmatmul.f32.gmra.mxu0 %v96
    %v290 = vpop.f32.mrf.mxu0
    %v291 = vadd.f32 %v168, %v290
    %292 = vmatmul.f32.gmra.mxu0 %v97
    %v293 = vpop.f32.mrf.mxu0
    %v294 = vadd.f32 %v168, %v293
    %295 = vmatmul.f32.gmra.mxu0 %v98
    %v296 = vpop.f32.mrf.mxu0
    %v297 = vadd.f32 %v168, %v296
    %298 = vmatmul.f32.gmra.mxu0 %v99
    %v299 = vpop.f32.mrf.mxu0
    %v300 = vadd.f32 %v168, %v299
    %301 = vmatmul.f32.gmra.mxu0 %v100
    %v302 = vpop.f32.mrf.mxu0
    %v303 = vadd.f32 %v168, %v302
    %304 = vdwg.mxu0
    %305 = vmatpush.msra.mxu0 %v163
    %306 = vmatpush.msra.mxu0 %v159
    %307 = vmatpush.msra.mxu0 %v155
    %308 = vmatpush.msra.mxu0 %v151
    %309 = vmatpush.msra.mxu0 %v147
    %310 = vmatpush.msra.mxu0 %v143
    %311 = vmatpush.msra.mxu0 %v139
    %312 = vmatpush.msra.mxu0 %v135
    %313 = vmatpush.msra.mxu0 %v131
    %314 = vmatpush.msra.mxu0 %v127
    %315 = vmatpush.msra.mxu0 %v123
    %316 = vmatpush.msra.mxu0 %v119
    %317 = vmatpush.msra.mxu0 %v115
    %318 = vmatpush.msra.mxu0 %v111
    %319 = vmatpush.msra.mxu0 %v107
    %320 = vmatpush.msra.mxu0 %v103
    %321 = vmatmul.f32.gmra.mxu0 %v85
    %v322 = vpop.f32.mrf.mxu0
    %v323 = vadd.f32 %v169, %v322
    %324 = vmatmul.f32.gmra.mxu0 %v86
    %v325 = vpop.f32.mrf.mxu0
    %v326 = vadd.f32 %v169, %v325
    %327 = vmatmul.f32.gmra.mxu0 %v87
    %v328 = vpop.f32.mrf.mxu0
    %v329 = vadd.f32 %v169, %v328
    %330 = vmatmul.f32.gmra.mxu0 %v88
    %v331 = vpop.f32.mrf.mxu0
    %v332 = vadd.f32 %v169, %v331
    %333 = vmatmul.f32.gmra.mxu0 %v89
    %v334 = vpop.f32.mrf.mxu0
    %v335 = vadd.f32 %v169, %v334
    %336 = vmatmul.f32.gmra.mxu0 %v90
    %v337 = vpop.f32.mrf.mxu0
    %v338 = vadd.f32 %v169, %v337
    %339 = vmatmul.f32.gmra.mxu0 %v91
    %v340 = vpop.f32.mrf.mxu0
    %v341 = vadd.f32 %v169, %v340
    %342 = vmatmul.f32.gmra.mxu0 %v92
    %v343 = vpop.f32.mrf.mxu0
    %v344 = vadd.f32 %v169, %v343
    %345 = vmatmul.f32.gmra.mxu0 %v93
    %v346 = vpop.f32.mrf.mxu0
    %v347 = vadd.f32 %v169, %v346
    %348 = vmatmul.f32.gmra.mxu0 %v94
    %v349 = vpop.f32.mrf.mxu0
    %v350 = vadd.f32 %v169, %v349
    %351 = vmatmul.f32.gmra.mxu0 %v95
    %v352 = vpop.f32.mrf.mxu0
    %v353 = vadd.f32 %v169, %v352
    %354 = vmatmul.f32.gmra.mxu0 %v96
    %v355 = vpop.f32.mrf.mxu0
    %v356 = vadd.f32 %v169, %v355
    %357 = vmatmul.f32.gmra.mxu0 %v97
    %v358 = vpop.f32.mrf.mxu0
    %v359 = vadd.f32 %v169, %v358
    %360 = vmatmul.f32.gmra.mxu0 %v98
    %v361 = vpop.f32.mrf.mxu0
    %v362 = vadd.f32 %v169, %v361
    %363 = vmatmul.f32.gmra.mxu0 %v99
    %v364 = vpop.f32.mrf.mxu0
    %v365 = vadd.f32 %v169, %v364
    %366 = vmatmul.f32.gmra.mxu0 %v100
    %v367 = vpop.f32.mrf.mxu0
    %v368 = vadd.f32 %v169, %v367
    %369 = vdwg.mxu0
    %370 = vmatpush.msra.mxu0 %v164
    %371 = vmatpush.msra.mxu0 %v160
    %372 = vmatpush.msra.mxu0 %v156
    %373 = vmatpush.msra.mxu0 %v152
    %374 = vmatpush.msra.mxu0 %v148
    %375 = vmatpush.msra.mxu0 %v144
    %376 = vmatpush.msra.mxu0 %v140
    %377 = vmatpush.msra.mxu0 %v136
    %378 = vmatpush.msra.mxu0 %v132
    %379 = vmatpush.msra.mxu0 %v128
    %380 = vmatpush.msra.mxu0 %v124
    %381 = vmatpush.msra.mxu0 %v120
    %382 = vmatpush.msra.mxu0 %v116
    %383 = vmatpush.msra.mxu0 %v112
    %384 = vmatpush.msra.mxu0 %v108
    %385 = vmatpush.msra.mxu0 %v104
    %386 = vmatmul.f32.gmra.mxu0 %v85
    %v387 = vpop.f32.mrf.mxu0
    %v388 = vadd.f32 %v170, %v387
    %389 = vmatmul.f32.gmra.mxu0 %v86
    %v390 = vpop.f32.mrf.mxu0
    %v391 = vadd.f32 %v170, %v390
    %392 = vmatmul.f32.gmra.mxu0 %v87
    %v393 = vpop.f32.mrf.mxu0
    %v394 = vadd.f32 %v170, %v393
    %395 = vmatmul.f32.gmra.mxu0 %v88
    %v396 = vpop.f32.mrf.mxu0
    %v397 = vadd.f32 %v170, %v396
    %398 = vmatmul.f32.gmra.mxu0 %v89
    %v399 = vpop.f32.mrf.mxu0
    %v400 = vadd.f32 %v170, %v399
    %401 = vmatmul.f32.gmra.mxu0 %v90
    %v402 = vpop.f32.mrf.mxu0
    %v403 = vadd.f32 %v170, %v402
    %404 = vmatmul.f32.gmra.mxu0 %v91
    %v405 = vpop.f32.mrf.mxu0
    %v406 = vadd.f32 %v170, %v405
    %407 = vmatmul.f32.gmra.mxu0 %v92
    %v408 = vpop.f32.mrf.mxu0
    %v409 = vadd.f32 %v170, %v408
    %410 = vmatmul.f32.gmra.mxu0 %v93
    %v411 = vpop.f32.mrf.mxu0
    %v412 = vadd.f32 %v170, %v411
    %413 = vmatmul.f32.gmra.mxu0 %v94
    %v414 = vpop.f32.mrf.mxu0
    %v415 = vadd.f32 %v170, %v414
    %416 = vmatmul.f32.gmra.mxu0 %v95
    %v417 = vpop.f32.mrf.mxu0
    %v418 = vadd.f32 %v170, %v417
    %419 = vmatmul.f32.gmra.mxu0 %v96
    %v420 = vpop.f32.mrf.mxu0
    %v421 = vadd.f32 %v170, %v420
    %422 = vmatmul.f32.gmra.mxu0 %v97
    %v423 = vpop.f32.mrf.mxu0
    %v424 = vadd.f32 %v170, %v423
    %425 = vmatmul.f32.gmra.mxu0 %v98
    %v426 = vpop.f32.mrf.mxu0
    %v427 = vadd.f32 %v170, %v426
    %428 = vmatmul.f32.gmra.mxu0 %v99
    %v429 = vpop.f32.mrf.mxu0
    %v430 = vadd.f32 %v170, %v429
    %431 = vmatmul.f32.gmra.mxu0 %v100
    %v432 = vpop.f32.mrf.mxu0
    %v433 = vadd.f32 %v170, %v432
    %434 = vdwg.mxu0
    %435 = vst [vmem:[#allocation2] sm:$0xff] %v193
    %436 = vst [vmem:[#allocation2 + $0x8] sm:$0xff] %v258
    %437 = vst [vmem:[#allocation2 + $0x10] sm:$0xff] %v323
    %438 = vst [vmem:[#allocation2 + $0x18] sm:$0xff] %v388
    %439 = vst [vmem:[#allocation2 + $0x20] sm:$0xff] %v196
    %440 = vst [vmem:[#allocation2 + $0x28] sm:$0xff] %v261
    %441 = vst [vmem:[#allocation2 + $0x30] sm:$0xff] %v326
    %442 = vst [vmem:[#allocation2 + $0x38] sm:$0xff] %v391
    %443 = vst [vmem:[#allocation2 + $0x40] sm:$0xff] %v199
    %444 = vst [vmem:[#allocation2 + $0x48] sm:$0xff] %v264
    %445 = vst [vmem:[#allocation2 + $0x50] sm:$0xff] %v329
    %446 = vst [vmem:[#allocation2 + $0x58] sm:$0xff] %v394
    %447 = vst [vmem:[#allocation2 + $0x60] sm:$0xff] %v202
    %448 = vst [vmem:[#allocation2 + $0x68] sm:$0xff] %v267
    %449 = vst [vmem:[#allocation2 + $0x70] sm:$0xff] %v332
    %450 = vst [vmem:[#allocation2 + $0x78] sm:$0xff] %v397
    %451 = vst [vmem:[#allocation2 + $0x80] sm:$0xff] %v205
    %452 = vst [vmem:[#allocation2 + $0x88] sm:$0xff] %v270
    %453 = vst [vmem:[#allocation2 + $0x90] sm:$0xff] %v335
    %454 = vst [vmem:[#allocation2 + $0x98] sm:$0xff] %v400
    %455 = vst [vmem:[#allocation2 + $0xa0] sm:$0xff] %v208
    %456 = vst [vmem:[#allocation2 + $0xa8] sm:$0xff] %v273
    %457 = vst [vmem:[#allocation2 + $0xb0] sm:$0xff] %v338
    %458 = vst [vmem:[#allocation2 + $0xb8] sm:$0xff] %v403
    %459 = vst [vmem:[#allocation2 + $0xc0] sm:$0xff] %v211
    %460 = vst [vmem:[#allocation2 + $0xc8] sm:$0xff] %v276
    %461 = vst [vmem:[#allocation2 + $0xd0] sm:$0xff] %v341
    %462 = vst [vmem:[#allocation2 + $0xd8] sm:$0xff] %v406
    %463 = vst [vmem:[#allocation2 + $0xe0] sm:$0xff] %v214
    %464 = vst [vmem:[#allocation2 + $0xe8] sm:$0xff] %v279
    %465 = vst [vmem:[#allocation2 + $0xf0] sm:$0xff] %v344
    %466 = vst [vmem:[#allocation2 + $0xf8] sm:$0xff] %v409
    %467 = vst [vmem:[#allocation2 + $0x100] sm:$0xff] %v217
    %468 = vst [vmem:[#allocation2 + $0x108] sm:$0xff] %v282
    %469 = vst [vmem:[#allocation2 + $0x110] sm:$0xff] %v347
    %470 = vst [vmem:[#allocation2 + $0x118] sm:$0xff] %v412
    %471 = vst [vmem:[#allocation2 + $0x120] sm:$0xff] %v220
    %472 = vst [vmem:[#allocation2 + $0x128] sm:$0xff] %v285
    %473 = vst [vmem:[#allocation2 + $0x130] sm:$0xff] %v350
    %474 = vst [vmem:[#allocation2 + $0x138] sm:$0xff] %v415
    %475 = vst [vmem:[#allocation2 + $0x140] sm:$0xff] %v223
    %476 = vst [vmem:[#allocation2 + $0x148] sm:$0xff] %v288
    %477 = vst [vmem:[#allocation2 + $0x150] sm:$0xff] %v353
    %478 = vst [vmem:[#allocation2 + $0x158] sm:$0xff] %v418
    %479 = vst [vmem:[#allocation2 + $0x160] sm:$0xff] %v226
    %480 = vst [vmem:[#allocation2 + $0x168] sm:$0xff] %v291
    %481 = vst [vmem:[#allocation2 + $0x170] sm:$0xff] %v356
    %482 = vst [vmem:[#allocation2 + $0x178] sm:$0xff] %v421
    %483 = vst [vmem:[#allocation2 + $0x180] sm:$0xff] %v229
    %484 = vst [vmem:[#allocation2 + $0x188] sm:$0xff] %v294
    %485 = vst [vmem:[#allocation2 + $0x190] sm:$0xff] %v359
    %486 = vst [vmem:[#allocation2 + $0x198] sm:$0xff] %v424
    %487 = vst [vmem:[#allocation2 + $0x1a0] sm:$0xff] %v232
    %488 = vst [vmem:[#allocation2 + $0x1a8] sm:$0xff] %v297
    %489 = vst [vmem:[#allocation2 + $0x1b0] sm:$0xff] %v362
    %490 = vst [vmem:[#allocation2 + $0x1b8] sm:$0xff] %v427
    %491 = vst [vmem:[#allocation2 + $0x1c0] sm:$0xff] %v235
    %492 = vst [vmem:[#allocation2 + $0x1c8] sm:$0xff] %v300
    %493 = vst [vmem:[#allocation2 + $0x1d0] sm:$0xff] %v365
    %494 = vst [vmem:[#allocation2 + $0x1d8] sm:$0xff] %v430
    %495 = vst [vmem:[#allocation2 + $0x1e0] sm:$0xff] %v238
    %496 = vst [vmem:[#allocation2 + $0x1e8] sm:$0xff] %v303
    %497 = vst [vmem:[#allocation2 + $0x1f0] sm:$0xff] %v368
    %498 = vst [vmem:[#allocation2 + $0x1f8] sm:$0xff] %v433
    %v499 = vld [vmem:[#allocation2] sm:$0xff]
    %v500 = vld [vmem:[#allocation2 + $0x8] sm:$0xff]
    %v501 = vld [vmem:[#allocation2 + $0x10] sm:$0xff]
    %v502 = vld [vmem:[#allocation2 + $0x18] sm:$0xff]
    %v503 = vld [vmem:[#allocation3] sm:$0xff]
    %v504 = vld [vmem:[#allocation11] sm:$0xff]
    %v505 = vld [vmem:[#allocation11 + $0x8] sm:$0xff]
    %v506 = vld [vmem:[#allocation11 + $0x10] sm:$0xff]
    %v507 = vld [vmem:[#allocation11 + $0x18] sm:$0xff]
    %v508 = vld [vmem:[#allocation11 + $0x20] sm:$0xff]
    %v509 = vld [vmem:[#allocation11 + $0x28] sm:$0xff]
    %v510 = vld [vmem:[#allocation11 + $0x30] sm:$0xff]
    %v511 = vld [vmem:[#allocation11 + $0x38] sm:$0xff]
    %v512 = vld [vmem:[#allocation11 + $0x40] sm:$0xff]
    %v513 = vld [vmem:[#allocation11 + $0x48] sm:$0xff]
    %v514 = vld [vmem:[#allocation11 + $0x50] sm:$0xff]
    %v515 = vld [vmem:[#allocation11 + $0x58] sm:$0xff]
    %v516 = vld [vmem:[#allocation11 + $0x60] sm:$0xff]
    %v517 = vld [vmem:[#allocation11 + $0x68] sm:$0xff]
    %v518 = vld [vmem:[#allocation11 + $0x70] sm:$0xff]
    %v519 = vld [vmem:[#allocation11 + $0x78] sm:$0xff]
    %v520 = vld [vmem:[#allocation11 + $0x80] sm:$0xff]
    %v521 = vld [vmem:[#allocation11 + $0x88] sm:$0xff]
    %v522 = vld [vmem:[#allocation11 + $0x90] sm:$0xff]
    %v523 = vld [vmem:[#allocation11 + $0x98] sm:$0xff]
    %v524 = vld [vmem:[#allocation11 + $0xa0] sm:$0xff]
    %v525 = vld [vmem:[#allocation11 + $0xa8] sm:$0xff]
    %v526 = vld [vmem:[#allocation11 + $0xb0] sm:$0xff]
    %v527 = vld [vmem:[#allocation11 + $0xb8] sm:$0xff]
    %v528 = vld [vmem:[#allocation11 + $0xc0] sm:$0xff]
    %v529 = vld [vmem:[#allocation11 + $0xc8] sm:$0xff]
    %v530 = vld [vmem:[#allocation11 + $0xd0] sm:$0xff]
    %v531 = vld [vmem:[#allocation11 + $0xd8] sm:$0xff]
    %v532 = vld [vmem:[#allocation11 + $0xe0] sm:$0xff]
    %v533 = vld [vmem:[#allocation11 + $0xe8] sm:$0xff]
    %v534 = vld [vmem:[#allocation11 + $0xf0] sm:$0xff]
    %v535 = vld [vmem:[#allocation11 + $0xf8] sm:$0xff]
    %v536 = vld [vmem:[#allocation11 + $0x100] sm:$0xff]
    %v537 = vld [vmem:[#allocation11 + $0x108] sm:$0xff]
    %v538 = vld [vmem:[#allocation11 + $0x110] sm:$0xff]
    %v539 = vld [vmem:[#allocation11 + $0x118] sm:$0xff]
    %v540 = vld [vmem:[#allocation11 + $0x120] sm:$0xff]
    %v541 = vld [vmem:[#allocation11 + $0x128] sm:$0xff]
    %v542 = vld [vmem:[#allocation11 + $0x130] sm:$0xff]
    %v543 = vld [vmem:[#allocation11 + $0x138] sm:$0xff]
    %v544 = vld [vmem:[#allocation11 + $0x140] sm:$0xff]
    %v545 = vld [vmem:[#allocation11 + $0x148] sm:$0xff]
    %v546 = vld [vmem:[#allocation11 + $0x150] sm:$0xff]
    %v547 = vld [vmem:[#allocation11 + $0x158] sm:$0xff]
    %v548 = vld [vmem:[#allocation11 + $0x160] sm:$0xff]
    %v549 = vld [vmem:[#allocation11 + $0x168] sm:$0xff]
    %v550 = vld [vmem:[#allocation11 + $0x170] sm:$0xff]
    %v551 = vld [vmem:[#allocation11 + $0x178] sm:$0xff]
    %v552 = vld [vmem:[#allocation11 + $0x180] sm:$0xff]
    %v553 = vld [vmem:[#allocation11 + $0x188] sm:$0xff]
    %v554 = vld [vmem:[#allocation11 + $0x190] sm:$0xff]
    %v555 = vld [vmem:[#allocation11 + $0x198] sm:$0xff]
    %v556 = vld [vmem:[#allocation11 + $0x1a0] sm:$0xff]
    %v557 = vld [vmem:[#allocation11 + $0x1a8] sm:$0xff]
    %v558 = vld [vmem:[#allocation11 + $0x1b0] sm:$0xff]
    %v559 = vld [vmem:[#allocation11 + $0x1b8] sm:$0xff]
    %v560 = vld [vmem:[#allocation11 + $0x1c0] sm:$0xff]
    %v561 = vld [vmem:[#allocation11 + $0x1c8] sm:$0xff]
    %v562 = vld [vmem:[#allocation11 + $0x1d0] sm:$0xff]
    %v563 = vld [vmem:[#allocation11 + $0x1d8] sm:$0xff]
    %v564 = vld [vmem:[#allocation11 + $0x1e0] sm:$0xff]
    %v565 = vld [vmem:[#allocation11 + $0x1e8] sm:$0xff]
    %v566 = vld [vmem:[#allocation11 + $0x1f0] sm:$0xff]
    %v567 = vld [vmem:[#allocation11 + $0x1f8] sm:$0xff]
    %568 = vmatpush.msra.mxu0 %v564
    %569 = vmatpush.msra.mxu0 %v560
    %570 = vmatpush.msra.mxu0 %v556
    %571 = vmatpush.msra.mxu0 %v552
    %572 = vmatpush.msra.mxu0 %v548
    %573 = vmatpush.msra.mxu0 %v544
    %574 = vmatpush.msra.mxu0 %v540
    %575 = vmatpush.msra.mxu0 %v536
    %576 = vmatpush.msra.mxu0 %v532
    %577 = vmatpush.msra.mxu0 %v528
    %578 = vmatpush.msra.mxu0 %v524
    %579 = vmatpush.msra.mxu0 %v520
    %580 = vmatpush.msra.mxu0 %v516
    %581 = vmatpush.msra.mxu0 %v512
    %582 = vmatpush.msra.mxu0 %v508
    %583 = vmatpush.msra.mxu0 %v504
    %584 = vmatmul.f32.gmra.mxu0 %v503
    %v585 = vpop.f32.mrf.mxu0
    %v586 = vadd.f32 0.0, %v585
    %587 = vdwg.mxu0
    %588 = vmatpush.msra.mxu0 %v565
    %589 = vmatpush.msra.mxu0 %v561
    %590 = vmatpush.msra.mxu0 %v557
    %591 = vmatpush.msra.mxu0 %v553
    %592 = vmatpush.msra.mxu0 %v549
    %593 = vmatpush.msra.mxu0 %v545
    %594 = vmatpush.msra.mxu0 %v541
    %595 = vmatpush.msra.mxu0 %v537
    %596 = vmatpush.msra.mxu0 %v533
    %597 = vmatpush.msra.mxu0 %v529
    %598 = vmatpush.msra.mxu0 %v525
    %599 = vmatpush.msra.mxu0 %v521
    %600 = vmatpush.msra.mxu0 %v517
    %601 = vmatpush.msra.mxu0 %v513
    %602 = vmatpush.msra.mxu0 %v509
    %603 = vmatpush.msra.mxu0 %v505
    %604 = vmatmul.f32.gmra.mxu0 %v503
    %v605 = vpop.f32.mrf.mxu0
    %v606 = vadd.f32 0.0, %v605
    %607 = vdwg.mxu0
    %608 = vmatpush.msra.mxu0 %v566
    %609 = vmatpush.msra.mxu0 %v562
    %610 = vmatpush.msra.mxu0 %v558
    %611 = vmatpush.msra.mxu0 %v554
    %612 = vmatpush.msra.mxu0 %v550
    %613 = vmatpush.msra.mxu0 %v546
    %614 = vmatpush.msra.mxu0 %v542
    %615 = vmatpush.msra.mxu0 %v538
    %616 = vmatpush.msra.mxu0 %v534
    %617 = vmatpush.msra.mxu0 %v530
    %618 = vmatpush.msra.mxu0 %v526
    %619 = vmatpush.msra.mxu0 %v522
    %620 = vmatpush.msra.mxu0 %v518
    %621 = vmatpush.msra.mxu0 %v514
    %622 = vmatpush.msra.mxu0 %v510
    %623 = vmatpush.msra.mxu0 %v506
    %624 = vmatmul.f32.gmra.mxu0 %v503
    %v625 = vpop.f32.mrf.mxu0
    %v626 = vadd.f32 0.0, %v625
    %627 = vdwg.mxu0
    %628 = vmatpush.msra.mxu0 %v567
    %629 = vmatpush.msra.mxu0 %v563
    %630 = vmatpush.msra.mxu0 %v559
    %631 = vmatpush.msra.mxu0 %v555
    %632 = vmatpush.msra.mxu0 %v551
    %633 = vmatpush.msra.mxu0 %v547
    %634 = vmatpush.msra.mxu0 %v543
    %635 = vmatpush.msra.mxu0 %v539
    %636 = vmatpush.msra.mxu0 %v535
    %637 = vmatpush.msra.mxu0 %v531
    %638 = vmatpush.msra.mxu0 %v527
    %639 = vmatpush.msra.mxu0 %v523
    %640 = vmatpush.msra.mxu0 %v519
    %641 = vmatpush.msra.mxu0 %v515
    %642 = vmatpush.msra.mxu0 %v511
    %643 = vmatpush.msra.mxu0 %v507
    %644 = vmatmul.f32.gmra.mxu0 %v503
    %v645 = vpop.f32.mrf.mxu0
    %v646 = vadd.f32 0.0, %v645
    %647 = vdwg.mxu0
    %v648 = vadd.f32 %v499, %v586
    %v649 = vadd.f32 %v500, %v606
    %v650 = vadd.f32 %v501, %v626
    %v651 = vadd.f32 %v502, %v646
    %v652 = vmul.f32 %v648, 0.5
    %v653 = vtanh.pop %v652
    %v654 = vmul.f32 %v653, 0.5
    %v655 = vadd.f32 %v654, 0.5
    %v656 = vmul.f32 %v649, 0.5
    %v657 = vtanh.pop %v656
    %v658 = vmul.f32 %v657, 0.5
    %v659 = vadd.f32 %v658, 0.5
    %v660 = vtanh.pop %v650
    %v661 = vmul.f32 %v651, 0.5
    %v662 = vtanh.pop %v661
    %v663 = vmul.f32 %v662, 0.5
    %v664 = vadd.f32 %v663, 0.5
    %v665 = vld [vmem:[#allocation4] sm:$0xff]
    %v666 = vmul.f32 %v659, %v665
    %v667 = vmul.f32 %v655, %v660
    %v668 = vadd.f32 %v666, %v667
    %v669 = vtanh.pop %v668
    %v670 = vmul.f32 %v664, %v669
    %671 = vst [vmem:[#allocation4] sm:$0xff] %v668
    %672 = vst [vmem:[#allocation3] sm:$0xff] %v670
    %673 = vst [vmem:[#allocation13] sm:$0xff] %v670
    %v674 = vld [vmem:[#allocation2 + $0x20] sm:$0xff]
    %v675 = vld [vmem:[#allocation2 + $0x28] sm:$0xff]
    %v676 = vld [vmem:[#allocation2 + $0x30] sm:$0xff]
    %v677 = vld [vmem:[#allocation2 + $0x38] sm:$0xff]
    %v678 = vld [vmem:[#allocation3] sm:$0xff]
    %v679 = vld [vmem:[#allocation11] sm:$0xff]
    %v680 = vld [vmem:[#allocation11 + $0x8] sm:$0xff]
    %v681 = vld [vmem:[#allocation11 + $0x10] sm:$0xff]
    %v682 = vld [vmem:[#allocation11 + $0x18] sm:$0xff]
    %v683 = vld [vmem:[#allocation11 + $0x20] sm:$0xff]
    %v684 = vld [vmem:[#allocation11 + $0x28] sm:$0xff]
    %v685 = vld [vmem:[#allocation11 + $0x30] sm:$0xff]
    %v686 = vld [vmem:[#allocation11 + $0x38] sm:$0xff]
    %v687 = vld [vmem:[#allocation11 + $0x40] sm:$0xff]
    %v688 = vld [vmem:[#allocation11 + $0x48] sm:$0xff]
    %v689 = vld [vmem:[#allocation11 + $0x50] sm:$0xff]
    %v690 = vld [vmem:[#allocation11 + $0x58] sm:$0xff]
    %v691 = vld [vmem:[#allocation11 + $0x60] sm:$0xff]
    %v692 = vld [vmem:[#allocation11 + $0x68] sm:$0xff]
    %v693 = vld [vmem:[#allocation11 + $0x70] sm:$0xff]
    %v694 = vld [vmem:[#allocation11 + $0x78] sm:$0xff]
    %v695 = vld [vmem:[#allocation11 + $0x80] sm:$0xff]
    %v696 = vld [vmem:[#allocation11 + $0x88] sm:$0xff]
    %v697 = vld [vmem:[#allocation11 + $0x90] sm:$0xff]
    %v698 = vld [vmem:[#allocation11 + $0x98] sm:$0xff]
    %v699 = vld [vmem:[#allocation11 + $0xa0] sm:$0xff]
    %v700 = vld [vmem:[#allocation11 + $0xa8] sm:$0xff]
    %v701 = vld [vmem:[#allocation11 + $0xb0] sm:$0xff]
    %v702 = vld [vmem:[#allocation11 + $0xb8] sm:$0xff]
    %v703 = vld [vmem:[#allocation11 + $0xc0] sm:$0xff]
    %v704 = vld [vmem:[#allocation11 + $0xc8] sm:$0xff]
    %v705 = vld [vmem:[#allocation11 + $0xd0] sm:$0xff]
    %v706 = vld [vmem:[#allocation11 + $0xd8] sm:$0xff]
    %v707 = vld [vmem:[#allocation11 + $0xe0] sm:$0xff]
    %v708 = vld [vmem:[#allocation11 + $0xe8] sm:$0xff]
    %v709 = vld [vmem:[#allocation11 + $0xf0] sm:$0xff]
    %v710 = vld [vmem:[#allocation11 + $0xf8] sm:$0xff]
    %v711 = vld [vmem:[#allocation11 + $0x100] sm:$0xff]
    %v712 = vld [vmem:[#allocation11 + $0x108] sm:$0xff]
    %v713 = vld [vmem:[#allocation11 + $0x110] sm:$0xff]
    %v714 = vld [vmem:[#allocation11 + $0x118] sm:$0xff]
    %v715 = vld [vmem:[#allocation11 + $0x120] sm:$0xff]
    %v716 = vld [vmem:[#allocation11 + $0x128] sm:$0xff]
    %v717 = vld [vmem:[#allocation11 + $0x130] sm:$0xff]
    %v718 = vld [vmem:[#allocation11 + $0x138] sm:$0xff]
    %v719 = vld [vmem:[#allocation11 + $0x140] sm:$0xff]
    %v720 = vld [vmem:[#allocation11 + $0x148] sm:$0xff]
    %v721 = vld [vmem:[#allocation11 + $0x150] sm:$0xff]
    %v722 = vld [vmem:[#allocation11 + $0x158] sm:$0xff]
    %v723 = vld [vmem:[#allocation11 + $0x160] sm:$0xff]
    %v724 = vld [vmem:[#allocation11 + $0x168] sm:$0xff]
    %v725 = vld [vmem:[#allocation11 + $0x170] sm:$0xff]
    %v726 = vld [vmem:[#allocation11 + $0x178] sm:$0xff]
    %v727 = vld [vmem:[#allocation11 + $0x180] sm:$0xff]
    %v728 = vld [vmem:[#allocation11 + $0x188] sm:$0xff]
    %v729 = vld [vmem:[#allocation11 + $0x190] sm:$0xff]
    %v730 = vld [vmem:[#allocation11 + $0x198] sm:$0xff]
    %v731 = vld [vmem:[#allocation11 + $0x1a0] sm:$0xff]
    %v732 = vld [vmem:[#allocation11 + $0x1a8] sm:$0xff]
    %v733 = vld [vmem:[#allocation11 + $0x1b0] sm:$0xff]
    %v734 = vld [vmem:[#allocation11 + $0x1b8] sm:$0xff]
    %v735 = vld [vmem:[#allocation11 + $0x1c0] sm:$0xff]
    %v736 = vld [vmem:[#allocation11 + $0x1c8] sm:$0xff]
    %v737 = vld [vmem:[#allocation11 + $0x1d0] sm:$0xff]
    %v738 = vld [vmem:[#allocation11 + $0x1d8] sm:$0xff]
    %v739 = vld [vmem:[#allocation11 + $0x1e0] sm:$0xff]
    %v740 = vld [vmem:[#allocation11 + $0x1e8] sm:$0xff]
    %v741 = vld [vmem:[#allocation11 + $0x1f0] sm:$0xff]
    %v742 = vld [vmem:[#allocation11 + $0x1f8] sm:$0xff]
    %743 = vmatpush.msra.mxu0 %v739
    %744 = vmatpush.msra.mxu0 %v735
    %745 = vmatpush.msra.mxu0 %v731
    %746 = vmatpush.msra.mxu0 %v727
    %747 = vmatpush.msra.mxu0 %v723
    %748 = vmatpush.msra.mxu0 %v719
    %749 = vmatpush.msra.mxu0 %v715
    %750 = vmatpush.msra.mxu0 %v711
    %751 = vmatpush.msra.mxu0 %v707
    %752 = vmatpush.msra.mxu0 %v703
    %753 = vmatpush.msra.mxu0 %v699
    %754 = vmatpush.msra.mxu0 %v695
    %755 = vmatpush.msra.mxu0 %v691
    %756 = vmatpush.msra.mxu0 %v687
    %757 = vmatpush.msra.mxu0 %v683
    %758 = vmatpush.msra.mxu0 %v679
    %759 = vmatmul.f32.gmra.mxu0 %v678
    %v760 = vpop.f32.mrf.mxu0
    %v761 = vadd.f32 0.0, %v760
    %762 = vdwg.mxu0
    %763 = vmatpush.msra.mxu0 %v740
    %764 = vmatpush.msra.mxu0 %v736
    %765 = vmatpush.msra.mxu0 %v732
    %766 = vmatpush.msra.mxu0 %v728
    %767 = vmatpush.msra.mxu0 %v724
    %768 = vmatpush.msra.mxu0 %v720
    %769 = vmatpush.msra.mxu0 %v716
    %770 = vmatpush.msra.mxu0 %v712
    %771 = vmatpush.msra.mxu0 %v708
    %772 = vmatpush.msra.mxu0 %v704
    %773 = vmatpush.msra.mxu0 %v700
    %774 = vmatpush.msra.mxu0 %v696
    %775 = vmatpush.msra.mxu0 %v692
    %776 = vmatpush.msra.mxu0 %v688
    %777 = vmatpush.msra.mxu0 %v684
    %778 = vmatpush.msra.mxu0 %v680
    %779 = vmatmul.f32.gmra.mxu0 %v678
    %v780 = vpop.f32.mrf.mxu0
    %v781 = vadd.f32 0.0, %v780
    %782 = vdwg.mxu0
    %783 = vmatpush.msra.mxu0 %v741
    %784 = vmatpush.msra.mxu0 %v737
    %785 = vmatpush.msra.mxu0 %v733
    %786 = vmatpush.msra.mxu0 %v729
    %787 = vmatpush.msra.mxu0 %v725
    %788 = vmatpush.msra.mxu0 %v721
    %789 = vmatpush.msra.mxu0 %v717
    %790 = vmatpush.msra.mxu0 %v713
    %791 = vmatpush.msra.mxu0 %v709
    %792 = vmatpush.msra.mxu0 %v705
    %793 = vmatpush.msra.mxu0 %v701
    %794 = vmatpush.msra.mxu0 %v697
    %795 = vmatpush.msra.mxu0 %v693
    %796 = vmatpush.msra.mxu0 %v689
    %797 = vmatpush.msra.mxu0 %v685
    %798 = vmatpush.msra.mxu0 %v681
    %799 = vmatmul.f32.gmra.mxu0 %v678
    %v800 = vpop.f32.mrf.mxu0
    %v801 = vadd.f32 0.0, %v800
    %802 = vdwg.mxu0
    %803 = vmatpush.msra.mxu0 %v742
    %804 = vmatpush.msra.mxu0 %v738
    %805 = vmatpush.msra.mxu0 %v734
    %806 = vmatpush.msra.mxu0 %v730
    %807 = vmatpush.msra.mxu0 %v726
    %808 = vmatpush.msra.mxu0 %v722
    %809 = vmatpush.msra.mxu0 %v718
    %810 = vmatpush.msra.mxu0 %v714
    %811 = vmatpush.msra.mxu0 %v710
    %812 = vmatpush.msra.mxu0 %v706
    %813 = vmatpush.msra.mxu0 %v702
    %814 = vmatpush.msra.mxu0 %v698
    %815 = vmatpush.msra.mxu0 %v694
    %816 = vmatpush.msra.mxu0 %v690
    %817 = vmatpush.msra.mxu0 %v686
    %818 = vmatpush.msra.mxu0 %v682
    %819 = vmatmul.f32.gmra.mxu0 %v678
    %v820 = vpop.f32.mrf.mxu0
    %v821 = vadd.f32 0.0, %v820
    %822 = vdwg.mxu0
    %v823 = vadd.f32 %v674, %v761
    %v824 = vadd.f32 %v675, %v781
    %v825 = vadd.f32 %v676, %v801
    %v826 = vadd.f32 %v677, %v821
    %v827 = vmul.f32 %v823, 0.5
    %v828 = vtanh.pop %v827
    %v829 = vmul.f32 %v828, 0.5
    %v830 = vadd.f32 %v829, 0.5
    %v831 = vmul.f32 %v824, 0.5
    %v832 = vtanh.pop %v831
    %v833 = vmul.f32 %v832, 0.5
    %v834 = vadd.f32 %v833, 0.5
    %v835 = vtanh.pop %v825
    %v836 = vmul.f32 %v826, 0.5
    %v837 = vtanh.pop %v836
    %v838 = vmul.f32 %v837, 0.5
    %v839 = vadd.f32 %v838, 0.5
    %v840 = vld [vmem:[#allocation4] sm:$0xff]
    %v841 = vmul.f32 %v834, %v840
    %v842 = vmul.f32 %v830, %v835
    %v843 = vadd.f32 %v841, %v842
    %v844 = vtanh.pop %v843
    %v845 = vmul.f32 %v839, %v844
    %846 = vst [vmem:[#allocation4] sm:$0xff] %v843
    %847 = vst [vmem:[#allocation3] sm:$0xff] %v845
    %s848 = scalar_lea.vmem [#allocation13], 8
    %849 = vst [vmem:[%s848] sm:$0xff] %v845
    %v850 = vld [vmem:[#allocation2 + $0x40] sm:$0xff]
    %v851 = vld [vmem:[#allocation2 + $0x48] sm:$0xff]
    %v852 = vld [vmem:[#allocation2 + $0x50] sm:$0xff]
    %v853 = vld [vmem:[#allocation2 + $0x58] sm:$0xff]
    %v854 = vld [vmem:[#allocation3] sm:$0xff]
    %v855 = vld [vmem:[#allocation11] sm:$0xff]
    %v856 = vld [vmem:[#allocation11 + $0x8] sm:$0xff]
    %v857 = vld [vmem:[#allocation11 + $0x10] sm:$0xff]
    %v858 = vld [vmem:[#allocation11 + $0x18] sm:$0xff]
    %v859 = vld [vmem:[#allocation11 + $0x20] sm:$0xff]
    %v860 = vld [vmem:[#allocation11 + $0x28] sm:$0xff]
    %v861 = vld [vmem:[#allocation11 + $0x30] sm:$0xff]
    %v862 = vld [vmem:[#allocation11 + $0x38] sm:$0xff]
    %v863 = vld [vmem:[#allocation11 + $0x40] sm:$0xff]
    %v864 = vld [vmem:[#allocation11 + $0x48] sm:$0xff]
    %v865 = vld [vmem:[#allocation11 + $0x50] sm:$0xff]
    %v866 = vld [vmem:[#allocation11 + $0x58] sm:$0xff]
    %v867 = vld [vmem:[#allocation11 + $0x60] sm:$0xff]
    %v868 = vld [vmem:[#allocation11 + $0x68] sm:$0xff]
    %v869 = vld [vmem:[#allocation11 + $0x70] sm:$0xff]
    %v870 = vld [vmem:[#allocation11 + $0x78] sm:$0xff]
    %v871 = vld [vmem:[#allocation11 + $0x80] sm:$0xff]
    %v872 = vld [vmem:[#allocation11 + $0x88] sm:$0xff]
    %v873 = vld [vmem:[#allocation11 + $0x90] sm:$0xff]
    %v874 = vld [vmem:[#allocation11 + $0x98] sm:$0xff]
    %v875 = vld [vmem:[#allocation11 + $0xa0] sm:$0xff]
    %v876 = vld [vmem:[#allocation11 + $0xa8] sm:$0xff]
    %v877 = vld [vmem:[#allocation11 + $0xb0] sm:$0xff]
    %v878 = vld [vmem:[#allocation11 + $0xb8] sm:$0xff]
    %v879 = vld [vmem:[#allocation11 + $0xc0] sm:$0xff]
    %v880 = vld [vmem:[#allocation11 + $0xc8] sm:$0xff]
    %v881 = vld [vmem:[#allocation11 + $0xd0] sm:$0xff]
    %v882 = vld [vmem:[#allocation11 + $0xd8] sm:$0xff]
    %v883 = vld [vmem:[#allocation11 + $0xe0] sm:$0xff]
    %v884 = vld [vmem:[#allocation11 + $0xe8] sm:$0xff]
    %v885 = vld [vmem:[#allocation11 + $0xf0] sm:$0xff]
    %v886 = vld [vmem:[#allocation11 + $0xf8] sm:$0xff]
    %v887 = vld [vmem:[#allocation11 + $0x100] sm:$0xff]
    %v888 = vld [vmem:[#allocation11 + $0x108] sm:$0xff]
    %v889 = vld [vmem:[#allocation11 + $0x110] sm:$0xff]
    %v890 = vld [vmem:[#allocation11 + $0x118] sm:$0xff]
    %v891 = vld [vmem:[#allocation11 + $0x120] sm:$0xff]
    %v892 = vld [vmem:[#allocation11 + $0x128] sm:$0xff]
    %v893 = vld [vmem:[#allocation11 + $0x130] sm:$0xff]
    %v894 = vld [vmem:[#allocation11 + $0x138] sm:$0xff]
    %v895 = vld [vmem:[#allocation11 + $0x140] sm:$0xff]
    %v896 = vld [vmem:[#allocation11 + $0x148] sm:$0xff]
    %v897 = vld [vmem:[#allocation11 + $0x150] sm:$0xff]
    %v898 = vld [vmem:[#allocation11 + $0x158] sm:$0xff]
    %v899 = vld [vmem:[#allocation11 + $0x160] sm:$0xff]
    %v900 = vld [vmem:[#allocation11 + $0x168] sm:$0xff]
    %v901 = vld [vmem:[#allocation11 + $0x170] sm:$0xff]
    %v902 = vld [vmem:[#allocation11 + $0x178] sm:$0xff]
    %v903 = vld [vmem:[#allocation11 + $0x180] sm:$0xff]
    %v904 = vld [vmem:[#allocation11 + $0x188] sm:$0xff]
    %v905 = vld [vmem:[#allocation11 + $0x190] sm:$0xff]
    %v906 = vld [vmem:[#allocation11 + $0x198] sm:$0xff]
    %v907 = vld [vmem:[#allocation11 + $0x1a0] sm:$0xff]
    %v908 = vld [vmem:[#allocation11 + $0x1a8] sm:$0xff]
    %v909 = vld [vmem:[#allocation11 + $0x1b0] sm:$0xff]
    %v910 = vld [vmem:[#allocation11 + $0x1b8] sm:$0xff]
    %v911 = vld [vmem:[#allocation11 + $0x1c0] sm:$0xff]
    %v912 = vld [vmem:[#allocation11 + $0x1c8] sm:$0xff]
    %v913 = vld [vmem:[#allocation11 + $0x1d0] sm:$0xff]
    %v914 = vld [vmem:[#allocation11 + $0x1d8] sm:$0xff]
    %v915 = vld [vmem:[#allocation11 + $0x1e0] sm:$0xff]
    %v916 = vld [vmem:[#allocation11 + $0x1e8] sm:$0xff]
    %v917 = vld [vmem:[#allocation11 + $0x1f0] sm:$0xff]
    %v918 = vld [vmem:[#allocation11 + $0x1f8] sm:$0xff]
    %919 = vmatpush.msra.mxu0 %v915
    %920 = vmatpush.msra.mxu0 %v911
    %921 = vmatpush.msra.mxu0 %v907
    %922 = vmatpush.msra.mxu0 %v903
    %923 = vmatpush.msra.mxu0 %v899
    %924 = vmatpush.msra.mxu0 %v895
    %925 = vmatpush.msra.mxu0 %v891
    %926 = vmatpush.msra.mxu0 %v887
    %927 = vmatpush.msra.mxu0 %v883
    %928 = vmatpush.msra.mxu0 %v879
    %929 = vmatpush.msra.mxu0 %v875
    %930 = vmatpush.msra.mxu0 %v871
    %931 = vmatpush.msra.mxu0 %v867
    %932 = vmatpush.msra.mxu0 %v863
    %933 = vmatpush.msra.mxu0 %v859
    %934 = vmatpush.msra.mxu0 %v855
    %935 = vmatmul.f32.gmra.mxu0 %v854
    %v936 = vpop.f32.mrf.mxu0
    %v937 = vadd.f32 0.0, %v936
    %938 = vdwg.mxu0
    %939 = vmatpush.msra.mxu0 %v916
    %940 = vmatpush.msra.mxu0 %v912
    %941 = vmatpush.msra.mxu0 %v908
    %942 = vmatpush.msra.mxu0 %v904
    %943 = vmatpush.msra.mxu0 %v900
    %944 = vmatpush.msra.mxu0 %v896
    %945 = vmatpush.msra.mxu0 %v892
    %946 = vmatpush.msra.mxu0 %v888
    %947 = vmatpush.msra.mxu0 %v884
    %948 = vmatpush.msra.mxu0 %v880
    %949 = vmatpush.msra.mxu0 %v876
    %950 = vmatpush.msra.mxu0 %v872
    %951 = vmatpush.msra.mxu0 %v868
    %952 = vmatpush.msra.mxu0 %v864
    %953 = vmatpush.msra.mxu0 %v860
    %954 = vmatpush.msra.mxu0 %v856
    %955 = vmatmul.f32.gmra.mxu0 %v854
    %v956 = vpop.f32.mrf.mxu0
    %v957 = vadd.f32 0.0, %v956
    %958 = vdwg.mxu0
    %959 = vmatpush.msra.mxu0 %v917
    %960 = vmatpush.msra.mxu0 %v913
    %961 = vmatpush.msra.mxu0 %v909
    %962 = vmatpush.msra.mxu0 %v905
    %963 = vmatpush.msra.mxu0 %v901
    %964 = vmatpush.msra.mxu0 %v897
    %965 = vmatpush.msra.mxu0 %v893
    %966 = vmatpush.msra.mxu0 %v889
    %967 = vmatpush.msra.mxu0 %v885
    %968 = vmatpush.msra.mxu0 %v881
    %969 = vmatpush.msra.mxu0 %v877
    %970 = vmatpush.msra.mxu0 %v873
    %971 = vmatpush.msra.mxu0 %v869
    %972 = vmatpush.msra.mxu0 %v865
    %973 = vmatpush.msra.mxu0 %v861
    %974 = vmatpush.msra.mxu0 %v857
    %975 = vmatmul.f32.gmra.mxu0 %v854
    %v976 = vpop.f32.mrf.mxu0
    %v977 = vadd.f32 0.0, %v976
    %978 = vdwg.mxu0
    %979 = vmatpush.msra.mxu0 %v918
    %980 = vmatpush.msra.mxu0 %v914
    %981 = vmatpush.msra.mxu0 %v910
    %982 = vmatpush.msra.mxu0 %v906
    %983 = vmatpush.msra.mxu0 %v902
    %984 = vmatpush.msra.mxu0 %v898
    %985 = vmatpush.msra.mxu0 %v894
    %986 = vmatpush.msra.mxu0 %v890
    %987 = vmatpush.msra.mxu0 %v886
    %988 = vmatpush.msra.mxu0 %v882
    %989 = vmatpush.msra.mxu0 %v878
    %990 = vmatpush.msra.mxu0 %v874
    %991 = vmatpush.msra.mxu0 %v870
    %992 = vmatpush.msra.mxu0 %v866
    %993 = vmatpush.msra.mxu0 %v862
    %994 = vmatpush.msra.mxu0 %v858
    %995 = vmatmul.f32.gmra.mxu0 %v854
    %v996 = vpop.f32.mrf.mxu0
    %v997 = vadd.f32 0.0, %v996
    %998 = vdwg.mxu0
    %v999 = vadd.f32 %v850, %v937
    %v1000 = vadd.f32 %v851, %v957
    %v1001 = vadd.f32 %v852, %v977
    %v1002 = vadd.f32 %v853, %v997
    %v1003 = vmul.f32 %v999, 0.5
    %v1004 = vtanh.pop %v1003
    %v1005 = vmul.f32 %v1004, 0.5
    %v1006 = vadd.f32 %v1005, 0.5
    %v1007 = vmul.f32 %v1000, 0.5
    %v1008 = vtanh.pop %v1007
    %v1009 = vmul.f32 %v1008, 0.5
    %v1010 = vadd.f32 %v1009, 0.5
    %v1011 = vtanh.pop %v1001
    %v1012 = vmul.f32 %v1002, 0.5
    %v1013 = vtanh.pop %v1012
    %v1014 = vmul.f32 %v1013, 0.5
    %v1015 = vadd.f32 %v1014, 0.5
    %v1016 = vld [vmem:[#allocation4] sm:$0xff]
    %v1017 = vmul.f32 %v1010, %v1016
    %v1018 = vmul.f32 %v1006, %v1011
    %v1019 = vadd.f32 %v1017, %v1018
    %v1020 = vtanh.pop %v1019
    %v1021 = vmul.f32 %v1015, %v1020
    %1022 = vst [vmem:[#allocation4] sm:$0xff] %v1019
    %1023 = vst [vmem:[#allocation3] sm:$0xff] %v1021
    %s1024 = scalar_lea.vmem [#allocation13], 16
    %1025 = vst [vmem:[%s1024] sm:$0xff] %v1021
    %v1026 = vld [vmem:[#allocation2 + $0x60] sm:$0xff]
    %v1027 = vld [vmem:[#allocation2 + $0x68] sm:$0xff]
    %v1028 = vld [vmem:[#allocation2 + $0x70] sm:$0xff]
    %v1029 = vld [vmem:[#allocation2 + $0x78] sm:$0xff]
    %v1030 = vld [vmem:[#allocation3] sm:$0xff]
    %v1031 = vld [vmem:[#allocation11] sm:$0xff]
    %v1032 = vld [vmem:[#allocation11 + $0x8] sm:$0xff]
    %v1033 = vld [vmem:[#allocation11 + $0x10] sm:$0xff]
    %v1034 = vld [vmem:[#allocation11 + $0x18] sm:$0xff]
    %v1035 = vld [vmem:[#allocation11 + $0x20] sm:$0xff]
    %v1036 = vld [vmem:[#allocation11 + $0x28] sm:$0xff]
    %v1037 = vld [vmem:[#allocation11 + $0x30] sm:$0xff]
    %v1038 = vld [vmem:[#allocation11 + $0x38] sm:$0xff]
    %v1039 = vld [vmem:[#allocation11 + $0x40] sm:$0xff]
    %v1040 = vld [vmem:[#allocation11 + $0x48] sm:$0xff]
    %v1041 = vld [vmem:[#allocation11 + $0x50] sm:$0xff]
    %v1042 = vld [vmem:[#allocation11 + $0x58] sm:$0xff]
    %v1043 = vld [vmem:[#allocation11 + $0x60] sm:$0xff]
    %v1044 = vld [vmem:[#allocation11 + $0x68] sm:$0xff]
    %v1045 = vld [vmem:[#allocation11 + $0x70] sm:$0xff]
    %v1046 = vld [vmem:[#allocation11 + $0x78] sm:$0xff]
    %v1047 = vld [vmem:[#allocation11 + $0x80] sm:$0xff]
    %v1048 = vld [vmem:[#allocation11 + $0x88] sm:$0xff]
    %v1049 = vld [vmem:[#allocation11 + $0x90] sm:$0xff]
    %v1050 = vld [vmem:[#allocation11 + $0x98] sm:$0xff]
    %v1051 = vld [vmem:[#allocation11 + $0xa0] sm:$0xff]
    %v1052 = vld [vmem:[#allocation11 + $0xa8] sm:$0xff]
    %v1053 = vld [vmem:[#allocation11 + $0xb0] sm:$0xff]
    %v1054 = vld [vmem:[#allocation11 + $0xb8] sm:$0xff]
    %v1055 = vld [vmem:[#allocation11 + $0xc0] sm:$0xff]
    %v1056 = vld [vmem:[#allocation11 + $0xc8] sm:$0xff]
    %v1057 = vld [vmem:[#allocation11 + $0xd0] sm:$0xff]
    %v1058 = vld [vmem:[#allocation11 + $0xd8] sm:$0xff]
    %v1059 = vld [vmem:[#allocation11 + $0xe0] sm:$0xff]
    %v1060 = vld [vmem:[#allocation11 + $0xe8] sm:$0xff]
    %v1061 = vld [vmem:[#allocation11 + $0xf0] sm:$0xff]
    %v1062 = vld [vmem:[#allocation11 + $0xf8] sm:$0xff]
    %v1063 = vld [vmem:[#allocation11 + $0x100] sm:$0xff]
    %v1064 = vld [vmem:[#allocation11 + $0x108] sm:$0xff]
    %v1065 = vld [vmem:[#allocation11 + $0x110] sm:$0xff]
    %v1066 = vld [vmem:[#allocation11 + $0x118] sm:$0xff]
    %v1067 = vld [vmem:[#allocation11 + $0x120] sm:$0xff]
    %v1068 = vld [vmem:[#allocation11 + $0x128] sm:$0xff]
    %v1069 = vld [vmem:[#allocation11 + $0x130] sm:$0xff]
    %v1070 = vld [vmem:[#allocation11 + $0x138] sm:$0xff]
    %v1071 = vld [vmem:[#allocation11 + $0x140] sm:$0xff]
    %v1072 = vld [vmem:[#allocation11 + $0x148] sm:$0xff]
    %v1073 = vld [vmem:[#allocation11 + $0x150] sm:$0xff]
    %v1074 = vld [vmem:[#allocation11 + $0x158] sm:$0xff]
    %v1075 = vld [vmem:[#allocation11 + $0x160] sm:$0xff]
    %v1076 = vld [vmem:[#allocation11 + $0x168] sm:$0xff]
    %v1077 = vld [vmem:[#allocation11 + $0x170] sm:$0xff]
    %v1078 = vld [vmem:[#allocation11 + $0x178] sm:$0xff]
    %v1079 = vld [vmem:[#allocation11 + $0x180] sm:$0xff]
    %v1080 = vld [vmem:[#allocation11 + $0x188] sm:$0xff]
    %v1081 = vld [vmem:[#allocation11 + $0x190] sm:$0xff]
    %v1082 = vld [vmem:[#allocation11 + $0x198] sm:$0xff]
    %v1083 = vld [vmem:[#allocation11 + $0x1a0] sm:$0xff]
    %v1084 = vld [vmem:[#allocation11 + $0x1a8] sm:$0xff]
    %v1085 = vld [vmem:[#allocation11 + $0x1b0] sm:$0xff]
    %v1086 = vld [vmem:[#allocation11 + $0x1b8] sm:$0xff]
    %v1087 = vld [vmem:[#allocation11 + $0x1c0] sm:$0xff]
    %v1088 = vld [vmem:[#allocation11 + $0x1c8] sm:$0xff]
    %v1089 = vld [vmem:[#allocation11 + $0x1d0] sm:$0xff]
    %v1090 = vld [vmem:[#allocation11 + $0x1d8] sm:$0xff]
    %v1091 = vld [vmem:[#allocation11 + $0x1e0] sm:$0xff]
    %v1092 = vld [vmem:[#allocation11 + $0x1e8] sm:$0xff]
    %v1093 = vld [vmem:[#allocation11 + $0x1f0] sm:$0xff]
    %v1094 = vld [vmem:[#allocation11 + $0x1f8] sm:$0xff]
    %1095 = vmatpush.msra.mxu0 %v1091
    %1096 = vmatpush.msra.mxu0 %v1087
    %1097 = vmatpush.msra.mxu0 %v1083
    %1098 = vmatpush.msra.mxu0 %v1079
    %1099 = vmatpush.msra.mxu0 %v1075
    %1100 = vmatpush.msra.mxu0 %v1071
    %1101 = vmatpush.msra.mxu0 %v1067
    %1102 = vmatpush.msra.mxu0 %v1063
    %1103 = vmatpush.msra.mxu0 %v1059
    %1104 = vmatpush.msra.mxu0 %v1055
    %1105 = vmatpush.msra.mxu0 %v1051
    %1106 = vmatpush.msra.mxu0 %v1047
    %1107 = vmatpush.msra.mxu0 %v1043
    %1108 = vmatpush.msra.mxu0 %v1039
    %1109 = vmatpush.msra.mxu0 %v1035
    %1110 = vmatpush.msra.mxu0 %v1031
    %1111 = vmatmul.f32.gmra.mxu0 %v1030
    %v1112 = vpop.f32.mrf.mxu0
    %v1113 = vadd.f32 0.0, %v1112
    %1114 = vdwg.mxu0
    %1115 = vmatpush.msra.mxu0 %v1092
    %1116 = vmatpush.msra.mxu0 %v1088
    %1117 = vmatpush.msra.mxu0 %v1084
    %1118 = vmatpush.msra.mxu0 %v1080
    %1119 = vmatpush.msra.mxu0 %v1076
    %1120 = vmatpush.msra.mxu0 %v1072
    %1121 = vmatpush.msra.mxu0 %v1068
    %1122 = vmatpush.msra.mxu0 %v1064
    %1123 = vmatpush.msra.mxu0 %v1060
    %1124 = vmatpush.msra.mxu0 %v1056
    %1125 = vmatpush.msra.mxu0 %v1052
    %1126 = vmatpush.msra.mxu0 %v1048
    %1127 = vmatpush.msra.mxu0 %v1044
    %1128 = vmatpush.msra.mxu0 %v1040
    %1129 = vmatpush.msra.mxu0 %v1036
    %1130 = vmatpush.msra.mxu0 %v1032
    %1131 = vmatmul.f32.gmra.mxu0 %v1030
    %v1132 = vpop.f32.mrf.mxu0
    %v1133 = vadd.f32 0.0, %v1132
    %1134 = vdwg.mxu0
    %1135 = vmatpush.msra.mxu0 %v1093
    %1136 = vmatpush.msra.mxu0 %v1089
    %1137 = vmatpush.msra.mxu0 %v1085
    %1138 = vmatpush.msra.mxu0 %v1081
    %1139 = vmatpush.msra.mxu0 %v1077
    %1140 = vmatpush.msra.mxu0 %v1073
    %1141 = vmatpush.msra.mxu0 %v1069
    %1142 = vmatpush.msra.mxu0 %v1065
    %1143 = vmatpush.msra.mxu0 %v1061
    %1144 = vmatpush.msra.mxu0 %v1057
    %1145 = vmatpush.msra.mxu0 %v1053
    %1146 = vmatpush.msra.mxu0 %v1049
    %1147 = vmatpush.msra.mxu0 %v1045
    %1148 = vmatpush.msra.mxu0 %v1041
    %1149 = vmatpush.msra.mxu0 %v1037
    %1150 = vmatpush.msra.mxu0 %v1033
    %1151 = vmatmul.f32.gmra.mxu0 %v1030
    %v1152 = vpop.f32.mrf.mxu0
    %v1153 = vadd.f32 0.0, %v1152
    %1154 = vdwg.mxu0
    %1155 = vmatpush.msra.mxu0 %v1094
    %1156 = vmatpush.msra.mxu0 %v1090
    %1157 = vmatpush.msra.mxu0 %v1086
    %1158 = vmatpush.msra.mxu0 %v1082
    %1159 = vmatpush.msra.mxu0 %v1078
    %1160 = vmatpush.msra.mxu0 %v1074
    %1161 = vmatpush.msra.mxu0 %v1070
    %1162 = vmatpush.msra.mxu0 %v1066
    %1163 = vmatpush.msra.mxu0 %v1062
    %1164 = vmatpush.msra.mxu0 %v1058
    %1165 = vmatpush.msra.mxu0 %v1054
    %1166 = vmatpush.msra.mxu0 %v1050
    %1167 = vmatpush.msra.mxu0 %v1046
    %1168 = vmatpush.msra.mxu0 %v1042
    %1169 = vmatpush.msra.mxu0 %v1038
    %1170 = vmatpush.msra.mxu0 %v1034
    %1171 = vmatmul.f32.gmra.mxu0 %v1030
    %v1172 = vpop.f32.mrf.mxu0
    %v1173 = vadd.f32 0.0, %v1172
    %1174 = vdwg.mxu0
    %v1175 = vadd.f32 %v1026, %v1113
    %v1176 = vadd.f32 %v1027, %v1133
    %v1177 = vadd.f32 %v1028, %v1153
    %v1178 = vadd.f32 %v1029, %v1173
    %v1179 = vmul.f32 %v1175, 0.5
    %v1180 = vtanh.pop %v1179
    %v1181 = vmul.f32 %v1180, 0.5
    %v1182 = vadd.f32 %v1181, 0.5
    %v1183 = vmul.f32 %v1176, 0.5
    %v1184 = vtanh.pop %v1183
    %v1185 = vmul.f32 %v1184, 0.5
    %v1186 = vadd.f32 %v1185, 0.5
    %v1187 = vtanh.pop %v1177
    %v1188 = vmul.f32 %v1178, 0.5
    %v1189 = vtanh.pop %v1188
    %v1190 = vmul.f32 %v1189, 0.5
    %v1191 = vadd.f32 %v1190, 0.5
    %v1192 = vld [vmem:[#allocation4] sm:$0xff]
    %v1193 = vmul.f32 %v1186, %v1192
    %v1194 = vmul.f32 %v1182, %v1187
    %v1195 = vadd.f32 %v1193, %v1194
    %v1196 = vtanh.pop %v1195
    %v1197 = vmul.f32 %v1191, %v1196
    %1198 = vst [vmem:[#allocation4] sm:$0xff] %v1195
    %1199 = vst [vmem:[#allocation3] sm:$0xff] %v1197
    %s1200 = scalar_lea.vmem [#allocation13], 24
    %1201 = vst [vmem:[%s1200] sm:$0xff] %v1197
    %v1202 = vld [vmem:[#allocation2 + $0x80] sm:$0xff]
    %v1203 = vld [vmem:[#allocation2 + $0x88] sm:$0xff]
    %v1204 = vld [vmem:[#allocation2 + $0x90] sm:$0xff]
    %v1205 = vld [vmem:[#allocation2 + $0x98] sm:$0xff]
    %v1206 = vld [vmem:[#allocation3] sm:$0xff]
    %v1207 = vld [vmem:[#allocation11] sm:$0xff]
    %v1208 = vld [vmem:[#allocation11 + $0x8] sm:$0xff]
    %v1209 = vld [vmem:[#allocation11 + $0x10] sm:$0xff]
    %v1210 = vld [vmem:[#allocation11 + $0x18] sm:$0xff]
    %v1211 = vld [vmem:[#allocation11 + $0x20] sm:$0xff]
    %v1212 = vld [vmem:[#allocation11 + $0x28] sm:$0xff]
    %v1213 = vld [vmem:[#allocation11 + $0x30] sm:$0xff]
    %v1214 = vld [vmem:[#allocation11 + $0x38] sm:$0xff]
    %v1215 = vld [vmem:[#allocation11 + $0x40] sm:$0xff]
    %v1216 = vld [vmem:[#allocation11 + $0x48] sm:$0xff]
    %v1217 = vld [vmem:[#allocation11 + $0x50] sm:$0xff]
    %v1218 = vld [vmem:[#allocation11 + $0x58] sm:$0xff]
    %v1219 = vld [vmem:[#allocation11 + $0x60] sm:$0xff]
    %v1220 = vld [vmem:[#allocation11 + $0x68] sm:$0xff]
    %v1221 = vld [vmem:[#allocation11 + $0x70] sm:$0xff]
    %v1222 = vld [vmem:[#allocation11 + $0x78] sm:$0xff]
    %v1223 = vld [vmem:[#allocation11 + $0x80] sm:$0xff]
    %v1224 = vld [vmem:[#allocation11 + $0x88] sm:$0xff]
    %v1225 = vld [vmem:[#allocation11 + $0x90] sm:$0xff]
    %v1226 = vld [vmem:[#allocation11 + $0x98] sm:$0xff]
    %v1227 = vld [vmem:[#allocation11 + $0xa0] sm:$0xff]
    %v1228 = vld [vmem:[#allocation11 + $0xa8] sm:$0xff]
    %v1229 = vld [vmem:[#allocation11 + $0xb0] sm:$0xff]
    %v1230 = vld [vmem:[#allocation11 + $0xb8] sm:$0xff]
    %v1231 = vld [vmem:[#allocation11 + $0xc0] sm:$0xff]
    %v1232 = vld [vmem:[#allocation11 + $0xc8] sm:$0xff]
    %v1233 = vld [vmem:[#allocation11 + $0xd0] sm:$0xff]
    %v1234 = vld [vmem:[#allocation11 + $0xd8] sm:$0xff]
    %v1235 = vld [vmem:[#allocation11 + $0xe0] sm:$0xff]
    %v1236 = vld [vmem:[#allocation11 + $0xe8] sm:$0xff]
    %v1237 = vld [vmem:[#allocation11 + $0xf0] sm:$0xff]
    %v1238 = vld [vmem:[#allocation11 + $0xf8] sm:$0xff]
    %v1239 = vld [vmem:[#allocation11 + $0x100] sm:$0xff]
    %v1240 = vld [vmem:[#allocation11 + $0x108] sm:$0xff]
    %v1241 = vld [vmem:[#allocation11 + $0x110] sm:$0xff]
    %v1242 = vld [vmem:[#allocation11 + $0x118] sm:$0xff]
    %v1243 = vld [vmem:[#allocation11 + $0x120] sm:$0xff]
    %v1244 = vld [vmem:[#allocation11 + $0x128] sm:$0xff]
    %v1245 = vld [vmem:[#allocation11 + $0x130] sm:$0xff]
    %v1246 = vld [vmem:[#allocation11 + $0x138] sm:$0xff]
    %v1247 = vld [vmem:[#allocation11 + $0x140] sm:$0xff]
    %v1248 = vld [vmem:[#allocation11 + $0x148] sm:$0xff]
    %v1249 = vld [vmem:[#allocation11 + $0x150] sm:$0xff]
    %v1250 = vld [vmem:[#allocation11 + $0x158] sm:$0xff]
    %v1251 = vld [vmem:[#allocation11 + $0x160] sm:$0xff]
    %v1252 = vld [vmem:[#allocation11 + $0x168] sm:$0xff]
    %v1253 = vld [vmem:[#allocation11 + $0x170] sm:$0xff]
    %v1254 = vld [vmem:[#allocation11 + $0x178] sm:$0xff]
    %v1255 = vld [vmem:[#allocation11 + $0x180] sm:$0xff]
    %v1256 = vld [vmem:[#allocation11 + $0x188] sm:$0xff]
    %v1257 = vld [vmem:[#allocation11 + $0x190] sm:$0xff]
    %v1258 = vld [vmem:[#allocation11 + $0x198] sm:$0xff]
    %v1259 = vld [vmem:[#allocation11 + $0x1a0] sm:$0xff]
    %v1260 = vld [vmem:[#allocation11 + $0x1a8] sm:$0xff]
    %v1261 = vld [vmem:[#allocation11 + $0x1b0] sm:$0xff]
    %v1262 = vld [vmem:[#allocation11 + $0x1b8] sm:$0xff]
    %v1263 = vld [vmem:[#allocation11 + $0x1c0] sm:$0xff]
    %v1264 = vld [vmem:[#allocation11 + $0x1c8] sm:$0xff]
    %v1265 = vld [vmem:[#allocation11 + $0x1d0] sm:$0xff]
    %v1266 = vld [vmem:[#allocation11 + $0x1d8] sm:$0xff]
    %v1267 = vld [vmem:[#allocation11 + $0x1e0] sm:$0xff]
    %v1268 = vld [vmem:[#allocation11 + $0x1e8] sm:$0xff]
    %v1269 = vld [vmem:[#allocation11 + $0x1f0] sm:$0xff]
    %v1270 = vld [vmem:[#allocation11 + $0x1f8] sm:$0xff]
    %1271 = vmatpush.msra.mxu0 %v1267
    %1272 = vmatpush.msra.mxu0 %v1263
    %1273 = vmatpush.msra.mxu0 %v1259
    %1274 = vmatpush.msra.mxu0 %v1255
    %1275 = vmatpush.msra.mxu0 %v1251
    %1276 = vmatpush.msra.mxu0 %v1247
    %1277 = vmatpush.msra.mxu0 %v1243
    %1278 = vmatpush.msra.mxu0 %v1239
    %1279 = vmatpush.msra.mxu0 %v1235
    %1280 = vmatpush.msra.mxu0 %v1231
    %1281 = vmatpush.msra.mxu0 %v1227
    %1282 = vmatpush.msra.mxu0 %v1223
    %1283 = vmatpush.msra.mxu0 %v1219
    %1284 = vmatpush.msra.mxu0 %v1215
    %1285 = vmatpush.msra.mxu0 %v1211
    %1286 = vmatpush.msra.mxu0 %v1207
    %1287 = vmatmul.f32.gmra.mxu0 %v1206
    %v1288 = vpop.f32.mrf.mxu0
    %v1289 = vadd.f32 0.0, %v1288
    %1290 = vdwg.mxu0
    %1291 = vmatpush.msra.mxu0 %v1268
    %1292 = vmatpush.msra.mxu0 %v1264
    %1293 = vmatpush.msra.mxu0 %v1260
    %1294 = vmatpush.msra.mxu0 %v1256
    %1295 = vmatpush.msra.mxu0 %v1252
    %1296 = vmatpush.msra.mxu0 %v1248
    %1297 = vmatpush.msra.mxu0 %v1244
    %1298 = vmatpush.msra.mxu0 %v1240
    %1299 = vmatpush.msra.mxu0 %v1236
    %1300 = vmatpush.msra.mxu0 %v1232
    %1301 = vmatpush.msra.mxu0 %v1228
    %1302 = vmatpush.msra.mxu0 %v1224
    %1303 = vmatpush.msra.mxu0 %v1220
    %1304 = vmatpush.msra.mxu0 %v1216
    %1305 = vmatpush.msra.mxu0 %v1212
    %1306 = vmatpush.msra.mxu0 %v1208
    %1307 = vmatmul.f32.gmra.mxu0 %v1206
    %v1308 = vpop.f32.mrf.mxu0
    %v1309 = vadd.f32 0.0, %v1308
    %1310 = vdwg.mxu0
    %1311 = vmatpush.msra.mxu0 %v1269
    %1312 = vmatpush.msra.mxu0 %v1265
    %1313 = vmatpush.msra.mxu0 %v1261
    %1314 = vmatpush.msra.mxu0 %v1257
    %1315 = vmatpush.msra.mxu0 %v1253
    %1316 = vmatpush.msra.mxu0 %v1249
    %1317 = vmatpush.msra.mxu0 %v1245
    %1318 = vmatpush.msra.mxu0 %v1241
    %1319 = vmatpush.msra.mxu0 %v1237
    %1320 = vmatpush.msra.mxu0 %v1233
    %1321 = vmatpush.msra.mxu0 %v1229
    %1322 = vmatpush.msra.mxu0 %v1225
    %1323 = vmatpush.msra.mxu0 %v1221
    %1324 = vmatpush.msra.mxu0 %v1217
    %1325 = vmatpush.msra.mxu0 %v1213
    %1326 = vmatpush.msra.mxu0 %v1209
    %1327 = vmatmul.f32.gmra.mxu0 %v1206
    %v1328 = vpop.f32.mrf.mxu0
    %v1329 = vadd.f32 0.0, %v1328
    %1330 = vdwg.mxu0
    %1331 = vmatpush.msra.mxu0 %v1270
    %1332 = vmatpush.msra.mxu0 %v1266
    %1333 = vmatpush.msra.mxu0 %v1262
    %1334 = vmatpush.msra.mxu0 %v1258
    %1335 = vmatpush.msra.mxu0 %v1254
    %1336 = vmatpush.msra.mxu0 %v1250
    %1337 = vmatpush.msra.mxu0 %v1246
    %1338 = vmatpush.msra.mxu0 %v1242
    %1339 = vmatpush.msra.mxu0 %v1238
    %1340 = vmatpush.msra.mxu0 %v1234
    %1341 = vmatpush.msra.mxu0 %v1230
    %1342 = vmatpush.msra.mxu0 %v1226
    %1343 = vmatpush.msra.mxu0 %v1222
    %1344 = vmatpush.msra.mxu0 %v1218
    %1345 = vmatpush.msra.mxu0 %v1214
    %1346 = vmatpush.msra.mxu0 %v1210
    %1347 = vmatmul.f32.gmra.mxu0 %v1206
    %v1348 = vpop.f32.mrf.mxu0
    %v1349 = vadd.f32 0.0, %v1348
    %1350 = vdwg.mxu0
    %v1351 = vadd.f32 %v1202, %v1289
    %v1352 = vadd.f32 %v1203, %v1309
    %v1353 = vadd.f32 %v1204, %v1329
    %v1354 = vadd.f32 %v1205, %v1349
    %v1355 = vmul.f32 %v1351, 0.5
    %v1356 = vtanh.pop %v1355
    %v1357 = vmul.f32 %v1356, 0.5
    %v1358 = vadd.f32 %v1357, 0.5
    %v1359 = vmul.f32 %v1352, 0.5
    %v1360 = vtanh.pop %v1359
    %v1361 = vmul.f32 %v1360, 0.5
    %v1362 = vadd.f32 %v1361, 0.5
    %v1363 = vtanh.pop %v1353
    %v1364 = vmul.f32 %v1354, 0.5
    %v1365 = vtanh.pop %v1364
    %v1366 = vmul.f32 %v1365, 0.5
    %v1367 = vadd.f32 %v1366, 0.5
    %v1368 = vld [vmem:[#allocation4] sm:$0xff]
    %v1369 = vmul.f32 %v1362, %v1368
    %v1370 = vmul.f32 %v1358, %v1363
    %v1371 = vadd.f32 %v1369, %v1370
    %v1372 = vtanh.pop %v1371
    %v1373 = vmul.f32 %v1367, %v1372
    %1374 = vst [vmem:[#allocation4] sm:$0xff] %v1371
    %1375 = vst [vmem:[#allocation3] sm:$0xff] %v1373
    %s1376 = scalar_lea.vmem [#allocation13], 32
    %1377 = vst [vmem:[%s1376] sm:$0xff] %v1373
    %v1378 = vld [vmem:[#allocation2 + $0xa0] sm:$0xff]
    %v1379 = vld [vmem:[#allocation2 + $0xa8] sm:$0xff]
    %v1380 = vld [vmem:[#allocation2 + $0xb0] sm:$0xff]
    %v1381 = vld [vmem:[#allocation2 + $0xb8] sm:$0xff]
    %v1382 = vld [vmem:[#allocation3] sm:$0xff]
    %v1383 = vld [vmem:[#allocation11] sm:$0xff]
    %v1384 = vld [vmem:[#allocation11 + $0x8] sm:$0xff]
    %v1385 = vld [vmem:[#allocation11 + $0x10] sm:$0xff]
    %v1386 = vld [vmem:[#allocation11 + $0x18] sm:$0xff]
    %v1387 = vld [vmem:[#allocation11 + $0x20] sm:$0xff]
    %v1388 = vld [vmem:[#allocation11 + $0x28] sm:$0xff]
    %v1389 = vld [vmem:[#allocation11 + $0x30] sm:$0xff]
    %v1390 = vld [vmem:[#allocation11 + $0x38] sm:$0xff]
    %v1391 = vld [vmem:[#allocation11 + $0x40] sm:$0xff]
    %v1392 = vld [vmem:[#allocation11 + $0x48] sm:$0xff]
    %v1393 = vld [vmem:[#allocation11 + $0x50] sm:$0xff]
    %v1394 = vld [vmem:[#allocation11 + $0x58] sm:$0xff]
    %v1395 = vld [vmem:[#allocation11 + $0x60] sm:$0xff]
    %v1396 = vld [vmem:[#allocation11 + $0x68] sm:$0xff]
    %v1397 = vld [vmem:[#allocation11 + $0x70] sm:$0xff]
    %v1398 = vld [vmem:[#allocation11 + $0x78] sm:$0xff]
    %v1399 = vld [vmem:[#allocation11 + $0x80] sm:$0xff]
    %v1400 = vld [vmem:[#allocation11 + $0x88] sm:$0xff]
    %v1401 = vld [vmem:[#allocation11 + $0x90] sm:$0xff]
    %v1402 = vld [vmem:[#allocation11 + $0x98] sm:$0xff]
    %v1403 = vld [vmem:[#allocation11 + $0xa0] sm:$0xff]
    %v1404 = vld [vmem:[#allocation11 + $0xa8] sm:$0xff]
    %v1405 = vld [vmem:[#allocation11 + $0xb0] sm:$0xff]
    %v1406 = vld [vmem:[#allocation11 + $0xb8] sm:$0xff]
    %v1407 = vld [vmem:[#allocation11 + $0xc0] sm:$0xff]
    %v1408 = vld [vmem:[#allocation11 + $0xc8] sm:$0xff]
    %v1409 = vld [vmem:[#allocation11 + $0xd0] sm:$0xff]
    %v1410 = vld [vmem:[#allocation11 + $0xd8] sm:$0xff]
    %v1411 = vld [vmem:[#allocation11 + $0xe0] sm:$0xff]
    %v1412 = vld [vmem:[#allocation11 + $0xe8] sm:$0xff]
    %v1413 = vld [vmem:[#allocation11 + $0xf0] sm:$0xff]
    %v1414 = vld [vmem:[#allocation11 + $0xf8] sm:$0xff]
    %v1415 = vld [vmem:[#allocation11 + $0x100] sm:$0xff]
    %v1416 = vld [vmem:[#allocation11 + $0x108] sm:$0xff]
    %v1417 = vld [vmem:[#allocation11 + $0x110] sm:$0xff]
    %v1418 = vld [vmem:[#allocation11 + $0x118] sm:$0xff]
    %v1419 = vld [vmem:[#allocation11 + $0x120] sm:$0xff]
    %v1420 = vld [vmem:[#allocation11 + $0x128] sm:$0xff]
    %v1421 = vld [vmem:[#allocation11 + $0x130] sm:$0xff]
    %v1422 = vld [vmem:[#allocation11 + $0x138] sm:$0xff]
    %v1423 = vld [vmem:[#allocation11 + $0x140] sm:$0xff]
    %v1424 = vld [vmem:[#allocation11 + $0x148] sm:$0xff]
    %v1425 = vld [vmem:[#allocation11 + $0x150] sm:$0xff]
    %v1426 = vld [vmem:[#allocation11 + $0x158] sm:$0xff]
    %v1427 = vld [vmem:[#allocation11 + $0x160] sm:$0xff]
    %v1428 = vld [vmem:[#allocation11 + $0x168] sm:$0xff]
    %v1429 = vld [vmem:[#allocation11 + $0x170] sm:$0xff]
    %v1430 = vld [vmem:[#allocation11 + $0x178] sm:$0xff]
    %v1431 = vld [vmem:[#allocation11 + $0x180] sm:$0xff]
    %v1432 = vld [vmem:[#allocation11 + $0x188] sm:$0xff]
    %v1433 = vld [vmem:[#allocation11 + $0x190] sm:$0xff]
    %v1434 = vld [vmem:[#allocation11 + $0x198] sm:$0xff]
    %v1435 = vld [vmem:[#allocation11 + $0x1a0] sm:$0xff]
    %v1436 = vld [vmem:[#allocation11 + $0x1a8] sm:$0xff]
    %v1437 = vld [vmem:[#allocation11 + $0x1b0] sm:$0xff]
    %v1438 = vld [vmem:[#allocation11 + $0x1b8] sm:$0xff]
    %v1439 = vld [vmem:[#allocation11 + $0x1c0] sm:$0xff]
    %v1440 = vld [vmem:[#allocation11 + $0x1c8] sm:$0xff]
    %v1441 = vld [vmem:[#allocation11 + $0x1d0] sm:$0xff]
    %v1442 = vld [vmem:[#allocation11 + $0x1d8] sm:$0xff]
    %v1443 = vld [vmem:[#allocation11 + $0x1e0] sm:$0xff]
    %v1444 = vld [vmem:[#allocation11 + $0x1e8] sm:$0xff]
    %v1445 = vld [vmem:[#allocation11 + $0x1f0] sm:$0xff]
    %v1446 = vld [vmem:[#allocation11 + $0x1f8] sm:$0xff]
    %1447 = vmatpush.msra.mxu0 %v1443
    %1448 = vmatpush.msra.mxu0 %v1439
    %1449 = vmatpush.msra.mxu0 %v1435
    %1450 = vmatpush.msra.mxu0 %v1431
    %1451 = vmatpush.msra.mxu0 %v1427
    %1452 = vmatpush.msra.mxu0 %v1423
    %1453 = vmatpush.msra.mxu0 %v1419
    %1454 = vmatpush.msra.mxu0 %v1415
    %1455 = vmatpush.msra.mxu0 %v1411
    %1456 = vmatpush.msra.mxu0 %v1407
    %1457 = vmatpush.msra.mxu0 %v1403
    %1458 = vmatpush.msra.mxu0 %v1399
    %1459 = vmatpush.msra.mxu0 %v1395
    %1460 = vmatpush.msra.mxu0 %v1391
    %1461 = vmatpush.msra.mxu0 %v1387
    %1462 = vmatpush.msra.mxu0 %v1383
    %1463 = vmatmul.f32.gmra.mxu0 %v1382
    %v1464 = vpop.f32.mrf.mxu0
    %v1465 = vadd.f32 0.0, %v1464
    %1466 = vdwg.mxu0
    %1467 = vmatpush.msra.mxu0 %v1444
    %1468 = vmatpush.msra.mxu0 %v1440
    %1469 = vmatpush.msra.mxu0 %v1436
    %1470 = vmatpush.msra.mxu0 %v1432
    %1471 = vmatpush.msra.mxu0 %v1428
    %1472 = vmatpush.msra.mxu0 %v1424
    %1473 = vmatpush.msra.mxu0 %v1420
    %1474 = vmatpush.msra.mxu0 %v1416
    %1475 = vmatpush.msra.mxu0 %v1412
    %1476 = vmatpush.msra.mxu0 %v1408
    %1477 = vmatpush.msra.mxu0 %v1404
    %1478 = vmatpush.msra.mxu0 %v1400
    %1479 = vmatpush.msra.mxu0 %v1396
    %1480 = vmatpush.msra.mxu0 %v1392
    %1481 = vmatpush.msra.mxu0 %v1388
    %1482 = vmatpush.msra.mxu0 %v1384
    %1483 = vmatmul.f32.gmra.mxu0 %v1382
    %v1484 = vpop.f32.mrf.mxu0
    %v1485 = vadd.f32 0.0, %v1484
    %1486 = vdwg.mxu0
    %1487 = vmatpush.msra.mxu0 %v1445
    %1488 = vmatpush.msra.mxu0 %v1441
    %1489 = vmatpush.msra.mxu0 %v1437
    %1490 = vmatpush.msra.mxu0 %v1433
    %1491 = vmatpush.msra.mxu0 %v1429
    %1492 = vmatpush.msra.mxu0 %v1425
    %1493 = vmatpush.msra.mxu0 %v1421
    %1494 = vmatpush.msra.mxu0 %v1417
    %1495 = vmatpush.msra.mxu0 %v1413
    %1496 = vmatpush.msra.mxu0 %v1409
    %1497 = vmatpush.msra.mxu0 %v1405
    %1498 = vmatpush.msra.mxu0 %v1401
    %1499 = vmatpush.msra.mxu0 %v1397
    %1500 = vmatpush.msra.mxu0 %v1393
    %1501 = vmatpush.msra.mxu0 %v1389
    %1502 = vmatpush.msra.mxu0 %v1385
    %1503 = vmatmul.f32.gmra.mxu0 %v1382
    %v1504 = vpop.f32.mrf.mxu0
    %v1505 = vadd.f32 0.0, %v1504
    %1506 = vdwg.mxu0
    %1507 = vmatpush.msra.mxu0 %v1446
    %1508 = vmatpush.msra.mxu0 %v1442
    %1509 = vmatpush.msra.mxu0 %v1438
    %1510 = vmatpush.msra.mxu0 %v1434
    %1511 = vmatpush.msra.mxu0 %v1430
    %1512 = vmatpush.msra.mxu0 %v1426
    %1513 = vmatpush.msra.mxu0 %v1422
    %1514 = vmatpush.msra.mxu0 %v1418
    %1515 = vmatpush.msra.mxu0 %v1414
    %1516 = vmatpush.msra.mxu0 %v1410
    %1517 = vmatpush.msra.mxu0 %v1406
    %1518 = vmatpush.msra.mxu0 %v1402
    %1519 = vmatpush.msra.mxu0 %v1398
    %1520 = vmatpush.msra.mxu0 %v1394
    %1521 = vmatpush.msra.mxu0 %v1390
    %1522 = vmatpush.msra.mxu0 %v1386
    %1523 = vmatmul.f32.gmra.mxu0 %v1382
    %v1524 = vpop.f32.mrf.mxu0
    %v1525 = vadd.f32 0.0, %v1524
    %1526 = vdwg.mxu0
    %v1527 = vadd.f32 %v1378, %v1465
    %v1528 = vadd.f32 %v1379, %v1485
    %v1529 = vadd.f32 %v1380, %v1505
    %v1530 = vadd.f32 %v1381, %v1525
    %v1531 = vmul.f32 %v1527, 0.5
    %v1532 = vtanh.pop %v1531
    %v1533 = vmul.f32 %v1532, 0.5
    %v1534 = vadd.f32 %v1533, 0.5
    %v1535 = vmul.f32 %v1528, 0.5
    %v1536 = vtanh.pop %v1535
    %v1537 = vmul.f32 %v1536, 0.5
    %v1538 = vadd.f32 %v1537, 0.5
    %v1539 = vtanh.pop %v1529
    %v1540 = vmul.f32 %v1530, 0.5
    %v1541 = vtanh.pop %v1540
    %v1542 = vmul.f32 %v1541, 0.5
    %v1543 = vadd.f32 %v1542, 0.5
    %v1544 = vld [vmem:[#allocation4] sm:$0xff]
    %v1545 = vmul.f32 %v1538, %v1544
    %v1546 = vmul.f32 %v1534, %v1539
    %v1547 = vadd.f32 %v1545, %v1546
    %v1548 = vtanh.pop %v1547
    %v1549 = vmul.f32 %v1543, %v1548
    %1550 = vst [vmem:[#allocation4] sm:$0xff] %v1547
    %1551 = vst [vmem:[#allocation3] sm:$0xff] %v1549
    %s1552 = scalar_lea.vmem [#allocation13], 40
    %1553 = vst [vmem:[%s1552] sm:$0xff] %v1549
    %v1554 = vld [vmem:[#allocation2 + $0xc0] sm:$0xff]
    %v1555 = vld [vmem:[#allocation2 + $0xc8] sm:$0xff]
    %v1556 = vld [vmem:[#allocation2 + $0xd0] sm:$0xff]
    %v1557 = vld [vmem:[#allocation2 + $0xd8] sm:$0xff]
    %v1558 = vld [vmem:[#allocation3] sm:$0xff]
    %v1559 = vld [vmem:[#allocation11] sm:$0xff]
    %v1560 = vld [vmem:[#allocation11 + $0x8] sm:$0xff]
    %v1561 = vld [vmem:[#allocation11 + $0x10] sm:$0xff]
    %v1562 = vld [vmem:[#allocation11 + $0x18] sm:$0xff]
    %v1563 = vld [vmem:[#allocation11 + $0x20] sm:$0xff]
    %v1564 = vld [vmem:[#allocation11 + $0x28] sm:$0xff]
    %v1565 = vld [vmem:[#allocation11 + $0x30] sm:$0xff]
    %v1566 = vld [vmem:[#allocation11 + $0x38] sm:$0xff]
    %v1567 = vld [vmem:[#allocation11 + $0x40] sm:$0xff]
    %v1568 = vld [vmem:[#allocation11 + $0x48] sm:$0xff]
    %v1569 = vld [vmem:[#allocation11 + $0x50] sm:$0xff]
    %v1570 = vld [vmem:[#allocation11 + $0x58] sm:$0xff]
    %v1571 = vld [vmem:[#allocation11 + $0x60] sm:$0xff]
    %v1572 = vld [vmem:[#allocation11 + $0x68] sm:$0xff]
    %v1573 = vld [vmem:[#allocation11 + $0x70] sm:$0xff]
    %v1574 = vld [vmem:[#allocation11 + $0x78] sm:$0xff]
    %v1575 = vld [vmem:[#allocation11 + $0x80] sm:$0xff]
    %v1576 = vld [vmem:[#allocation11 + $0x88] sm:$0xff]
    %v1577 = vld [vmem:[#allocation11 + $0x90] sm:$0xff]
    %v1578 = vld [vmem:[#allocation11 + $0x98] sm:$0xff]
    %v1579 = vld [vmem:[#allocation11 + $0xa0] sm:$0xff]
    %v1580 = vld [vmem:[#allocation11 + $0xa8] sm:$0xff]
    %v1581 = vld [vmem:[#allocation11 + $0xb0] sm:$0xff]
    %v1582 = vld [vmem:[#allocation11 + $0xb8] sm:$0xff]
    %v1583 = vld [vmem:[#allocation11 + $0xc0] sm:$0xff]
    %v1584 = vld [vmem:[#allocation11 + $0xc8] sm:$0xff]
    %v1585 = vld [vmem:[#allocation11 + $0xd0] sm:$0xff]
    %v1586 = vld [vmem:[#allocation11 + $0xd8] sm:$0xff]
    %v1587 = vld [vmem:[#allocation11 + $0xe0] sm:$0xff]
    %v1588 = vld [vmem:[#allocation11 + $0xe8] sm:$0xff]
    %v1589 = vld [vmem:[#allocation11 + $0xf0] sm:$0xff]
    %v1590 = vld [vmem:[#allocation11 + $0xf8] sm:$0xff]
    %v1591 = vld [vmem:[#allocation11 + $0x100] sm:$0xff]
    %v1592 = vld [vmem:[#allocation11 + $0x108] sm:$0xff]
    %v1593 = vld [vmem:[#allocation11 + $0x110] sm:$0xff]
    %v1594 = vld [vmem:[#allocation11 + $0x118] sm:$0xff]
    %v1595 = vld [vmem:[#allocation11 + $0x120] sm:$0xff]
    %v1596 = vld [vmem:[#allocation11 + $0x128] sm:$0xff]
    %v1597 = vld [vmem:[#allocation11 + $0x130] sm:$0xff]
    %v1598 = vld [vmem:[#allocation11 + $0x138] sm:$0xff]
    %v1599 = vld [vmem:[#allocation11 + $0x140] sm:$0xff]
    %v1600 = vld [vmem:[#allocation11 + $0x148] sm:$0xff]
    %v1601 = vld [vmem:[#allocation11 + $0x150] sm:$0xff]
    %v1602 = vld [vmem:[#allocation11 + $0x158] sm:$0xff]
    %v1603 = vld [vmem:[#allocation11 + $0x160] sm:$0xff]
    %v1604 = vld [vmem:[#allocation11 + $0x168] sm:$0xff]
    %v1605 = vld [vmem:[#allocation11 + $0x170] sm:$0xff]
    %v1606 = vld [vmem:[#allocation11 + $0x178] sm:$0xff]
    %v1607 = vld [vmem:[#allocation11 + $0x180] sm:$0xff]
    %v1608 = vld [vmem:[#allocation11 + $0x188] sm:$0xff]
    %v1609 = vld [vmem:[#allocation11 + $0x190] sm:$0xff]
    %v1610 = vld [vmem:[#allocation11 + $0x198] sm:$0xff]
    %v1611 = vld [vmem:[#allocation11 + $0x1a0] sm:$0xff]
    %v1612 = vld [vmem:[#allocation11 + $0x1a8] sm:$0xff]
    %v1613 = vld [vmem:[#allocation11 + $0x1b0] sm:$0xff]
    %v1614 = vld [vmem:[#allocation11 + $0x1b8] sm:$0xff]
    %v1615 = vld [vmem:[#allocation11 + $0x1c0] sm:$0xff]
    %v1616 = vld [vmem:[#allocation11 + $0x1c8] sm:$0xff]
    %v1617 = vld [vmem:[#allocation11 + $0x1d0] sm:$0xff]
    %v1618 = vld [vmem:[#allocation11 + $0x1d8] sm:$0xff]
    %v1619 = vld [vmem:[#allocation11 + $0x1e0] sm:$0xff]
    %v1620 = vld [vmem:[#allocation11 + $0x1e8] sm:$0xff]
    %v1621 = vld [vmem:[#allocation11 + $0x1f0] sm:$0xff]
    %v1622 = vld [vmem:[#allocation11 + $0x1f8] sm:$0xff]
    %1623 = vmatpush.msra.mxu0 %v1619
    %1624 = vmatpush.msra.mxu0 %v1615
    %1625 = vmatpush.msra.mxu0 %v1611
    %1626 = vmatpush.msra.mxu0 %v1607
    %1627 = vmatpush.msra.mxu0 %v1603
    %1628 = vmatpush.msra.mxu0 %v1599
    %1629 = vmatpush.msra.mxu0 %v1595
    %1630 = vmatpush.msra.mxu0 %v1591
    %1631 = vmatpush.msra.mxu0 %v1587
    %1632 = vmatpush.msra.mxu0 %v1583
    %1633 = vmatpush.msra.mxu0 %v1579
    %1634 = vmatpush.msra.mxu0 %v1575
    %1635 = vmatpush.msra.mxu0 %v1571
    %1636 = vmatpush.msra.mxu0 %v1567
    %1637 = vmatpush.msra.mxu0 %v1563
    %1638 = vmatpush.msra.mxu0 %v1559
    %1639 = vmatmul.f32.gmra.mxu0 %v1558
    %v1640 = vpop.f32.mrf.mxu0
    %v1641 = vadd.f32 0.0, %v1640
    %1642 = vdwg.mxu0
    %1643 = vmatpush.msra.mxu0 %v1620
    %1644 = vmatpush.msra.mxu0 %v1616
    %1645 = vmatpush.msra.mxu0 %v1612
    %1646 = vmatpush.msra.mxu0 %v1608
    %1647 = vmatpush.msra.mxu0 %v1604
    %1648 = vmatpush.msra.mxu0 %v1600
    %1649 = vmatpush.msra.mxu0 %v1596
    %1650 = vmatpush.msra.mxu0 %v1592
    %1651 = vmatpush.msra.mxu0 %v1588
    %1652 = vmatpush.msra.mxu0 %v1584
    %1653 = vmatpush.msra.mxu0 %v1580
    %1654 = vmatpush.msra.mxu0 %v1576
    %1655 = vmatpush.msra.mxu0 %v1572
    %1656 = vmatpush.msra.mxu0 %v1568
    %1657 = vmatpush.msra.mxu0 %v1564
    %1658 = vmatpush.msra.mxu0 %v1560
    %1659 = vmatmul.f32.gmra.mxu0 %v1558
    %v1660 = vpop.f32.mrf.mxu0
    %v1661 = vadd.f32 0.0, %v1660
    %1662 = vdwg.mxu0
    %1663 = vmatpush.msra.mxu0 %v1621
    %1664 = vmatpush.msra.mxu0 %v1617
    %1665 = vmatpush.msra.mxu0 %v1613
    %1666 = vmatpush.msra.mxu0 %v1609
    %1667 = vmatpush.msra.mxu0 %v1605
    %1668 = vmatpush.msra.mxu0 %v1601
    %1669 = vmatpush.msra.mxu0 %v1597
    %1670 = vmatpush.msra.mxu0 %v1593
    %1671 = vmatpush.msra.mxu0 %v1589
    %1672 = vmatpush.msra.mxu0 %v1585
    %1673 = vmatpush.msra.mxu0 %v1581
    %1674 = vmatpush.msra.mxu0 %v1577
    %1675 = vmatpush.msra.mxu0 %v1573
    %1676 = vmatpush.msra.mxu0 %v1569
    %1677 = vmatpush.msra.mxu0 %v1565
    %1678 = vmatpush.msra.mxu0 %v1561
    %1679 = vmatmul.f32.gmra.mxu0 %v1558
    %v1680 = vpop.f32.mrf.mxu0
    %v1681 = vadd.f32 0.0, %v1680
    %1682 = vdwg.mxu0
    %1683 = vmatpush.msra.mxu0 %v1622
    %1684 = vmatpush.msra.mxu0 %v1618
    %1685 = vmatpush.msra.mxu0 %v1614
    %1686 = vmatpush.msra.mxu0 %v1610
    %1687 = vmatpush.msra.mxu0 %v1606
    %1688 = vmatpush.msra.mxu0 %v1602
    %1689 = vmatpush.msra.mxu0 %v1598
    %1690 = vmatpush.msra.mxu0 %v1594
    %1691 = vmatpush.msra.mxu0 %v1590
    %1692 = vmatpush.msra.mxu0 %v1586
    %1693 = vmatpush.msra.mxu0 %v1582
    %1694 = vmatpush.msra.mxu0 %v1578
    %1695 = vmatpush.msra.mxu0 %v1574
    %1696 = vmatpush.msra.mxu0 %v1570
    %1697 = vmatpush.msra.mxu0 %v1566
    %1698 = vmatpush.msra.mxu0 %v1562
    %1699 = vmatmul.f32.gmra.mxu0 %v1558
    %v1700 = vpop.f32.mrf.mxu0
    %v1701 = vadd.f32 0.0, %v1700
    %1702 = vdwg.mxu0
    %v1703 = vadd.f32 %v1554, %v1641
    %v1704 = vadd.f32 %v1555, %v1661
    %v1705 = vadd.f32 %v1556, %v1681
    %v1706 = vadd.f32 %v1557, %v1701
    %v1707 = vmul.f32 %v1703, 0.5
    %v1708 = vtanh.pop %v1707
    %v1709 = vmul.f32 %v1708, 0.5
    %v1710 = vadd.f32 %v1709, 0.5
    %v1711 = vmul.f32 %v1704, 0.5
    %v1712 = vtanh.pop %v1711
    %v1713 = vmul.f32 %v1712, 0.5
    %v1714 = vadd.f32 %v1713, 0.5
    %v1715 = vtanh.pop %v1705
    %v1716 = vmul.f32 %v1706, 0.5
    %v1717 = vtanh.pop %v1716
    %v1718 = vmul.f32 %v1717, 0.5
    %v1719 = vadd.f32 %v1718, 0.5
    %v1720 = vld [vmem:[#allocation4] sm:$0xff]
    %v1721 = vmul.f32 %v1714, %v1720
    %v1722 = vmul.f32 %v1710, %v1715
    %v1723 = vadd.f32 %v1721, %v1722
    %v1724 = vtanh.pop %v1723
    %v1725 = vmul.f32 %v1719, %v1724
    %1726 = vst [vmem:[#allocation4] sm:$0xff] %v1723
    %1727 = vst [vmem:[#allocation3] sm:$0xff] %v1725
    %s1728 = scalar_lea.vmem [#allocation13], 48
    %1729 = vst [vmem:[%s1728] sm:$0xff] %v1725
    %v1730 = vld [vmem:[#allocation2 + $0xe0] sm:$0xff]
    %v1731 = vld [vmem:[#allocation2 + $0xe8] sm:$0xff]
    %v1732 = vld [vmem:[#allocation2 + $0xf0] sm:$0xff]
    %v1733 = vld [vmem:[#allocation2 + $0xf8] sm:$0xff]
    %v1734 = vld [vmem:[#allocation3] sm:$0xff]
    %v1735 = vld [vmem:[#allocation11] sm:$0xff]
    %v1736 = vld [vmem:[#allocation11 + $0x8] sm:$0xff]
    %v1737 = vld [vmem:[#allocation11 + $0x10] sm:$0xff]
    %v1738 = vld [vmem:[#allocation11 + $0x18] sm:$0xff]
    %v1739 = vld [vmem:[#allocation11 + $0x20] sm:$0xff]
    %v1740 = vld [vmem:[#allocation11 + $0x28] sm:$0xff]
    %v1741 = vld [vmem:[#allocation11 + $0x30] sm:$0xff]
    %v1742 = vld [vmem:[#allocation11 + $0x38] sm:$0xff]
    %v1743 = vld [vmem:[#allocation11 + $0x40] sm:$0xff]
    %v1744 = vld [vmem:[#allocation11 + $0x48] sm:$0xff]
    %v1745 = vld [vmem:[#allocation11 + $0x50] sm:$0xff]
    %v1746 = vld [vmem:[#allocation11 + $0x58] sm:$0xff]
    %v1747 = vld [vmem:[#allocation11 + $0x60] sm:$0xff]
    %v1748 = vld [vmem:[#allocation11 + $0x68] sm:$0xff]
    %v1749 = vld [vmem:[#allocation11 + $0x70] sm:$0xff]
    %v1750 = vld [vmem:[#allocation11 + $0x78] sm:$0xff]
    %v1751 = vld [vmem:[#allocation11 + $0x80] sm:$0xff]
    %v1752 = vld [vmem:[#allocation11 + $0x88] sm:$0xff]
    %v1753 = vld [vmem:[#allocation11 + $0x90] sm:$0xff]
    %v1754 = vld [vmem:[#allocation11 + $0x98] sm:$0xff]
    %v1755 = vld [vmem:[#allocation11 + $0xa0] sm:$0xff]
    %v1756 = vld [vmem:[#allocation11 + $0xa8] sm:$0xff]
    %v1757 = vld [vmem:[#allocation11 + $0xb0] sm:$0xff]
    %v1758 = vld [vmem:[#allocation11 + $0xb8] sm:$0xff]
    %v1759 = vld [vmem:[#allocation11 + $0xc0] sm:$0xff]
    %v1760 = vld [vmem:[#allocation11 + $0xc8] sm:$0xff]
    %v1761 = vld [vmem:[#allocation11 + $0xd0] sm:$0xff]
    %v1762 = vld [vmem:[#allocation11 + $0xd8] sm:$0xff]
    %v1763 = vld [vmem:[#allocation11 + $0xe0] sm:$0xff]
    %v1764 = vld [vmem:[#allocation11 + $0xe8] sm:$0xff]
    %v1765 = vld [vmem:[#allocation11 + $0xf0] sm:$0xff]
    %v1766 = vld [vmem:[#allocation11 + $0xf8] sm:$0xff]
    %v1767 = vld [vmem:[#allocation11 + $0x100] sm:$0xff]
    %v1768 = vld [vmem:[#allocation11 + $0x108] sm:$0xff]
    %v1769 = vld [vmem:[#allocation11 + $0x110] sm:$0xff]
    %v1770 = vld [vmem:[#allocation11 + $0x118] sm:$0xff]
    %v1771 = vld [vmem:[#allocation11 + $0x120] sm:$0xff]
    %v1772 = vld [vmem:[#allocation11 + $0x128] sm:$0xff]
    %v1773 = vld [vmem:[#allocation11 + $0x130] sm:$0xff]
    %v1774 = vld [vmem:[#allocation11 + $0x138] sm:$0xff]
    %v1775 = vld [vmem:[#allocation11 + $0x140] sm:$0xff]
    %v1776 = vld [vmem:[#allocation11 + $0x148] sm:$0xff]
    %v1777 = vld [vmem:[#allocation11 + $0x150] sm:$0xff]
    %v1778 = vld [vmem:[#allocation11 + $0x158] sm:$0xff]
    %v1779 = vld [vmem:[#allocation11 + $0x160] sm:$0xff]
    %v1780 = vld [vmem:[#allocation11 + $0x168] sm:$0xff]
    %v1781 = vld [vmem:[#allocation11 + $0x170] sm:$0xff]
    %v1782 = vld [vmem:[#allocation11 + $0x178] sm:$0xff]
    %v1783 = vld [vmem:[#allocation11 + $0x180] sm:$0xff]
    %v1784 = vld [vmem:[#allocation11 + $0x188] sm:$0xff]
    %v1785 = vld [vmem:[#allocation11 + $0x190] sm:$0xff]
    %v1786 = vld [vmem:[#allocation11 + $0x198] sm:$0xff]
    %v1787 = vld [vmem:[#allocation11 + $0x1a0] sm:$0xff]
    %v1788 = vld [vmem:[#allocation11 + $0x1a8] sm:$0xff]
    %v1789 = vld [vmem:[#allocation11 + $0x1b0] sm:$0xff]
    %v1790 = vld [vmem:[#allocation11 + $0x1b8] sm:$0xff]
    %v1791 = vld [vmem:[#allocation11 + $0x1c0] sm:$0xff]
    %v1792 = vld [vmem:[#allocation11 + $0x1c8] sm:$0xff]
    %v1793 = vld [vmem:[#allocation11 + $0x1d0] sm:$0xff]
    %v1794 = vld [vmem:[#allocation11 + $0x1d8] sm:$0xff]
    %v1795 = vld [vmem:[#allocation11 + $0x1e0] sm:$0xff]
    %v1796 = vld [vmem:[#allocation11 + $0x1e8] sm:$0xff]
    %v1797 = vld [vmem:[#allocation11 + $0x1f0] sm:$0xff]
    %v1798 = vld [vmem:[#allocation11 + $0x1f8] sm:$0xff]
    %1799 = vmatpush.msra.mxu0 %v1795
    %1800 = vmatpush.msra.mxu0 %v1791
    %1801 = vmatpush.msra.mxu0 %v1787
    %1802 = vmatpush.msra.mxu0 %v1783
    %1803 = vmatpush.msra.mxu0 %v1779
    %1804 = vmatpush.msra.mxu0 %v1775
    %1805 = vmatpush.msra.mxu0 %v1771
    %1806 = vmatpush.msra.mxu0 %v1767
    %1807 = vmatpush.msra.mxu0 %v1763
    %1808 = vmatpush.msra.mxu0 %v1759
    %1809 = vmatpush.msra.mxu0 %v1755
    %1810 = vmatpush.msra.mxu0 %v1751
    %1811 = vmatpush.msra.mxu0 %v1747
    %1812 = vmatpush.msra.mxu0 %v1743
    %1813 = vmatpush.msra.mxu0 %v1739
    %1814 = vmatpush.msra.mxu0 %v1735
    %1815 = vmatmul.f32.gmra.mxu0 %v1734
    %v1816 = vpop.f32.mrf.mxu0
    %v1817 = vadd.f32 0.0, %v1816
    %1818 = vdwg.mxu0
    %1819 = vmatpush.msra.mxu0 %v1796
    %1820 = vmatpush.msra.mxu0 %v1792
    %1821 = vmatpush.msra.mxu0 %v1788
    %1822 = vmatpush.msra.mxu0 %v1784
    %1823 = vmatpush.msra.mxu0 %v1780
    %1824 = vmatpush.msra.mxu0 %v1776
    %1825 = vmatpush.msra.mxu0 %v1772
    %1826 = vmatpush.msra.mxu0 %v1768
    %1827 = vmatpush.msra.mxu0 %v1764
    %1828 = vmatpush.msra.mxu0 %v1760
    %1829 = vmatpush.msra.mxu0 %v1756
    %1830 = vmatpush.msra.mxu0 %v1752
    %1831 = vmatpush.msra.mxu0 %v1748
    %1832 = vmatpush.msra.mxu0 %v1744
    %1833 = vmatpush.msra.mxu0 %v1740
    %1834 = vmatpush.msra.mxu0 %v1736
    %1835 = vmatmul.f32.gmra.mxu0 %v1734
    %v1836 = vpop.f32.mrf.mxu0
    %v1837 = vadd.f32 0.0, %v1836
    %1838 = vdwg.mxu0
    %1839 = vmatpush.msra.mxu0 %v1797
    %1840 = vmatpush.msra.mxu0 %v1793
    %1841 = vmatpush.msra.mxu0 %v1789
    %1842 = vmatpush.msra.mxu0 %v1785
    %1843 = vmatpush.msra.mxu0 %v1781
    %1844 = vmatpush.msra.mxu0 %v1777
    %1845 = vmatpush.msra.mxu0 %v1773
    %1846 = vmatpush.msra.mxu0 %v1769
    %1847 = vmatpush.msra.mxu0 %v1765
    %1848 = vmatpush.msra.mxu0 %v1761
    %1849 = vmatpush.msra.mxu0 %v1757
    %1850 = vmatpush.msra.mxu0 %v1753
    %1851 = vmatpush.msra.mxu0 %v1749
    %1852 = vmatpush.msra.mxu0 %v1745
    %1853 = vmatpush.msra.mxu0 %v1741
    %1854 = vmatpush.msra.mxu0 %v1737
    %1855 = vmatmul.f32.gmra.mxu0 %v1734
    %v1856 = vpop.f32.mrf.mxu0
    %v1857 = vadd.f32 0.0, %v1856
    %1858 = vdwg.mxu0
    %1859 = vmatpush.msra.mxu0 %v1798
    %1860 = vmatpush.msra.mxu0 %v1794
    %1861 = vmatpush.msra.mxu0 %v1790
    %1862 = vmatpush.msra.mxu0 %v1786
    %1863 = vmatpush.msra.mxu0 %v1782
    %1864 = vmatpush.msra.mxu0 %v1778
    %1865 = vmatpush.msra.mxu0 %v1774
    %1866 = vmatpush.msra.mxu0 %v1770
    %1867 = vmatpush.msra.mxu0 %v1766
    %1868 = vmatpush.msra.mxu0 %v1762
    %1869 = vmatpush.msra.mxu0 %v1758
    %1870 = vmatpush.msra.mxu0 %v1754
    %1871 = vmatpush.msra.mxu0 %v1750
    %1872 = vmatpush.msra.mxu0 %v1746
    %1873 = vmatpush.msra.mxu0 %v1742
    %1874 = vmatpush.msra.mxu0 %v1738
    %1875 = vmatmul.f32.gmra.mxu0 %v1734
    %v1876 = vpop.f32.mrf.mxu0
    %v1877 = vadd.f32 0.0, %v1876
    %1878 = vdwg.mxu0
    %v1879 = vadd.f32 %v1730, %v1817
    %v1880 = vadd.f32 %v1731, %v1837
    %v1881 = vadd.f32 %v1732, %v1857
    %v1882 = vadd.f32 %v1733, %v1877
    %v1883 = vmul.f32 %v1879, 0.5
    %v1884 = vtanh.pop %v1883
    %v1885 = vmul.f32 %v1884, 0.5
    %v1886 = vadd.f32 %v1885, 0.5
    %v1887 = vmul.f32 %v1880, 0.5
    %v1888 = vtanh.pop %v1887
    %v1889 = vmul.f32 %v1888, 0.5
    %v1890 = vadd.f32 %v1889, 0.5
    %v1891 = vtanh.pop %v1881
    %v1892 = vmul.f32 %v1882, 0.5
    %v1893 = vtanh.pop %v1892
    %v1894 = vmul.f32 %v1893, 0.5
    %v1895 = vadd.f32 %v1894, 0.5
    %v1896 = vld [vmem:[#allocation4] sm:$0xff]
    %v1897 = vmul.f32 %v1890, %v1896
    %v1898 = vmul.f32 %v1886, %v1891
    %v1899 = vadd.f32 %v1897, %v1898
    %v1900 = vtanh.pop %v1899
    %v1901 = vmul.f32 %v1895, %v1900
    %1902 = vst [vmem:[#allocation4] sm:$0xff] %v1899
    %1903 = vst [vmem:[#allocation3] sm:$0xff] %v1901
    %s1904 = scalar_lea.vmem [#allocation13], 56
    %1905 = vst [vmem:[%s1904] sm:$0xff] %v1901
    %v1906 = vld [vmem:[#allocation2 + $0x100] sm:$0xff]
    %v1907 = vld [vmem:[#allocation2 + $0x108] sm:$0xff]
    %v1908 = vld [vmem:[#allocation2 + $0x110] sm:$0xff]
    %v1909 = vld [vmem:[#allocation2 + $0x118] sm:$0xff]
    %v1910 = vld [vmem:[#allocation3] sm:$0xff]
    %v1911 = vld [vmem:[#allocation11] sm:$0xff]
    %v1912 = vld [vmem:[#allocation11 + $0x8] sm:$0xff]
    %v1913 = vld [vmem:[#allocation11 + $0x10] sm:$0xff]
    %v1914 = vld [vmem:[#allocation11 + $0x18] sm:$0xff]
    %v1915 = vld [vmem:[#allocation11 + $0x20] sm:$0xff]
    %v1916 = vld [vmem:[#allocation11 + $0x28] sm:$0xff]
    %v1917 = vld [vmem:[#allocation11 + $0x30] sm:$0xff]
    %v1918 = vld [vmem:[#allocation11 + $0x38] sm:$0xff]
    %v1919 = vld [vmem:[#allocation11 + $0x40] sm:$0xff]
    %v1920 = vld [vmem:[#allocation11 + $0x48] sm:$0xff]
    %v1921 = vld [vmem:[#allocation11 + $0x50] sm:$0xff]
    %v1922 = vld [vmem:[#allocation11 + $0x58] sm:$0xff]
    %v1923 = vld [vmem:[#allocation11 + $0x60] sm:$0xff]
    %v1924 = vld [vmem:[#allocation11 + $0x68] sm:$0xff]
    %v1925 = vld [vmem:[#allocation11 + $0x70] sm:$0xff]
    %v1926 = vld [vmem:[#allocation11 + $0x78] sm:$0xff]
    %v1927 = vld [vmem:[#allocation11 + $0x80] sm:$0xff]
    %v1928 = vld [vmem:[#allocation11 + $0x88] sm:$0xff]
    %v1929 = vld [vmem:[#allocation11 + $0x90] sm:$0xff]
    %v1930 = vld [vmem:[#allocation11 + $0x98] sm:$0xff]
    %v1931 = vld [vmem:[#allocation11 + $0xa0] sm:$0xff]
    %v1932 = vld [vmem:[#allocation11 + $0xa8] sm:$0xff]
    %v1933 = vld [vmem:[#allocation11 + $0xb0] sm:$0xff]
    %v1934 = vld [vmem:[#allocation11 + $0xb8] sm:$0xff]
    %v1935 = vld [vmem:[#allocation11 + $0xc0] sm:$0xff]
    %v1936 = vld [vmem:[#allocation11 + $0xc8] sm:$0xff]
    %v1937 = vld [vmem:[#allocation11 + $0xd0] sm:$0xff]
    %v1938 = vld [vmem:[#allocation11 + $0xd8] sm:$0xff]
    %v1939 = vld [vmem:[#allocation11 + $0xe0] sm:$0xff]
    %v1940 = vld [vmem:[#allocation11 + $0xe8] sm:$0xff]
    %v1941 = vld [vmem:[#allocation11 + $0xf0] sm:$0xff]
    %v1942 = vld [vmem:[#allocation11 + $0xf8] sm:$0xff]
    %v1943 = vld [vmem:[#allocation11 + $0x100] sm:$0xff]
    %v1944 = vld [vmem:[#allocation11 + $0x108] sm:$0xff]
    %v1945 = vld [vmem:[#allocation11 + $0x110] sm:$0xff]
    %v1946 = vld [vmem:[#allocation11 + $0x118] sm:$0xff]
    %v1947 = vld [vmem:[#allocation11 + $0x120] sm:$0xff]
    %v1948 = vld [vmem:[#allocation11 + $0x128] sm:$0xff]
    %v1949 = vld [vmem:[#allocation11 + $0x130] sm:$0xff]
    %v1950 = vld [vmem:[#allocation11 + $0x138] sm:$0xff]
    %v1951 = vld [vmem:[#allocation11 + $0x140] sm:$0xff]
    %v1952 = vld [vmem:[#allocation11 + $0x148] sm:$0xff]
    %v1953 = vld [vmem:[#allocation11 + $0x150] sm:$0xff]
    %v1954 = vld [vmem:[#allocation11 + $0x158] sm:$0xff]
    %v1955 = vld [vmem:[#allocation11 + $0x160] sm:$0xff]
    %v1956 = vld [vmem:[#allocation11 + $0x168] sm:$0xff]
    %v1957 = vld [vmem:[#allocation11 + $0x170] sm:$0xff]
    %v1958 = vld [vmem:[#allocation11 + $0x178] sm:$0xff]
    %v1959 = vld [vmem:[#allocation11 + $0x180] sm:$0xff]
    %v1960 = vld [vmem:[#allocation11 + $0x188] sm:$0xff]
    %v1961 = vld [vmem:[#allocation11 + $0x190] sm:$0xff]
    %v1962 = vld [vmem:[#allocation11 + $0x198] sm:$0xff]
    %v1963 = vld [vmem:[#allocation11 + $0x1a0] sm:$0xff]
    %v1964 = vld [vmem:[#allocation11 + $0x1a8] sm:$0xff]
    %v1965 = vld [vmem:[#allocation11 + $0x1b0] sm:$0xff]
    %v1966 = vld [vmem:[#allocation11 + $0x1b8] sm:$0xff]
    %v1967 = vld [vmem:[#allocation11 + $0x1c0] sm:$0xff]
    %v1968 = vld [vmem:[#allocation11 + $0x1c8] sm:$0xff]
    %v1969 = vld [vmem:[#allocation11 + $0x1d0] sm:$0xff]
    %v1970 = vld [vmem:[#allocation11 + $0x1d8] sm:$0xff]
    %v1971 = vld [vmem:[#allocation11 + $0x1e0] sm:$0xff]
    %v1972 = vld [vmem:[#allocation11 + $0x1e8] sm:$0xff]
    %v1973 = vld [vmem:[#allocation11 + $0x1f0] sm:$0xff]
    %v1974 = vld [vmem:[#allocation11 + $0x1f8] sm:$0xff]
    %1975 = vmatpush.msra.mxu0 %v1971
    %1976 = vmatpush.msra.mxu0 %v1967
    %1977 = vmatpush.msra.mxu0 %v1963
    %1978 = vmatpush.msra.mxu0 %v1959
    %1979 = vmatpush.msra.mxu0 %v1955
    %1980 = vmatpush.msra.mxu0 %v1951
    %1981 = vmatpush.msra.mxu0 %v1947
    %1982 = vmatpush.msra.mxu0 %v1943
    %1983 = vmatpush.msra.mxu0 %v1939
    %1984 = vmatpush.msra.mxu0 %v1935
    %1985 = vmatpush.msra.mxu0 %v1931
    %1986 = vmatpush.msra.mxu0 %v1927
    %1987 = vmatpush.msra.mxu0 %v1923
    %1988 = vmatpush.msra.mxu0 %v1919
    %1989 = vmatpush.msra.mxu0 %v1915
    %1990 = vmatpush.msra.mxu0 %v1911
    %1991 = vmatmul.f32.gmra.mxu0 %v1910
    %v1992 = vpop.f32.mrf.mxu0
    %v1993 = vadd.f32 0.0, %v1992
    %1994 = vdwg.mxu0
    %1995 = vmatpush.msra.mxu0 %v1972
    %1996 = vmatpush.msra.mxu0 %v1968
    %1997 = vmatpush.msra.mxu0 %v1964
    %1998 = vmatpush.msra.mxu0 %v1960
    %1999 = vmatpush.msra.mxu0 %v1956
    %2000 = vmatpush.msra.mxu0 %v1952
    %2001 = vmatpush.msra.mxu0 %v1948
    %2002 = vmatpush.msra.mxu0 %v1944
    %2003 = vmatpush.msra.mxu0 %v1940
    %2004 = vmatpush.msra.mxu0 %v1936
    %2005 = vmatpush.msra.mxu0 %v1932
    %2006 = vmatpush.msra.mxu0 %v1928
    %2007 = vmatpush.msra.mxu0 %v1924
    %2008 = vmatpush.msra.mxu0 %v1920
    %2009 = vmatpush.msra.mxu0 %v1916
    %2010 = vmatpush.msra.mxu0 %v1912
    %2011 = vmatmul.f32.gmra.mxu0 %v1910
    %v2012 = vpop.f32.mrf.mxu0
    %v2013 = vadd.f32 0.0, %v2012
    %2014 = vdwg.mxu0
    %2015 = vmatpush.msra.mxu0 %v1973
    %2016 = vmatpush.msra.mxu0 %v1969
    %2017 = vmatpush.msra.mxu0 %v1965
    %2018 = vmatpush.msra.mxu0 %v1961
    %2019 = vmatpush.msra.mxu0 %v1957
    %2020 = vmatpush.msra.mxu0 %v1953
    %2021 = vmatpush.msra.mxu0 %v1949
    %2022 = vmatpush.msra.mxu0 %v1945
    %2023 = vmatpush.msra.mxu0 %v1941
    %2024 = vmatpush.msra.mxu0 %v1937
    %2025 = vmatpush.msra.mxu0 %v1933
    %2026 = vmatpush.msra.mxu0 %v1929
    %2027 = vmatpush.msra.mxu0 %v1925
    %2028 = vmatpush.msra.mxu0 %v1921
    %2029 = vmatpush.msra.mxu0 %v1917
    %2030 = vmatpush.msra.mxu0 %v1913
    %2031 = vmatmul.f32.gmra.mxu0 %v1910
    %v2032 = vpop.f32.mrf.mxu0
    %v2033 = vadd.f32 0.0, %v2032
    %2034 = vdwg.mxu0
    %2035 = vmatpush.msra.mxu0 %v1974
    %2036 = vmatpush.msra.mxu0 %v1970
    %2037 = vmatpush.msra.mxu0 %v1966
    %2038 = vmatpush.msra.mxu0 %v1962
    %2039 = vmatpush.msra.mxu0 %v1958
    %2040 = vmatpush.msra.mxu0 %v1954
    %2041 = vmatpush.msra.mxu0 %v1950
    %2042 = vmatpush.msra.mxu0 %v1946
    %2043 = vmatpush.msra.mxu0 %v1942
    %2044 = vmatpush.msra.mxu0 %v1938
    %2045 = vmatpush.msra.mxu0 %v1934
    %2046 = vmatpush.msra.mxu0 %v1930
    %2047 = vmatpush.msra.mxu0 %v1926
    %2048 = vmatpush.msra.mxu0 %v1922
    %2049 = vmatpush.msra.mxu0 %v1918
    %2050 = vmatpush.msra.mxu0 %v1914
    %2051 = vmatmul.f32.gmra.mxu0 %v1910
    %v2052 = vpop.f32.mrf.mxu0
    %v2053 = vadd.f32 0.0, %v2052
    %2054 = vdwg.mxu0
    %v2055 = vadd.f32 %v1906, %v1993
    %v2056 = vadd.f32 %v1907, %v2013
    %v2057 = vadd.f32 %v1908, %v2033
    %v2058 = vadd.f32 %v1909, %v2053
    %v2059 = vmul.f32 %v2055, 0.5
    %v2060 = vtanh.pop %v2059
    %v2061 = vmul.f32 %v2060, 0.5
    %v2062 = vadd.f32 %v2061, 0.5
    %v2063 = vmul.f32 %v2056, 0.5
    %v2064 = vtanh.pop %v2063
    %v2065 = vmul.f32 %v2064, 0.5
    %v2066 = vadd.f32 %v2065, 0.5
    %v2067 = vtanh.pop %v2057
    %v2068 = vmul.f32 %v2058, 0.5
    %v2069 = vtanh.pop %v2068
    %v2070 = vmul.f32 %v2069, 0.5
    %v2071 = vadd.f32 %v2070, 0.5
    %v2072 = vld [vmem:[#allocation4] sm:$0xff]
    %v2073 = vmul.f32 %v2066, %v2072
    %v2074 = vmul.f32 %v2062, %v2067
    %v2075 = vadd.f32 %v2073, %v2074
    %v2076 = vtanh.pop %v2075
    %v2077 = vmul.f32 %v2071, %v2076
    %2078 = vst [vmem:[#allocation4] sm:$0xff] %v2075
    %2079 = vst [vmem:[#allocation3] sm:$0xff] %v2077
    %s2080 = scalar_lea.vmem [#allocation13], 64
    %2081 = vst [vmem:[%s2080] sm:$0xff] %v2077
    %v2082 = vld [vmem:[#allocation2 + $0x120] sm:$0xff]
    %v2083 = vld [vmem:[#allocation2 + $0x128] sm:$0xff]
    %v2084 = vld [vmem:[#allocation2 + $0x130] sm:$0xff]
    %v2085 = vld [vmem:[#allocation2 + $0x138] sm:$0xff]
    %v2086 = vld [vmem:[#allocation3] sm:$0xff]
    %v2087 = vld [vmem:[#allocation11] sm:$0xff]
    %v2088 = vld [vmem:[#allocation11 + $0x8] sm:$0xff]
    %v2089 = vld [vmem:[#allocation11 + $0x10] sm:$0xff]
    %v2090 = vld [vmem:[#allocation11 + $0x18] sm:$0xff]
    %v2091 = vld [vmem:[#allocation11 + $0x20] sm:$0xff]
    %v2092 = vld [vmem:[#allocation11 + $0x28] sm:$0xff]
    %v2093 = vld [vmem:[#allocation11 + $0x30] sm:$0xff]
    %v2094 = vld [vmem:[#allocation11 + $0x38] sm:$0xff]
    %v2095 = vld [vmem:[#allocation11 + $0x40] sm:$0xff]
    %v2096 = vld [vmem:[#allocation11 + $0x48] sm:$0xff]
    %v2097 = vld [vmem:[#allocation11 + $0x50] sm:$0xff]
    %v2098 = vld [vmem:[#allocation11 + $0x58] sm:$0xff]
    %v2099 = vld [vmem:[#allocation11 + $0x60] sm:$0xff]
    %v2100 = vld [vmem:[#allocation11 + $0x68] sm:$0xff]
    %v2101 = vld [vmem:[#allocation11 + $0x70] sm:$0xff]
    %v2102 = vld [vmem:[#allocation11 + $0x78] sm:$0xff]
    %v2103 = vld [vmem:[#allocation11 + $0x80] sm:$0xff]
    %v2104 = vld [vmem:[#allocation11 + $0x88] sm:$0xff]
    %v2105 = vld [vmem:[#allocation11 + $0x90] sm:$0xff]
    %v2106 = vld [vmem:[#allocation11 + $0x98] sm:$0xff]
    %v2107 = vld [vmem:[#allocation11 + $0xa0] sm:$0xff]
    %v2108 = vld [vmem:[#allocation11 + $0xa8] sm:$0xff]
    %v2109 = vld [vmem:[#allocation11 + $0xb0] sm:$0xff]
    %v2110 = vld [vmem:[#allocation11 + $0xb8] sm:$0xff]
    %v2111 = vld [vmem:[#allocation11 + $0xc0] sm:$0xff]
    %v2112 = vld [vmem:[#allocation11 + $0xc8] sm:$0xff]
    %v2113 = vld [vmem:[#allocation11 + $0xd0] sm:$0xff]
    %v2114 = vld [vmem:[#allocation11 + $0xd8] sm:$0xff]
    %v2115 = vld [vmem:[#allocation11 + $0xe0] sm:$0xff]
    %v2116 = vld [vmem:[#allocation11 + $0xe8] sm:$0xff]
    %v2117 = vld [vmem:[#allocation11 + $0xf0] sm:$0xff]
    %v2118 = vld [vmem:[#allocation11 + $0xf8] sm:$0xff]
    %v2119 = vld [vmem:[#allocation11 + $0x100] sm:$0xff]
    %v2120 = vld [vmem:[#allocation11 + $0x108] sm:$0xff]
    %v2121 = vld [vmem:[#allocation11 + $0x110] sm:$0xff]
    %v2122 = vld [vmem:[#allocation11 + $0x118] sm:$0xff]
    %v2123 = vld [vmem:[#allocation11 + $0x120] sm:$0xff]
    %v2124 = vld [vmem:[#allocation11 + $0x128] sm:$0xff]
    %v2125 = vld [vmem:[#allocation11 + $0x130] sm:$0xff]
    %v2126 = vld [vmem:[#allocation11 + $0x138] sm:$0xff]
    %v2127 = vld [vmem:[#allocation11 + $0x140] sm:$0xff]
    %v2128 = vld [vmem:[#allocation11 + $0x148] sm:$0xff]
    %v2129 = vld [vmem:[#allocation11 + $0x150] sm:$0xff]
    %v2130 = vld [vmem:[#allocation11 + $0x158] sm:$0xff]
    %v2131 = vld [vmem:[#allocation11 + $0x160] sm:$0xff]
    %v2132 = vld [vmem:[#allocation11 + $0x168] sm:$0xff]
    %v2133 = vld [vmem:[#allocation11 + $0x170] sm:$0xff]
    %v2134 = vld [vmem:[#allocation11 + $0x178] sm:$0xff]
    %v2135 = vld [vmem:[#allocation11 + $0x180] sm:$0xff]
    %v2136 = vld [vmem:[#allocation11 + $0x188] sm:$0xff]
    %v2137 = vld [vmem:[#allocation11 + $0x190] sm:$0xff]
    %v2138 = vld [vmem:[#allocation11 + $0x198] sm:$0xff]
    %v2139 = vld [vmem:[#allocation11 + $0x1a0] sm:$0xff]
    %v2140 = vld [vmem:[#allocation11 + $0x1a8] sm:$0xff]
    %v2141 = vld [vmem:[#allocation11 + $0x1b0] sm:$0xff]
    %v2142 = vld [vmem:[#allocation11 + $0x1b8] sm:$0xff]
    %v2143 = vld [vmem:[#allocation11 + $0x1c0] sm:$0xff]
    %v2144 = vld [vmem:[#allocation11 + $0x1c8] sm:$0xff]
    %v2145 = vld [vmem:[#allocation11 + $0x1d0] sm:$0xff]
    %v2146 = vld [vmem:[#allocation11 + $0x1d8] sm:$0xff]
    %v2147 = vld [vmem:[#allocation11 + $0x1e0] sm:$0xff]
    %v2148 = vld [vmem:[#allocation11 + $0x1e8] sm:$0xff]
    %v2149 = vld [vmem:[#allocation11 + $0x1f0] sm:$0xff]
    %v2150 = vld [vmem:[#allocation11 + $0x1f8] sm:$0xff]
    %2151 = vmatpush.msra.mxu0 %v2147
    %2152 = vmatpush.msra.mxu0 %v2143
    %2153 = vmatpush.msra.mxu0 %v2139
    %2154 = vmatpush.msra.mxu0 %v2135
    %2155 = vmatpush.msra.mxu0 %v2131
    %2156 = vmatpush.msra.mxu0 %v2127
    %2157 = vmatpush.msra.mxu0 %v2123
    %2158 = vmatpush.msra.mxu0 %v2119
    %2159 = vmatpush.msra.mxu0 %v2115
    %2160 = vmatpush.msra.mxu0 %v2111
    %2161 = vmatpush.msra.mxu0 %v2107
    %2162 = vmatpush.msra.mxu0 %v2103
    %2163 = vmatpush.msra.mxu0 %v2099
    %2164 = vmatpush.msra.mxu0 %v2095
    %2165 = vmatpush.msra.mxu0 %v2091
    %2166 = vmatpush.msra.mxu0 %v2087
    %2167 = vmatmul.f32.gmra.mxu0 %v2086
    %v2168 = vpop.f32.mrf.mxu0
    %v2169 = vadd.f32 0.0, %v2168
    %2170 = vdwg.mxu0
    %2171 = vmatpush.msra.mxu0 %v2148
    %2172 = vmatpush.msra.mxu0 %v2144
    %2173 = vmatpush.msra.mxu0 %v2140
    %2174 = vmatpush.msra.mxu0 %v2136
    %2175 = vmatpush.msra.mxu0 %v2132
    %2176 = vmatpush.msra.mxu0 %v2128
    %2177 = vmatpush.msra.mxu0 %v2124
    %2178 = vmatpush.msra.mxu0 %v2120
    %2179 = vmatpush.msra.mxu0 %v2116
    %2180 = vmatpush.msra.mxu0 %v2112
    %2181 = vmatpush.msra.mxu0 %v2108
    %2182 = vmatpush.msra.mxu0 %v2104
    %2183 = vmatpush.msra.mxu0 %v2100
    %2184 = vmatpush.msra.mxu0 %v2096
    %2185 = vmatpush.msra.mxu0 %v2092
    %2186 = vmatpush.msra.mxu0 %v2088
    %2187 = vmatmul.f32.gmra.mxu0 %v2086
    %v2188 = vpop.f32.mrf.mxu0
    %v2189 = vadd.f32 0.0, %v2188
    %2190 = vdwg.mxu0
    %2191 = vmatpush.msra.mxu0 %v2149
    %2192 = vmatpush.msra.mxu0 %v2145
    %2193 = vmatpush.msra.mxu0 %v2141
    %2194 = vmatpush.msra.mxu0 %v2137
    %2195 = vmatpush.msra.mxu0 %v2133
    %2196 = vmatpush.msra.mxu0 %v2129
    %2197 = vmatpush.msra.mxu0 %v2125
    %2198 = vmatpush.msra.mxu0 %v2121
    %2199 = vmatpush.msra.mxu0 %v2117
    %2200 = vmatpush.msra.mxu0 %v2113
    %2201 = vmatpush.msra.mxu0 %v2109
    %2202 = vmatpush.msra.mxu0 %v2105
    %2203 = vmatpush.msra.mxu0 %v2101
    %2204 = vmatpush.msra.mxu0 %v2097
    %2205 = vmatpush.msra.mxu0 %v2093
    %2206 = vmatpush.msra.mxu0 %v2089
    %2207 = vmatmul.f32.gmra.mxu0 %v2086
    %v2208 = vpop.f32.mrf.mxu0
    %v2209 = vadd.f32 0.0, %v2208
    %2210 = vdwg.mxu0
    %2211 = vmatpush.msra.mxu0 %v2150
    %2212 = vmatpush.msra.mxu0 %v2146
    %2213 = vmatpush.msra.mxu0 %v2142
    %2214 = vmatpush.msra.mxu0 %v2138
    %2215 = vmatpush.msra.mxu0 %v2134
    %2216 = vmatpush.msra.mxu0 %v2130
    %2217 = vmatpush.msra.mxu0 %v2126
    %2218 = vmatpush.msra.mxu0 %v2122
    %2219 = vmatpush.msra.mxu0 %v2118
    %2220 = vmatpush.msra.mxu0 %v2114
    %2221 = vmatpush.msra.mxu0 %v2110
    %2222 = vmatpush.msra.mxu0 %v2106
    %2223 = vmatpush.msra.mxu0 %v2102
    %2224 = vmatpush.msra.mxu0 %v2098
    %2225 = vmatpush.msra.mxu0 %v2094
    %2226 = vmatpush.msra.mxu0 %v2090
    %2227 = vmatmul.f32.gmra.mxu0 %v2086
    %v2228 = vpop.f32.mrf.mxu0
    %v2229 = vadd.f32 0.0, %v2228
    %2230 = vdwg.mxu0
    %v2231 = vadd.f32 %v2082, %v2169
    %v2232 = vadd.f32 %v2083, %v2189
    %v2233 = vadd.f32 %v2084, %v2209
    %v2234 = vadd.f32 %v2085, %v2229
    %v2235 = vmul.f32 %v2231, 0.5
    %v2236 = vtanh.pop %v2235
    %v2237 = vmul.f32 %v2236, 0.5
    %v2238 = vadd.f32 %v2237, 0.5
    %v2239 = vmul.f32 %v2232, 0.5
    %v2240 = vtanh.pop %v2239
    %v2241 = vmul.f32 %v2240, 0.5
    %v2242 = vadd.f32 %v2241, 0.5
    %v2243 = vtanh.pop %v2233
    %v2244 = vmul.f32 %v2234, 0.5
    %v2245 = vtanh.pop %v2244
    %v2246 = vmul.f32 %v2245, 0.5
    %v2247 = vadd.f32 %v2246, 0.5
    %v2248 = vld [vmem:[#allocation4] sm:$0xff]
    %v2249 = vmul.f32 %v2242, %v2248
    %v2250 = vmul.f32 %v2238, %v2243
    %v2251 = vadd.f32 %v2249, %v2250
    %v2252 = vtanh.pop %v2251
    %v2253 = vmul.f32 %v2247, %v2252
    %2254 = vst [vmem:[#allocation4] sm:$0xff] %v2251
    %2255 = vst [vmem:[#allocation3] sm:$0xff] %v2253
    %s2256 = scalar_lea.vmem [#allocation13], 72
    %2257 = vst [vmem:[%s2256] sm:$0xff] %v2253
    %v2258 = vld [vmem:[#allocation2 + $0x140] sm:$0xff]
    %v2259 = vld [vmem:[#allocation2 + $0x148] sm:$0xff]
    %v2260 = vld [vmem:[#allocation2 + $0x150] sm:$0xff]
    %v2261 = vld [vmem:[#allocation2 + $0x158] sm:$0xff]
    %v2262 = vld [vmem:[#allocation3] sm:$0xff]
    %v2263 = vld [vmem:[#allocation11] sm:$0xff]
    %v2264 = vld [vmem:[#allocation11 + $0x8] sm:$0xff]
    %v2265 = vld [vmem:[#allocation11 + $0x10] sm:$0xff]
    %v2266 = vld [vmem:[#allocation11 + $0x18] sm:$0xff]
    %v2267 = vld [vmem:[#allocation11 + $0x20] sm:$0xff]
    %v2268 = vld [vmem:[#allocation11 + $0x28] sm:$0xff]
    %v2269 = vld [vmem:[#allocation11 + $0x30] sm:$0xff]
    %v2270 = vld [vmem:[#allocation11 + $0x38] sm:$0xff]
    %v2271 = vld [vmem:[#allocation11 + $0x40] sm:$0xff]
    %v2272 = vld [vmem:[#allocation11 + $0x48] sm:$0xff]
    %v2273 = vld [vmem:[#allocation11 + $0x50] sm:$0xff]
    %v2274 = vld [vmem:[#allocation11 + $0x58] sm:$0xff]
    %v2275 = vld [vmem:[#allocation11 + $0x60] sm:$0xff]
    %v2276 = vld [vmem:[#allocation11 + $0x68] sm:$0xff]
    %v2277 = vld [vmem:[#allocation11 + $0x70] sm:$0xff]
    %v2278 = vld [vmem:[#allocation11 + $0x78] sm:$0xff]
    %v2279 = vld [vmem:[#allocation11 + $0x80] sm:$0xff]
    %v2280 = vld [vmem:[#allocation11 + $0x88] sm:$0xff]
    %v2281 = vld [vmem:[#allocation11 + $0x90] sm:$0xff]
    %v2282 = vld [vmem:[#allocation11 + $0x98] sm:$0xff]
    %v2283 = vld [vmem:[#allocation11 + $0xa0] sm:$0xff]
    %v2284 = vld [vmem:[#allocation11 + $0xa8] sm:$0xff]
    %v2285 = vld [vmem:[#allocation11 + $0xb0] sm:$0xff]
    %v2286 = vld [vmem:[#allocation11 + $0xb8] sm:$0xff]
    %v2287 = vld [vmem:[#allocation11 + $0xc0] sm:$0xff]
    %v2288 = vld [vmem:[#allocation11 + $0xc8] sm:$0xff]
    %v2289 = vld [vmem:[#allocation11 + $0xd0] sm:$0xff]
    %v2290 = vld [vmem:[#allocation11 + $0xd8] sm:$0xff]
    %v2291 = vld [vmem:[#allocation11 + $0xe0] sm:$0xff]
    %v2292 = vld [vmem:[#allocation11 + $0xe8] sm:$0xff]
    %v2293 = vld [vmem:[#allocation11 + $0xf0] sm:$0xff]
    %v2294 = vld [vmem:[#allocation11 + $0xf8] sm:$0xff]
    %v2295 = vld [vmem:[#allocation11 + $0x100] sm:$0xff]
    %v2296 = vld [vmem:[#allocation11 + $0x108] sm:$0xff]
    %v2297 = vld [vmem:[#allocation11 + $0x110] sm:$0xff]
    %v2298 = vld [vmem:[#allocation11 + $0x118] sm:$0xff]
    %v2299 = vld [vmem:[#allocation11 + $0x120] sm:$0xff]
    %v2300 = vld [vmem:[#allocation11 + $0x128] sm:$0xff]
    %v2301 = vld [vmem:[#allocation11 + $0x130] sm:$0xff]
    %v2302 = vld [vmem:[#allocation11 + $0x138] sm:$0xff]
    %v2303 = vld [vmem:[#allocation11 + $0x140] sm:$0xff]
    %v2304 = vld [vmem:[#allocation11 + $0x148] sm:$0xff]
    %v2305 = vld [vmem:[#allocation11 + $0x150] sm:$0xff]
    %v2306 = vld [vmem:[#allocation11 + $0x158] sm:$0xff]
    %v2307 = vld [vmem:[#allocation11 + $0x160] sm:$0xff]
    %v2308 = vld [vmem:[#allocation11 + $0x168] sm:$0xff]
    %v2309 = vld [vmem:[#allocation11 + $0x170] sm:$0xff]
    %v2310 = vld [vmem:[#allocation11 + $0x178] sm:$0xff]
    %v2311 = vld [vmem:[#allocation11 + $0x180] sm:$0xff]
    %v2312 = vld [vmem:[#allocation11 + $0x188] sm:$0xff]
    %v2313 = vld [vmem:[#allocation11 + $0x190] sm:$0xff]
    %v2314 = vld [vmem:[#allocation11 + $0x198] sm:$0xff]
    %v2315 = vld [vmem:[#allocation11 + $0x1a0] sm:$0xff]
    %v2316 = vld [vmem:[#allocation11 + $0x1a8] sm:$0xff]
    %v2317 = vld [vmem:[#allocation11 + $0x1b0] sm:$0xff]
    %v2318 = vld [vmem:[#allocation11 + $0x1b8] sm:$0xff]
    %v2319 = vld [vmem:[#allocation11 + $0x1c0] sm:$0xff]
    %v2320 = vld [vmem:[#allocation11 + $0x1c8] sm:$0xff]
    %v2321 = vld [vmem:[#allocation11 + $0x1d0] sm:$0xff]
    %v2322 = vld [vmem:[#allocation11 + $0x1d8] sm:$0xff]
    %v2323 = vld [vmem:[#allocation11 + $0x1e0] sm:$0xff]
    %v2324 = vld [vmem:[#allocation11 + $0x1e8] sm:$0xff]
    %v2325 = vld [vmem:[#allocation11 + $0x1f0] sm:$0xff]
    %v2326 = vld [vmem:[#allocation11 + $0x1f8] sm:$0xff]
    %2327 = vmatpush.msra.mxu0 %v2323
    %2328 = vmatpush.msra.mxu0 %v2319
    %2329 = vmatpush.msra.mxu0 %v2315
    %2330 = vmatpush.msra.mxu0 %v2311
    %2331 = vmatpush.msra.mxu0 %v2307
    %2332 = vmatpush.msra.mxu0 %v2303
    %2333 = vmatpush.msra.mxu0 %v2299
    %2334 = vmatpush.msra.mxu0 %v2295
    %2335 = vmatpush.msra.mxu0 %v2291
    %2336 = vmatpush.msra.mxu0 %v2287
    %2337 = vmatpush.msra.mxu0 %v2283
    %2338 = vmatpush.msra.mxu0 %v2279
    %2339 = vmatpush.msra.mxu0 %v2275
    %2340 = vmatpush.msra.mxu0 %v2271
    %2341 = vmatpush.msra.mxu0 %v2267
    %2342 = vmatpush.msra.mxu0 %v2263
    %2343 = vmatmul.f32.gmra.mxu0 %v2262
    %v2344 = vpop.f32.mrf.mxu0
    %v2345 = vadd.f32 0.0, %v2344
    %2346 = vdwg.mxu0
    %2347 = vmatpush.msra.mxu0 %v2324
    %2348 = vmatpush.msra.mxu0 %v2320
    %2349 = vmatpush.msra.mxu0 %v2316
    %2350 = vmatpush.msra.mxu0 %v2312
    %2351 = vmatpush.msra.mxu0 %v2308
    %2352 = vmatpush.msra.mxu0 %v2304
    %2353 = vmatpush.msra.mxu0 %v2300
    %2354 = vmatpush.msra.mxu0 %v2296
    %2355 = vmatpush.msra.mxu0 %v2292
    %2356 = vmatpush.msra.mxu0 %v2288
    %2357 = vmatpush.msra.mxu0 %v2284
    %2358 = vmatpush.msra.mxu0 %v2280
    %2359 = vmatpush.msra.mxu0 %v2276
    %2360 = vmatpush.msra.mxu0 %v2272
    %2361 = vmatpush.msra.mxu0 %v2268
    %2362 = vmatpush.msra.mxu0 %v2264
    %2363 = vmatmul.f32.gmra.mxu0 %v2262
    %v2364 = vpop.f32.mrf.mxu0
    %v2365 = vadd.f32 0.0, %v2364
    %2366 = vdwg.mxu0
    %2367 = vmatpush.msra.mxu0 %v2325
    %2368 = vmatpush.msra.mxu0 %v2321
    %2369 = vmatpush.msra.mxu0 %v2317
    %2370 = vmatpush.msra.mxu0 %v2313
    %2371 = vmatpush.msra.mxu0 %v2309
    %2372 = vmatpush.msra.mxu0 %v2305
    %2373 = vmatpush.msra.mxu0 %v2301
    %2374 = vmatpush.msra.mxu0 %v2297
    %2375 = vmatpush.msra.mxu0 %v2293
    %2376 = vmatpush.msra.mxu0 %v2289
    %2377 = vmatpush.msra.mxu0 %v2285
    %2378 = vmatpush.msra.mxu0 %v2281
    %2379 = vmatpush.msra.mxu0 %v2277
    %2380 = vmatpush.msra.mxu0 %v2273
    %2381 = vmatpush.msra.mxu0 %v2269
    %2382 = vmatpush.msra.mxu0 %v2265
    %2383 = vmatmul.f32.gmra.mxu0 %v2262
    %v2384 = vpop.f32.mrf.mxu0
    %v2385 = vadd.f32 0.0, %v2384
    %2386 = vdwg.mxu0
    %2387 = vmatpush.msra.mxu0 %v2326
    %2388 = vmatpush.msra.mxu0 %v2322
    %2389 = vmatpush.msra.mxu0 %v2318
    %2390 = vmatpush.msra.mxu0 %v2314
    %2391 = vmatpush.msra.mxu0 %v2310
    %2392 = vmatpush.msra.mxu0 %v2306
    %2393 = vmatpush.msra.mxu0 %v2302
    %2394 = vmatpush.msra.mxu0 %v2298
    %2395 = vmatpush.msra.mxu0 %v2294
    %2396 = vmatpush.msra.mxu0 %v2290
    %2397 = vmatpush.msra.mxu0 %v2286
    %2398 = vmatpush.msra.mxu0 %v2282
    %2399 = vmatpush.msra.mxu0 %v2278
    %2400 = vmatpush.msra.mxu0 %v2274
    %2401 = vmatpush.msra.mxu0 %v2270
    %2402 = vmatpush.msra.mxu0 %v2266
    %2403 = vmatmul.f32.gmra.mxu0 %v2262
    %v2404 = vpop.f32.mrf.mxu0
    %v2405 = vadd.f32 0.0, %v2404
    %2406 = vdwg.mxu0
    %v2407 = vadd.f32 %v2258, %v2345
    %v2408 = vadd.f32 %v2259, %v2365
    %v2409 = vadd.f32 %v2260, %v2385
    %v2410 = vadd.f32 %v2261, %v2405
    %v2411 = vmul.f32 %v2407, 0.5
    %v2412 = vtanh.pop %v2411
    %v2413 = vmul.f32 %v2412, 0.5
    %v2414 = vadd.f32 %v2413, 0.5
    %v2415 = vmul.f32 %v2408, 0.5
    %v2416 = vtanh.pop %v2415
    %v2417 = vmul.f32 %v2416, 0.5
    %v2418 = vadd.f32 %v2417, 0.5
    %v2419 = vtanh.pop %v2409
    %v2420 = vmul.f32 %v2410, 0.5
    %v2421 = vtanh.pop %v2420
    %v2422 = vmul.f32 %v2421, 0.5
    %v2423 = vadd.f32 %v2422, 0.5
    %v2424 = vld [vmem:[#allocation4] sm:$0xff]
    %v2425 = vmul.f32 %v2418, %v2424
    %v2426 = vmul.f32 %v2414, %v2419
    %v2427 = vadd.f32 %v2425, %v2426
    %v2428 = vtanh.pop %v2427
    %v2429 = vmul.f32 %v2423, %v2428
    %2430 = vst [vmem:[#allocation4] sm:$0xff] %v2427
    %2431 = vst [vmem:[#allocation3] sm:$0xff] %v2429
    %s2432 = scalar_lea.vmem [#allocation13], 80
    %2433 = vst [vmem:[%s2432] sm:$0xff] %v2429
    %v2434 = vld [vmem:[#allocation2 + $0x160] sm:$0xff]
    %v2435 = vld [vmem:[#allocation2 + $0x168] sm:$0xff]
    %v2436 = vld [vmem:[#allocation2 + $0x170] sm:$0xff]
    %v2437 = vld [vmem:[#allocation2 + $0x178] sm:$0xff]
    %v2438 = vld [vmem:[#allocation3] sm:$0xff]
    %v2439 = vld [vmem:[#allocation11] sm:$0xff]
    %v2440 = vld [vmem:[#allocation11 + $0x8] sm:$0xff]
    %v2441 = vld [vmem:[#allocation11 + $0x10] sm:$0xff]
    %v2442 = vld [vmem:[#allocation11 + $0x18] sm:$0xff]
    %v2443 = vld [vmem:[#allocation11 + $0x20] sm:$0xff]
    %v2444 = vld [vmem:[#allocation11 + $0x28] sm:$0xff]
    %v2445 = vld [vmem:[#allocation11 + $0x30] sm:$0xff]
    %v2446 = vld [vmem:[#allocation11 + $0x38] sm:$0xff]
    %v2447 = vld [vmem:[#allocation11 + $0x40] sm:$0xff]
    %v2448 = vld [vmem:[#allocation11 + $0x48] sm:$0xff]
    %v2449 = vld [vmem:[#allocation11 + $0x50] sm:$0xff]
    %v2450 = vld [vmem:[#allocation11 + $0x58] sm:$0xff]
    %v2451 = vld [vmem:[#allocation11 + $0x60] sm:$0xff]
    %v2452 = vld [vmem:[#allocation11 + $0x68] sm:$0xff]
    %v2453 = vld [vmem:[#allocation11 + $0x70] sm:$0xff]
    %v2454 = vld [vmem:[#allocation11 + $0x78] sm:$0xff]
    %v2455 = vld [vmem:[#allocation11 + $0x80] sm:$0xff]
    %v2456 = vld [vmem:[#allocation11 + $0x88] sm:$0xff]
    %v2457 = vld [vmem:[#allocation11 + $0x90] sm:$0xff]
    %v2458 = vld [vmem:[#allocation11 + $0x98] sm:$0xff]
    %v2459 = vld [vmem:[#allocation11 + $0xa0] sm:$0xff]
    %v2460 = vld [vmem:[#allocation11 + $0xa8] sm:$0xff]
    %v2461 = vld [vmem:[#allocation11 + $0xb0] sm:$0xff]
    %v2462 = vld [vmem:[#allocation11 + $0xb8] sm:$0xff]
    %v2463 = vld [vmem:[#allocation11 + $0xc0] sm:$0xff]
    %v2464 = vld [vmem:[#allocation11 + $0xc8] sm:$0xff]
    %v2465 = vld [vmem:[#allocation11 + $0xd0] sm:$0xff]
    %v2466 = vld [vmem:[#allocation11 + $0xd8] sm:$0xff]
    %v2467 = vld [vmem:[#allocation11 + $0xe0] sm:$0xff]
    %v2468 = vld [vmem:[#allocation11 + $0xe8] sm:$0xff]
    %v2469 = vld [vmem:[#allocation11 + $0xf0] sm:$0xff]
    %v2470 = vld [vmem:[#allocation11 + $0xf8] sm:$0xff]
    %v2471 = vld [vmem:[#allocation11 + $0x100] sm:$0xff]
    %v2472 = vld [vmem:[#allocation11 + $0x108] sm:$0xff]
    %v2473 = vld [vmem:[#allocation11 + $0x110] sm:$0xff]
    %v2474 = vld [vmem:[#allocation11 + $0x118] sm:$0xff]
    %v2475 = vld [vmem:[#allocation11 + $0x120] sm:$0xff]
    %v2476 = vld [vmem:[#allocation11 + $0x128] sm:$0xff]
    %v2477 = vld [vmem:[#allocation11 + $0x130] sm:$0xff]
    %v2478 = vld [vmem:[#allocation11 + $0x138] sm:$0xff]
    %v2479 = vld [vmem:[#allocation11 + $0x140] sm:$0xff]
    %v2480 = vld [vmem:[#allocation11 + $0x148] sm:$0xff]
    %v2481 = vld [vmem:[#allocation11 + $0x150] sm:$0xff]
    %v2482 = vld [vmem:[#allocation11 + $0x158] sm:$0xff]
    %v2483 = vld [vmem:[#allocation11 + $0x160] sm:$0xff]
    %v2484 = vld [vmem:[#allocation11 + $0x168] sm:$0xff]
    %v2485 = vld [vmem:[#allocation11 + $0x170] sm:$0xff]
    %v2486 = vld [vmem:[#allocation11 + $0x178] sm:$0xff]
    %v2487 = vld [vmem:[#allocation11 + $0x180] sm:$0xff]
    %v2488 = vld [vmem:[#allocation11 + $0x188] sm:$0xff]
    %v2489 = vld [vmem:[#allocation11 + $0x190] sm:$0xff]
    %v2490 = vld [vmem:[#allocation11 + $0x198] sm:$0xff]
    %v2491 = vld [vmem:[#allocation11 + $0x1a0] sm:$0xff]
    %v2492 = vld [vmem:[#allocation11 + $0x1a8] sm:$0xff]
    %v2493 = vld [vmem:[#allocation11 + $0x1b0] sm:$0xff]
    %v2494 = vld [vmem:[#allocation11 + $0x1b8] sm:$0xff]
    %v2495 = vld [vmem:[#allocation11 + $0x1c0] sm:$0xff]
    %v2496 = vld [vmem:[#allocation11 + $0x1c8] sm:$0xff]
    %v2497 = vld [vmem:[#allocation11 + $0x1d0] sm:$0xff]
    %v2498 = vld [vmem:[#allocation11 + $0x1d8] sm:$0xff]
    %v2499 = vld [vmem:[#allocation11 + $0x1e0] sm:$0xff]
    %v2500 = vld [vmem:[#allocation11 + $0x1e8] sm:$0xff]
    %v2501 = vld [vmem:[#allocation11 + $0x1f0] sm:$0xff]
    %v2502 = vld [vmem:[#allocation11 + $0x1f8] sm:$0xff]
    %2503 = vmatpush.msra.mxu0 %v2499
    %2504 = vmatpush.msra.mxu0 %v2495
    %2505 = vmatpush.msra.mxu0 %v2491
    %2506 = vmatpush.msra.mxu0 %v2487
    %2507 = vmatpush.msra.mxu0 %v2483
    %2508 = vmatpush.msra.mxu0 %v2479
    %2509 = vmatpush.msra.mxu0 %v2475
    %2510 = vmatpush.msra.mxu0 %v2471
    %2511 = vmatpush.msra.mxu0 %v2467
    %2512 = vmatpush.msra.mxu0 %v2463
    %2513 = vmatpush.msra.mxu0 %v2459
    %2514 = vmatpush.msra.mxu0 %v2455
    %2515 = vmatpush.msra.mxu0 %v2451
    %2516 = vmatpush.msra.mxu0 %v2447
    %2517 = vmatpush.msra.mxu0 %v2443
    %2518 = vmatpush.msra.mxu0 %v2439
    %2519 = vmatmul.f32.gmra.mxu0 %v2438
    %v2520 = vpop.f32.mrf.mxu0
    %v2521 = vadd.f32 0.0, %v2520
    %2522 = vdwg.mxu0
    %2523 = vmatpush.msra.mxu0 %v2500
    %2524 = vmatpush.msra.mxu0 %v2496
    %2525 = vmatpush.msra.mxu0 %v2492
    %2526 = vmatpush.msra.mxu0 %v2488
    %2527 = vmatpush.msra.mxu0 %v2484
    %2528 = vmatpush.msra.mxu0 %v2480
    %2529 = vmatpush.msra.mxu0 %v2476
    %2530 = vmatpush.msra.mxu0 %v2472
    %2531 = vmatpush.msra.mxu0 %v2468
    %2532 = vmatpush.msra.mxu0 %v2464
    %2533 = vmatpush.msra.mxu0 %v2460
    %2534 = vmatpush.msra.mxu0 %v2456
    %2535 = vmatpush.msra.mxu0 %v2452
    %2536 = vmatpush.msra.mxu0 %v2448
    %2537 = vmatpush.msra.mxu0 %v2444
    %2538 = vmatpush.msra.mxu0 %v2440
    %2539 = vmatmul.f32.gmra.mxu0 %v2438
    %v2540 = vpop.f32.mrf.mxu0
    %v2541 = vadd.f32 0.0, %v2540
    %2542 = vdwg.mxu0
    %2543 = vmatpush.msra.mxu0 %v2501
    %2544 = vmatpush.msra.mxu0 %v2497
    %2545 = vmatpush.msra.mxu0 %v2493
    %2546 = vmatpush.msra.mxu0 %v2489
    %2547 = vmatpush.msra.mxu0 %v2485
    %2548 = vmatpush.msra.mxu0 %v2481
    %2549 = vmatpush.msra.mxu0 %v2477
    %2550 = vmatpush.msra.mxu0 %v2473
    %2551 = vmatpush.msra.mxu0 %v2469
    %2552 = vmatpush.msra.mxu0 %v2465
    %2553 = vmatpush.msra.mxu0 %v2461
    %2554 = vmatpush.msra.mxu0 %v2457
    %2555 = vmatpush.msra.mxu0 %v2453
    %2556 = vmatpush.msra.mxu0 %v2449
    %2557 = vmatpush.msra.mxu0 %v2445
    %2558 = vmatpush.msra.mxu0 %v2441
    %2559 = vmatmul.f32.gmra.mxu0 %v2438
    %v2560 = vpop.f32.mrf.mxu0
    %v2561 = vadd.f32 0.0, %v2560
    %2562 = vdwg.mxu0
    %2563 = vmatpush.msra.mxu0 %v2502
    %2564 = vmatpush.msra.mxu0 %v2498
    %2565 = vmatpush.msra.mxu0 %v2494
    %2566 = vmatpush.msra.mxu0 %v2490
    %2567 = vmatpush.msra.mxu0 %v2486
    %2568 = vmatpush.msra.mxu0 %v2482
    %2569 = vmatpush.msra.mxu0 %v2478
    %2570 = vmatpush.msra.mxu0 %v2474
    %2571 = vmatpush.msra.mxu0 %v2470
    %2572 = vmatpush.msra.mxu0 %v2466
    %2573 = vmatpush.msra.mxu0 %v2462
    %2574 = vmatpush.msra.mxu0 %v2458
    %2575 = vmatpush.msra.mxu0 %v2454
    %2576 = vmatpush.msra.mxu0 %v2450
    %2577 = vmatpush.msra.mxu0 %v2446
    %2578 = vmatpush.msra.mxu0 %v2442
    %2579 = vmatmul.f32.gmra.mxu0 %v2438
    %v2580 = vpop.f32.mrf.mxu0
    %v2581 = vadd.f32 0.0, %v2580
    %2582 = vdwg.mxu0
    %v2583 = vadd.f32 %v2434, %v2521
    %v2584 = vadd.f32 %v2435, %v2541
    %v2585 = vadd.f32 %v2436, %v2561
    %v2586 = vadd.f32 %v2437, %v2581
    %v2587 = vmul.f32 %v2583, 0.5
    %v2588 = vtanh.pop %v2587
    %v2589 = vmul.f32 %v2588, 0.5
    %v2590 = vadd.f32 %v2589, 0.5
    %v2591 = vmul.f32 %v2584, 0.5
    %v2592 = vtanh.pop %v2591
    %v2593 = vmul.f32 %v2592, 0.5
    %v2594 = vadd.f32 %v2593, 0.5
    %v2595 = vtanh.pop %v2585
    %v2596 = vmul.f32 %v2586, 0.5
    %v2597 = vtanh.pop %v2596
    %v2598 = vmul.f32 %v2597, 0.5
    %v2599 = vadd.f32 %v2598, 0.5
    %v2600 = vld [vmem:[#allocation4] sm:$0xff]
    %v2601 = vmul.f32 %v2594, %v2600
    %v2602 = vmul.f32 %v2590, %v2595
    %v2603 = vadd.f32 %v2601, %v2602
    %v2604 = vtanh.pop %v2603
    %v2605 = vmul.f32 %v2599, %v2604
    %2606 = vst [vmem:[#allocation4] sm:$0xff] %v2603
    %2607 = vst [vmem:[#allocation3] sm:$0xff] %v2605
    %s2608 = scalar_lea.vmem [#allocation13], 88
    %2609 = vst [vmem:[%s2608] sm:$0xff] %v2605
    %v2610 = vld [vmem:[#allocation2 + $0x180] sm:$0xff]
    %v2611 = vld [vmem:[#allocation2 + $0x188] sm:$0xff]
    %v2612 = vld [vmem:[#allocation2 + $0x190] sm:$0xff]
    %v2613 = vld [vmem:[#allocation2 + $0x198] sm:$0xff]
    %v2614 = vld [vmem:[#allocation3] sm:$0xff]
    %v2615 = vld [vmem:[#allocation11] sm:$0xff]
    %v2616 = vld [vmem:[#allocation11 + $0x8] sm:$0xff]
    %v2617 = vld [vmem:[#allocation11 + $0x10] sm:$0xff]
    %v2618 = vld [vmem:[#allocation11 + $0x18] sm:$0xff]
    %v2619 = vld [vmem:[#allocation11 + $0x20] sm:$0xff]
    %v2620 = vld [vmem:[#allocation11 + $0x28] sm:$0xff]
    %v2621 = vld [vmem:[#allocation11 + $0x30] sm:$0xff]
    %v2622 = vld [vmem:[#allocation11 + $0x38] sm:$0xff]
    %v2623 = vld [vmem:[#allocation11 + $0x40] sm:$0xff]
    %v2624 = vld [vmem:[#allocation11 + $0x48] sm:$0xff]
    %v2625 = vld [vmem:[#allocation11 + $0x50] sm:$0xff]
    %v2626 = vld [vmem:[#allocation11 + $0x58] sm:$0xff]
    %v2627 = vld [vmem:[#allocation11 + $0x60] sm:$0xff]
    %v2628 = vld [vmem:[#allocation11 + $0x68] sm:$0xff]
    %v2629 = vld [vmem:[#allocation11 + $0x70] sm:$0xff]
    %v2630 = vld [vmem:[#allocation11 + $0x78] sm:$0xff]
    %v2631 = vld [vmem:[#allocation11 + $0x80] sm:$0xff]
    %v2632 = vld [vmem:[#allocation11 + $0x88] sm:$0xff]
    %v2633 = vld [vmem:[#allocation11 + $0x90] sm:$0xff]
    %v2634 = vld [vmem:[#allocation11 + $0x98] sm:$0xff]
    %v2635 = vld [vmem:[#allocation11 + $0xa0] sm:$0xff]
    %v2636 = vld [vmem:[#allocation11 + $0xa8] sm:$0xff]
    %v2637 = vld [vmem:[#allocation11 + $0xb0] sm:$0xff]
    %v2638 = vld [vmem:[#allocation11 + $0xb8] sm:$0xff]
    %v2639 = vld [vmem:[#allocation11 + $0xc0] sm:$0xff]
    %v2640 = vld [vmem:[#allocation11 + $0xc8] sm:$0xff]
    %v2641 = vld [vmem:[#allocation11 + $0xd0] sm:$0xff]
    %v2642 = vld [vmem:[#allocation11 + $0xd8] sm:$0xff]
    %v2643 = vld [vmem:[#allocation11 + $0xe0] sm:$0xff]
    %v2644 = vld [vmem:[#allocation11 + $0xe8] sm:$0xff]
    %v2645 = vld [vmem:[#allocation11 + $0xf0] sm:$0xff]
    %v2646 = vld [vmem:[#allocation11 + $0xf8] sm:$0xff]
    %v2647 = vld [vmem:[#allocation11 + $0x100] sm:$0xff]
    %v2648 = vld [vmem:[#allocation11 + $0x108] sm:$0xff]
    %v2649 = vld [vmem:[#allocation11 + $0x110] sm:$0xff]
    %v2650 = vld [vmem:[#allocation11 + $0x118] sm:$0xff]
    %v2651 = vld [vmem:[#allocation11 + $0x120] sm:$0xff]
    %v2652 = vld [vmem:[#allocation11 + $0x128] sm:$0xff]
    %v2653 = vld [vmem:[#allocation11 + $0x130] sm:$0xff]
    %v2654 = vld [vmem:[#allocation11 + $0x138] sm:$0xff]
    %v2655 = vld [vmem:[#allocation11 + $0x140] sm:$0xff]
    %v2656 = vld [vmem:[#allocation11 + $0x148] sm:$0xff]
    %v2657 = vld [vmem:[#allocation11 + $0x150] sm:$0xff]
    %v2658 = vld [vmem:[#allocation11 + $0x158] sm:$0xff]
    %v2659 = vld [vmem:[#allocation11 + $0x160] sm:$0xff]
    %v2660 = vld [vmem:[#allocation11 + $0x168] sm:$0xff]
    %v2661 = vld [vmem:[#allocation11 + $0x170] sm:$0xff]
    %v2662 = vld [vmem:[#allocation11 + $0x178] sm:$0xff]
    %v2663 = vld [vmem:[#allocation11 + $0x180] sm:$0xff]
    %v2664 = vld [vmem:[#allocation11 + $0x188] sm:$0xff]
    %v2665 = vld [vmem:[#allocation11 + $0x190] sm:$0xff]
    %v2666 = vld [vmem:[#allocation11 + $0x198] sm:$0xff]
    %v2667 = vld [vmem:[#allocation11 + $0x1a0] sm:$0xff]
    %v2668 = vld [vmem:[#allocation11 + $0x1a8] sm:$0xff]
    %v2669 = vld [vmem:[#allocation11 + $0x1b0] sm:$0xff]
    %v2670 = vld [vmem:[#allocation11 + $0x1b8] sm:$0xff]
    %v2671 = vld [vmem:[#allocation11 + $0x1c0] sm:$0xff]
    %v2672 = vld [vmem:[#allocation11 + $0x1c8] sm:$0xff]
    %v2673 = vld [vmem:[#allocation11 + $0x1d0] sm:$0xff]
    %v2674 = vld [vmem:[#allocation11 + $0x1d8] sm:$0xff]
    %v2675 = vld [vmem:[#allocation11 + $0x1e0] sm:$0xff]
    %v2676 = vld [vmem:[#allocation11 + $0x1e8] sm:$0xff]
    %v2677 = vld [vmem:[#allocation11 + $0x1f0] sm:$0xff]
    %v2678 = vld [vmem:[#allocation11 + $0x1f8] sm:$0xff]
    %2679 = vmatpush.msra.mxu0 %v2675
    %2680 = vmatpush.msra.mxu0 %v2671
    %2681 = vmatpush.msra.mxu0 %v2667
    %2682 = vmatpush.msra.mxu0 %v2663
    %2683 = vmatpush.msra.mxu0 %v2659
    %2684 = vmatpush.msra.mxu0 %v2655
    %2685 = vmatpush.msra.mxu0 %v2651
    %2686 = vmatpush.msra.mxu0 %v2647
    %2687 = vmatpush.msra.mxu0 %v2643
    %2688 = vmatpush.msra.mxu0 %v2639
    %2689 = vmatpush.msra.mxu0 %v2635
    %2690 = vmatpush.msra.mxu0 %v2631
    %2691 = vmatpush.msra.mxu0 %v2627
    %2692 = vmatpush.msra.mxu0 %v2623
    %2693 = vmatpush.msra.mxu0 %v2619
    %2694 = vmatpush.msra.mxu0 %v2615
    %2695 = vmatmul.f32.gmra.mxu0 %v2614
    %v2696 = vpop.f32.mrf.mxu0
    %v2697 = vadd.f32 0.0, %v2696
    %2698 = vdwg.mxu0
    %2699 = vmatpush.msra.mxu0 %v2676
    %2700 = vmatpush.msra.mxu0 %v2672
    %2701 = vmatpush.msra.mxu0 %v2668
    %2702 = vmatpush.msra.mxu0 %v2664
    %2703 = vmatpush.msra.mxu0 %v2660
    %2704 = vmatpush.msra.mxu0 %v2656
    %2705 = vmatpush.msra.mxu0 %v2652
    %2706 = vmatpush.msra.mxu0 %v2648
    %2707 = vmatpush.msra.mxu0 %v2644
    %2708 = vmatpush.msra.mxu0 %v2640
    %2709 = vmatpush.msra.mxu0 %v2636
    %2710 = vmatpush.msra.mxu0 %v2632
    %2711 = vmatpush.msra.mxu0 %v2628
    %2712 = vmatpush.msra.mxu0 %v2624
    %2713 = vmatpush.msra.mxu0 %v2620
    %2714 = vmatpush.msra.mxu0 %v2616
    %2715 = vmatmul.f32.gmra.mxu0 %v2614
    %v2716 = vpop.f32.mrf.mxu0
    %v2717 = vadd.f32 0.0, %v2716
    %2718 = vdwg.mxu0
    %2719 = vmatpush.msra.mxu0 %v2677
    %2720 = vmatpush.msra.mxu0 %v2673
    %2721 = vmatpush.msra.mxu0 %v2669
    %2722 = vmatpush.msra.mxu0 %v2665
    %2723 = vmatpush.msra.mxu0 %v2661
    %2724 = vmatpush.msra.mxu0 %v2657
    %2725 = vmatpush.msra.mxu0 %v2653
    %2726 = vmatpush.msra.mxu0 %v2649
    %2727 = vmatpush.msra.mxu0 %v2645
    %2728 = vmatpush.msra.mxu0 %v2641
    %2729 = vmatpush.msra.mxu0 %v2637
    %2730 = vmatpush.msra.mxu0 %v2633
    %2731 = vmatpush.msra.mxu0 %v2629
    %2732 = vmatpush.msra.mxu0 %v2625
    %2733 = vmatpush.msra.mxu0 %v2621
    %2734 = vmatpush.msra.mxu0 %v2617
    %2735 = vmatmul.f32.gmra.mxu0 %v2614
    %v2736 = vpop.f32.mrf.mxu0
    %v2737 = vadd.f32 0.0, %v2736
    %2738 = vdwg.mxu0
    %2739 = vmatpush.msra.mxu0 %v2678
    %2740 = vmatpush.msra.mxu0 %v2674
    %2741 = vmatpush.msra.mxu0 %v2670
    %2742 = vmatpush.msra.mxu0 %v2666
    %2743 = vmatpush.msra.mxu0 %v2662
    %2744 = vmatpush.msra.mxu0 %v2658
    %2745 = vmatpush.msra.mxu0 %v2654
    %2746 = vmatpush.msra.mxu0 %v2650
    %2747 = vmatpush.msra.mxu0 %v2646
    %2748 = vmatpush.msra.mxu0 %v2642
    %2749 = vmatpush.msra.mxu0 %v2638
    %2750 = vmatpush.msra.mxu0 %v2634
    %2751 = vmatpush.msra.mxu0 %v2630
    %2752 = vmatpush.msra.mxu0 %v2626
    %2753 = vmatpush.msra.mxu0 %v2622
    %2754 = vmatpush.msra.mxu0 %v2618
    %2755 = vmatmul.f32.gmra.mxu0 %v2614
    %v2756 = vpop.f32.mrf.mxu0
    %v2757 = vadd.f32 0.0, %v2756
    %2758 = vdwg.mxu0
    %v2759 = vadd.f32 %v2610, %v2697
    %v2760 = vadd.f32 %v2611, %v2717
    %v2761 = vadd.f32 %v2612, %v2737
    %v2762 = vadd.f32 %v2613, %v2757
    %v2763 = vmul.f32 %v2759, 0.5
    %v2764 = vtanh.pop %v2763
    %v2765 = vmul.f32 %v2764, 0.5
    %v2766 = vadd.f32 %v2765, 0.5
    %v2767 = vmul.f32 %v2760, 0.5
    %v2768 = vtanh.pop %v2767
    %v2769 = vmul.f32 %v2768, 0.5
    %v2770 = vadd.f32 %v2769, 0.5
    %v2771 = vtanh.pop %v2761
    %v2772 = vmul.f32 %v2762, 0.5
    %v2773 = vtanh.pop %v2772
    %v2774 = vmul.f32 %v2773, 0.5
    %v2775 = vadd.f32 %v2774, 0.5
    %v2776 = vld [vmem:[#allocation4] sm:$0xff]
    %v2777 = vmul.f32 %v2770, %v2776
    %v2778 = vmul.f32 %v2766, %v2771
    %v2779 = vadd.f32 %v2777, %v2778
    %v2780 = vtanh.pop %v2779
    %v2781 = vmul.f32 %v2775, %v2780
    %2782 = vst [vmem:[#allocation4] sm:$0xff] %v2779
    %2783 = vst [vmem:[#allocation3] sm:$0xff] %v2781
    %s2784 = scalar_lea.vmem [#allocation13], 96
    %2785 = vst [vmem:[%s2784] sm:$0xff] %v2781
    %v2786 = vld [vmem:[#allocation2 + $0x1a0] sm:$0xff]
    %v2787 = vld [vmem:[#allocation2 + $0x1a8] sm:$0xff]
    %v2788 = vld [vmem:[#allocation2 + $0x1b0] sm:$0xff]
    %v2789 = vld [vmem:[#allocation2 + $0x1b8] sm:$0xff]
    %v2790 = vld [vmem:[#allocation3] sm:$0xff]
    %v2791 = vld [vmem:[#allocation11] sm:$0xff]
    %v2792 = vld [vmem:[#allocation11 + $0x8] sm:$0xff]
    %v2793 = vld [vmem:[#allocation11 + $0x10] sm:$0xff]
    %v2794 = vld [vmem:[#allocation11 + $0x18] sm:$0xff]
    %v2795 = vld [vmem:[#allocation11 + $0x20] sm:$0xff]
    %v2796 = vld [vmem:[#allocation11 + $0x28] sm:$0xff]
    %v2797 = vld [vmem:[#allocation11 + $0x30] sm:$0xff]
    %v2798 = vld [vmem:[#allocation11 + $0x38] sm:$0xff]
    %v2799 = vld [vmem:[#allocation11 + $0x40] sm:$0xff]
    %v2800 = vld [vmem:[#allocation11 + $0x48] sm:$0xff]
    %v2801 = vld [vmem:[#allocation11 + $0x50] sm:$0xff]
    %v2802 = vld [vmem:[#allocation11 + $0x58] sm:$0xff]
    %v2803 = vld [vmem:[#allocation11 + $0x60] sm:$0xff]
    %v2804 = vld [vmem:[#allocation11 + $0x68] sm:$0xff]
    %v2805 = vld [vmem:[#allocation11 + $0x70] sm:$0xff]
    %v2806 = vld [vmem:[#allocation11 + $0x78] sm:$0xff]
    %v2807 = vld [vmem:[#allocation11 + $0x80] sm:$0xff]
    %v2808 = vld [vmem:[#allocation11 + $0x88] sm:$0xff]
    %v2809 = vld [vmem:[#allocation11 + $0x90] sm:$0xff]
    %v2810 = vld [vmem:[#allocation11 + $0x98] sm:$0xff]
    %v2811 = vld [vmem:[#allocation11 + $0xa0] sm:$0xff]
    %v2812 = vld [vmem:[#allocation11 + $0xa8] sm:$0xff]
    %v2813 = vld [vmem:[#allocation11 + $0xb0] sm:$0xff]
    %v2814 = vld [vmem:[#allocation11 + $0xb8] sm:$0xff]
    %v2815 = vld [vmem:[#allocation11 + $0xc0] sm:$0xff]
    %v2816 = vld [vmem:[#allocation11 + $0xc8] sm:$0xff]
    %v2817 = vld [vmem:[#allocation11 + $0xd0] sm:$0xff]
    %v2818 = vld [vmem:[#allocation11 + $0xd8] sm:$0xff]
    %v2819 = vld [vmem:[#allocation11 + $0xe0] sm:$0xff]
    %v2820 = vld [vmem:[#allocation11 + $0xe8] sm:$0xff]
    %v2821 = vld [vmem:[#allocation11 + $0xf0] sm:$0xff]
    %v2822 = vld [vmem:[#allocation11 + $0xf8] sm:$0xff]
    %v2823 = vld [vmem:[#allocation11 + $0x100] sm:$0xff]
    %v2824 = vld [vmem:[#allocation11 + $0x108] sm:$0xff]
    %v2825 = vld [vmem:[#allocation11 + $0x110] sm:$0xff]
    %v2826 = vld [vmem:[#allocation11 + $0x118] sm:$0xff]
    %v2827 = vld [vmem:[#allocation11 + $0x120] sm:$0xff]
    %v2828 = vld [vmem:[#allocation11 + $0x128] sm:$0xff]
    %v2829 = vld [vmem:[#allocation11 + $0x130] sm:$0xff]
    %v2830 = vld [vmem:[#allocation11 + $0x138] sm:$0xff]
    %v2831 = vld [vmem:[#allocation11 + $0x140] sm:$0xff]
    %v2832 = vld [vmem:[#allocation11 + $0x148] sm:$0xff]
    %v2833 = vld [vmem:[#allocation11 + $0x150] sm:$0xff]
    %v2834 = vld [vmem:[#allocation11 + $0x158] sm:$0xff]
    %v2835 = vld [vmem:[#allocation11 + $0x160] sm:$0xff]
    %v2836 = vld [vmem:[#allocation11 + $0x168] sm:$0xff]
    %v2837 = vld [vmem:[#allocation11 + $0x170] sm:$0xff]
    %v2838 = vld [vmem:[#allocation11 + $0x178] sm:$0xff]
    %v2839 = vld [vmem:[#allocation11 + $0x180] sm:$0xff]
    %v2840 = vld [vmem:[#allocation11 + $0x188] sm:$0xff]
    %v2841 = vld [vmem:[#allocation11 + $0x190] sm:$0xff]
    %v2842 = vld [vmem:[#allocation11 + $0x198] sm:$0xff]
    %v2843 = vld [vmem:[#allocation11 + $0x1a0] sm:$0xff]
    %v2844 = vld [vmem:[#allocation11 + $0x1a8] sm:$0xff]
    %v2845 = vld [vmem:[#allocation11 + $0x1b0] sm:$0xff]
    %v2846 = vld [vmem:[#allocation11 + $0x1b8] sm:$0xff]
    %v2847 = vld [vmem:[#allocation11 + $0x1c0] sm:$0xff]
    %v2848 = vld [vmem:[#allocation11 + $0x1c8] sm:$0xff]
    %v2849 = vld [vmem:[#allocation11 + $0x1d0] sm:$0xff]
    %v2850 = vld [vmem:[#allocation11 + $0x1d8] sm:$0xff]
    %v2851 = vld [vmem:[#allocation11 + $0x1e0] sm:$0xff]
    %v2852 = vld [vmem:[#allocation11 + $0x1e8] sm:$0xff]
    %v2853 = vld [vmem:[#allocation11 + $0x1f0] sm:$0xff]
    %v2854 = vld [vmem:[#allocation11 + $0x1f8] sm:$0xff]
    %2855 = vmatpush.msra.mxu0 %v2851
    %2856 = vmatpush.msra.mxu0 %v2847
    %2857 = vmatpush.msra.mxu0 %v2843
    %2858 = vmatpush.msra.mxu0 %v2839
    %2859 = vmatpush.msra.mxu0 %v2835
    %2860 = vmatpush.msra.mxu0 %v2831
    %2861 = vmatpush.msra.mxu0 %v2827
    %2862 = vmatpush.msra.mxu0 %v2823
    %2863 = vmatpush.msra.mxu0 %v2819
    %2864 = vmatpush.msra.mxu0 %v2815
    %2865 = vmatpush.msra.mxu0 %v2811
    %2866 = vmatpush.msra.mxu0 %v2807
    %2867 = vmatpush.msra.mxu0 %v2803
    %2868 = vmatpush.msra.mxu0 %v2799
    %2869 = vmatpush.msra.mxu0 %v2795
    %2870 = vmatpush.msra.mxu0 %v2791
    %2871 = vmatmul.f32.gmra.mxu0 %v2790
    %v2872 = vpop.f32.mrf.mxu0
    %v2873 = vadd.f32 0.0, %v2872
    %2874 = vdwg.mxu0
    %2875 = vmatpush.msra.mxu0 %v2852
    %2876 = vmatpush.msra.mxu0 %v2848
    %2877 = vmatpush.msra.mxu0 %v2844
    %2878 = vmatpush.msra.mxu0 %v2840
    %2879 = vmatpush.msra.mxu0 %v2836
    %2880 = vmatpush.msra.mxu0 %v2832
    %2881 = vmatpush.msra.mxu0 %v2828
    %2882 = vmatpush.msra.mxu0 %v2824
    %2883 = vmatpush.msra.mxu0 %v2820
    %2884 = vmatpush.msra.mxu0 %v2816
    %2885 = vmatpush.msra.mxu0 %v2812
    %2886 = vmatpush.msra.mxu0 %v2808
    %2887 = vmatpush.msra.mxu0 %v2804
    %2888 = vmatpush.msra.mxu0 %v2800
    %2889 = vmatpush.msra.mxu0 %v2796
    %2890 = vmatpush.msra.mxu0 %v2792
    %2891 = vmatmul.f32.gmra.mxu0 %v2790
    %v2892 = vpop.f32.mrf.mxu0
    %v2893 = vadd.f32 0.0, %v2892
    %2894 = vdwg.mxu0
    %2895 = vmatpush.msra.mxu0 %v2853
    %2896 = vmatpush.msra.mxu0 %v2849
    %2897 = vmatpush.msra.mxu0 %v2845
    %2898 = vmatpush.msra.mxu0 %v2841
    %2899 = vmatpush.msra.mxu0 %v2837
    %2900 = vmatpush.msra.mxu0 %v2833
    %2901 = vmatpush.msra.mxu0 %v2829
    %2902 = vmatpush.msra.mxu0 %v2825
    %2903 = vmatpush.msra.mxu0 %v2821
    %2904 = vmatpush.msra.mxu0 %v2817
    %2905 = vmatpush.msra.mxu0 %v2813
    %2906 = vmatpush.msra.mxu0 %v2809
    %2907 = vmatpush.msra.mxu0 %v2805
    %2908 = vmatpush.msra.mxu0 %v2801
    %2909 = vmatpush.msra.mxu0 %v2797
    %2910 = vmatpush.msra.mxu0 %v2793
    %2911 = vmatmul.f32.gmra.mxu0 %v2790
    %v2912 = vpop.f32.mrf.mxu0
    %v2913 = vadd.f32 0.0, %v2912
    %2914 = vdwg.mxu0
    %2915 = vmatpush.msra.mxu0 %v2854
    %2916 = vmatpush.msra.mxu0 %v2850
    %2917 = vmatpush.msra.mxu0 %v2846
    %2918 = vmatpush.msra.mxu0 %v2842
    %2919 = vmatpush.msra.mxu0 %v2838
    %2920 = vmatpush.msra.mxu0 %v2834
    %2921 = vmatpush.msra.mxu0 %v2830
    %2922 = vmatpush.msra.mxu0 %v2826
    %2923 = vmatpush.msra.mxu0 %v2822
    %2924 = vmatpush.msra.mxu0 %v2818
    %2925 = vmatpush.msra.mxu0 %v2814
    %2926 = vmatpush.msra.mxu0 %v2810
    %2927 = vmatpush.msra.mxu0 %v2806
    %2928 = vmatpush.msra.mxu0 %v2802
    %2929 = vmatpush.msra.mxu0 %v2798
    %2930 = vmatpush.msra.mxu0 %v2794
    %2931 = vmatmul.f32.gmra.mxu0 %v2790
    %v2932 = vpop.f32.mrf.mxu0
    %v2933 = vadd.f32 0.0, %v2932
    %2934 = vdwg.mxu0
    %v2935 = vadd.f32 %v2786, %v2873
    %v2936 = vadd.f32 %v2787, %v2893
    %v2937 = vadd.f32 %v2788, %v2913
    %v2938 = vadd.f32 %v2789, %v2933
    %v2939 = vmul.f32 %v2935, 0.5
    %v2940 = vtanh.pop %v2939
    %v2941 = vmul.f32 %v2940, 0.5
    %v2942 = vadd.f32 %v2941, 0.5
    %v2943 = vmul.f32 %v2936, 0.5
    %v2944 = vtanh.pop %v2943
    %v2945 = vmul.f32 %v2944, 0.5
    %v2946 = vadd.f32 %v2945, 0.5
    %v2947 = vtanh.pop %v2937
    %v2948 = vmul.f32 %v2938, 0.5
    %v2949 = vtanh.pop %v2948
    %v2950 = vmul.f32 %v2949, 0.5
    %v2951 = vadd.f32 %v2950, 0.5
    %v2952 = vld [vmem:[#allocation4] sm:$0xff]
    %v2953 = vmul.f32 %v2946, %v2952
    %v2954 = vmul.f32 %v2942, %v2947
    %v2955 = vadd.f32 %v2953, %v2954
    %v2956 = vtanh.pop %v2955
    %v2957 = vmul.f32 %v2951, %v2956
    %2958 = vst [vmem:[#allocation4] sm:$0xff] %v2955
    %2959 = vst [vmem:[#allocation3] sm:$0xff] %v2957
    %s2960 = scalar_lea.vmem [#allocation13], 104
    %2961 = vst [vmem:[%s2960] sm:$0xff] %v2957
    %v2962 = vld [vmem:[#allocation2 + $0x1c0] sm:$0xff]
    %v2963 = vld [vmem:[#allocation2 + $0x1c8] sm:$0xff]
    %v2964 = vld [vmem:[#allocation2 + $0x1d0] sm:$0xff]
    %v2965 = vld [vmem:[#allocation2 + $0x1d8] sm:$0xff]
    %v2966 = vld [vmem:[#allocation3] sm:$0xff]
    %v2967 = vld [vmem:[#allocation11] sm:$0xff]
    %v2968 = vld [vmem:[#allocation11 + $0x8] sm:$0xff]
    %v2969 = vld [vmem:[#allocation11 + $0x10] sm:$0xff]
    %v2970 = vld [vmem:[#allocation11 + $0x18] sm:$0xff]
    %v2971 = vld [vmem:[#allocation11 + $0x20] sm:$0xff]
    %v2972 = vld [vmem:[#allocation11 + $0x28] sm:$0xff]
    %v2973 = vld [vmem:[#allocation11 + $0x30] sm:$0xff]
    %v2974 = vld [vmem:[#allocation11 + $0x38] sm:$0xff]
    %v2975 = vld [vmem:[#allocation11 + $0x40] sm:$0xff]
    %v2976 = vld [vmem:[#allocation11 + $0x48] sm:$0xff]
    %v2977 = vld [vmem:[#allocation11 + $0x50] sm:$0xff]
    %v2978 = vld [vmem:[#allocation11 + $0x58] sm:$0xff]
    %v2979 = vld [vmem:[#allocation11 + $0x60] sm:$0xff]
    %v2980 = vld [vmem:[#allocation11 + $0x68] sm:$0xff]
    %v2981 = vld [vmem:[#allocation11 + $0x70] sm:$0xff]
    %v2982 = vld [vmem:[#allocation11 + $0x78] sm:$0xff]
    %v2983 = vld [vmem:[#allocation11 + $0x80] sm:$0xff]
    %v2984 = vld [vmem:[#allocation11 + $0x88] sm:$0xff]
    %v2985 = vld [vmem:[#allocation11 + $0x90] sm:$0xff]
    %v2986 = vld [vmem:[#allocation11 + $0x98] sm:$0xff]
    %v2987 = vld [vmem:[#allocation11 + $0xa0] sm:$0xff]
    %v2988 = vld [vmem:[#allocation11 + $0xa8] sm:$0xff]
    %v2989 = vld [vmem:[#allocation11 + $0xb0] sm:$0xff]
    %v2990 = vld [vmem:[#allocation11 + $0xb8] sm:$0xff]
    %v2991 = vld [vmem:[#allocation11 + $0xc0] sm:$0xff]
    %v2992 = vld [vmem:[#allocation11 + $0xc8] sm:$0xff]
    %v2993 = vld [vmem:[#allocation11 + $0xd0] sm:$0xff]
    %v2994 = vld [vmem:[#allocation11 + $0xd8] sm:$0xff]
    %v2995 = vld [vmem:[#allocation11 + $0xe0] sm:$0xff]
    %v2996 = vld [vmem:[#allocation11 + $0xe8] sm:$0xff]
    %v2997 = vld [vmem:[#allocation11 + $0xf0] sm:$0xff]
    %v2998 = vld [vmem:[#allocation11 + $0xf8] sm:$0xff]
    %v2999 = vld [vmem:[#allocation11 + $0x100] sm:$0xff]
    %v3000 = vld [vmem:[#allocation11 + $0x108] sm:$0xff]
    %v3001 = vld [vmem:[#allocation11 + $0x110] sm:$0xff]
    %v3002 = vld [vmem:[#allocation11 + $0x118] sm:$0xff]
    %v3003 = vld [vmem:[#allocation11 + $0x120] sm:$0xff]
    %v3004 = vld [vmem:[#allocation11 + $0x128] sm:$0xff]
    %v3005 = vld [vmem:[#allocation11 + $0x130] sm:$0xff]
    %v3006 = vld [vmem:[#allocation11 + $0x138] sm:$0xff]
    %v3007 = vld [vmem:[#allocation11 + $0x140] sm:$0xff]
    %v3008 = vld [vmem:[#allocation11 + $0x148] sm:$0xff]
    %v3009 = vld [vmem:[#allocation11 + $0x150] sm:$0xff]
    %v3010 = vld [vmem:[#allocation11 + $0x158] sm:$0xff]
    %v3011 = vld [vmem:[#allocation11 + $0x160] sm:$0xff]
    %v3012 = vld [vmem:[#allocation11 + $0x168] sm:$0xff]
    %v3013 = vld [vmem:[#allocation11 + $0x170] sm:$0xff]
    %v3014 = vld [vmem:[#allocation11 + $0x178] sm:$0xff]
    %v3015 = vld [vmem:[#allocation11 + $0x180] sm:$0xff]
    %v3016 = vld [vmem:[#allocation11 + $0x188] sm:$0xff]
    %v3017 = vld [vmem:[#allocation11 + $0x190] sm:$0xff]
    %v3018 = vld [vmem:[#allocation11 + $0x198] sm:$0xff]
    %v3019 = vld [vmem:[#allocation11 + $0x1a0] sm:$0xff]
    %v3020 = vld [vmem:[#allocation11 + $0x1a8] sm:$0xff]
    %v3021 = vld [vmem:[#allocation11 + $0x1b0] sm:$0xff]
    %v3022 = vld [vmem:[#allocation11 + $0x1b8] sm:$0xff]
    %v3023 = vld [vmem:[#allocation11 + $0x1c0] sm:$0xff]
    %v3024 = vld [vmem:[#allocation11 + $0x1c8] sm:$0xff]
    %v3025 = vld [vmem:[#allocation11 + $0x1d0] sm:$0xff]
    %v3026 = vld [vmem:[#allocation11 + $0x1d8] sm:$0xff]
    %v3027 = vld [vmem:[#allocation11 + $0x1e0] sm:$0xff]
    %v3028 = vld [vmem:[#allocation11 + $0x1e8] sm:$0xff]
    %v3029 = vld [vmem:[#allocation11 + $0x1f0] sm:$0xff]
    %v3030 = vld [vmem:[#allocation11 + $0x1f8] sm:$0xff]
    %3031 = vmatpush.msra.mxu0 %v3027
    %3032 = vmatpush.msra.mxu0 %v3023
    %3033 = vmatpush.msra.mxu0 %v3019
    %3034 = vmatpush.msra.mxu0 %v3015
    %3035 = vmatpush.msra.mxu0 %v3011
    %3036 = vmatpush.msra.mxu0 %v3007
    %3037 = vmatpush.msra.mxu0 %v3003
    %3038 = vmatpush.msra.mxu0 %v2999
    %3039 = vmatpush.msra.mxu0 %v2995
    %3040 = vmatpush.msra.mxu0 %v2991
    %3041 = vmatpush.msra.mxu0 %v2987
    %3042 = vmatpush.msra.mxu0 %v2983
    %3043 = vmatpush.msra.mxu0 %v2979
    %3044 = vmatpush.msra.mxu0 %v2975
    %3045 = vmatpush.msra.mxu0 %v2971
    %3046 = vmatpush.msra.mxu0 %v2967
    %3047 = vmatmul.f32.gmra.mxu0 %v2966
    %v3048 = vpop.f32.mrf.mxu0
    %v3049 = vadd.f32 0.0, %v3048
    %3050 = vdwg.mxu0
    %3051 = vmatpush.msra.mxu0 %v3028
    %3052 = vmatpush.msra.mxu0 %v3024
    %3053 = vmatpush.msra.mxu0 %v3020
    %3054 = vmatpush.msra.mxu0 %v3016
    %3055 = vmatpush.msra.mxu0 %v3012
    %3056 = vmatpush.msra.mxu0 %v3008
    %3057 = vmatpush.msra.mxu0 %v3004
    %3058 = vmatpush.msra.mxu0 %v3000
    %3059 = vmatpush.msra.mxu0 %v2996
    %3060 = vmatpush.msra.mxu0 %v2992
    %3061 = vmatpush.msra.mxu0 %v2988
    %3062 = vmatpush.msra.mxu0 %v2984
    %3063 = vmatpush.msra.mxu0 %v2980
    %3064 = vmatpush.msra.mxu0 %v2976
    %3065 = vmatpush.msra.mxu0 %v2972
    %3066 = vmatpush.msra.mxu0 %v2968
    %3067 = vmatmul.f32.gmra.mxu0 %v2966
    %v3068 = vpop.f32.mrf.mxu0
    %v3069 = vadd.f32 0.0, %v3068
    %3070 = vdwg.mxu0
    %3071 = vmatpush.msra.mxu0 %v3029
    %3072 = vmatpush.msra.mxu0 %v3025
    %3073 = vmatpush.msra.mxu0 %v3021
    %3074 = vmatpush.msra.mxu0 %v3017
    %3075 = vmatpush.msra.mxu0 %v3013
    %3076 = vmatpush.msra.mxu0 %v3009
    %3077 = vmatpush.msra.mxu0 %v3005
    %3078 = vmatpush.msra.mxu0 %v3001
    %3079 = vmatpush.msra.mxu0 %v2997
    %3080 = vmatpush.msra.mxu0 %v2993
    %3081 = vmatpush.msra.mxu0 %v2989
    %3082 = vmatpush.msra.mxu0 %v2985
    %3083 = vmatpush.msra.mxu0 %v2981
    %3084 = vmatpush.msra.mxu0 %v2977
    %3085 = vmatpush.msra.mxu0 %v2973
    %3086 = vmatpush.msra.mxu0 %v2969
    %3087 = vmatmul.f32.gmra.mxu0 %v2966
    %v3088 = vpop.f32.mrf.mxu0
    %v3089 = vadd.f32 0.0, %v3088
    %3090 = vdwg.mxu0
    %3091 = vmatpush.msra.mxu0 %v3030
    %3092 = vmatpush.msra.mxu0 %v3026
    %3093 = vmatpush.msra.mxu0 %v3022
    %3094 = vmatpush.msra.mxu0 %v3018
    %3095 = vmatpush.msra.mxu0 %v3014
    %3096 = vmatpush.msra.mxu0 %v3010
    %3097 = vmatpush.msra.mxu0 %v3006
    %3098 = vmatpush.msra.mxu0 %v3002
    %3099 = vmatpush.msra.mxu0 %v2998
    %3100 = vmatpush.msra.mxu0 %v2994
    %3101 = vmatpush.msra.mxu0 %v2990
    %3102 = vmatpush.msra.mxu0 %v2986
    %3103 = vmatpush.msra.mxu0 %v2982
    %3104 = vmatpush.msra.mxu0 %v2978
    %3105 = vmatpush.msra.mxu0 %v2974
    %3106 = vmatpush.msra.mxu0 %v2970
    %3107 = vmatmul.f32.gmra.mxu0 %v2966
    %v3108 = vpop.f32.mrf.mxu0
    %v3109 = vadd.f32 0.0, %v3108
    %3110 = vdwg.mxu0
    %v3111 = vadd.f32 %v2962, %v3049
    %v3112 = vadd.f32 %v2963, %v3069
    %v3113 = vadd.f32 %v2964, %v3089
    %v3114 = vadd.f32 %v2965, %v3109
    %v3115 = vmul.f32 %v3111, 0.5
    %v3116 = vtanh.pop %v3115
    %v3117 = vmul.f32 %v3116, 0.5
    %v3118 = vadd.f32 %v3117, 0.5
    %v3119 = vmul.f32 %v3112, 0.5
    %v3120 = vtanh.pop %v3119
    %v3121 = vmul.f32 %v3120, 0.5
    %v3122 = vadd.f32 %v3121, 0.5
    %v3123 = vtanh.pop %v3113
    %v3124 = vmul.f32 %v3114, 0.5
    %v3125 = vtanh.pop %v3124
    %v3126 = vmul.f32 %v3125, 0.5
    %v3127 = vadd.f32 %v3126, 0.5
    %v3128 = vld [vmem:[#allocation4] sm:$0xff]
    %v3129 = vmul.f32 %v3122, %v3128
    %v3130 = vmul.f32 %v3118, %v3123
    %v3131 = vadd.f32 %v3129, %v3130
    %v3132 = vtanh.pop %v3131
    %v3133 = vmul.f32 %v3127, %v3132
    %3134 = vst [vmem:[#allocation4] sm:$0xff] %v3131
    %3135 = vst [vmem:[#allocation3] sm:$0xff] %v3133
    %s3136 = scalar_lea.vmem [#allocation13], 112
    %3137 = vst [vmem:[%s3136] sm:$0xff] %v3133
    %v3138 = vld [vmem:[#allocation2 + $0x1e0] sm:$0xff]
    %v3139 = vld [vmem:[#allocation2 + $0x1e8] sm:$0xff]
    %v3140 = vld [vmem:[#allocation2 + $0x1f0] sm:$0xff]
    %v3141 = vld [vmem:[#allocation2 + $0x1f8] sm:$0xff]
    %v3142 = vld [vmem:[#allocation3] sm:$0xff]
    %v3143 = vld [vmem:[#allocation11] sm:$0xff]
    %v3144 = vld [vmem:[#allocation11 + $0x8] sm:$0xff]
    %v3145 = vld [vmem:[#allocation11 + $0x10] sm:$0xff]
    %v3146 = vld [vmem:[#allocation11 + $0x18] sm:$0xff]
    %v3147 = vld [vmem:[#allocation11 + $0x20] sm:$0xff]
    %v3148 = vld [vmem:[#allocation11 + $0x28] sm:$0xff]
    %v3149 = vld [vmem:[#allocation11 + $0x30] sm:$0xff]
    %v3150 = vld [vmem:[#allocation11 + $0x38] sm:$0xff]
    %v3151 = vld [vmem:[#allocation11 + $0x40] sm:$0xff]
    %v3152 = vld [vmem:[#allocation11 + $0x48] sm:$0xff]
    %v3153 = vld [vmem:[#allocation11 + $0x50] sm:$0xff]
    %v3154 = vld [vmem:[#allocation11 + $0x58] sm:$0xff]
    %v3155 = vld [vmem:[#allocation11 + $0x60] sm:$0xff]
    %v3156 = vld [vmem:[#allocation11 + $0x68] sm:$0xff]
    %v3157 = vld [vmem:[#allocation11 + $0x70] sm:$0xff]
    %v3158 = vld [vmem:[#allocation11 + $0x78] sm:$0xff]
    %v3159 = vld [vmem:[#allocation11 + $0x80] sm:$0xff]
    %v3160 = vld [vmem:[#allocation11 + $0x88] sm:$0xff]
    %v3161 = vld [vmem:[#allocation11 + $0x90] sm:$0xff]
    %v3162 = vld [vmem:[#allocation11 + $0x98] sm:$0xff]
    %v3163 = vld [vmem:[#allocation11 + $0xa0] sm:$0xff]
    %v3164 = vld [vmem:[#allocation11 + $0xa8] sm:$0xff]
    %v3165 = vld [vmem:[#allocation11 + $0xb0] sm:$0xff]
    %v3166 = vld [vmem:[#allocation11 + $0xb8] sm:$0xff]
    %v3167 = vld [vmem:[#allocation11 + $0xc0] sm:$0xff]
    %v3168 = vld [vmem:[#allocation11 + $0xc8] sm:$0xff]
    %v3169 = vld [vmem:[#allocation11 + $0xd0] sm:$0xff]
    %v3170 = vld [vmem:[#allocation11 + $0xd8] sm:$0xff]
    %v3171 = vld [vmem:[#allocation11 + $0xe0] sm:$0xff]
    %v3172 = vld [vmem:[#allocation11 + $0xe8] sm:$0xff]
    %v3173 = vld [vmem:[#allocation11 + $0xf0] sm:$0xff]
    %v3174 = vld [vmem:[#allocation11 + $0xf8] sm:$0xff]
    %v3175 = vld [vmem:[#allocation11 + $0x100] sm:$0xff]
    %v3176 = vld [vmem:[#allocation11 + $0x108] sm:$0xff]
    %v3177 = vld [vmem:[#allocation11 + $0x110] sm:$0xff]
    %v3178 = vld [vmem:[#allocation11 + $0x118] sm:$0xff]
    %v3179 = vld [vmem:[#allocation11 + $0x120] sm:$0xff]
    %v3180 = vld [vmem:[#allocation11 + $0x128] sm:$0xff]
    %v3181 = vld [vmem:[#allocation11 + $0x130] sm:$0xff]
    %v3182 = vld [vmem:[#allocation11 + $0x138] sm:$0xff]
    %v3183 = vld [vmem:[#allocation11 + $0x140] sm:$0xff]
    %v3184 = vld [vmem:[#allocation11 + $0x148] sm:$0xff]
    %v3185 = vld [vmem:[#allocation11 + $0x150] sm:$0xff]
    %v3186 = vld [vmem:[#allocation11 + $0x158] sm:$0xff]
    %v3187 = vld [vmem:[#allocation11 + $0x160] sm:$0xff]
    %v3188 = vld [vmem:[#allocation11 + $0x168] sm:$0xff]
    %v3189 = vld [vmem:[#allocation11 + $0x170] sm:$0xff]
    %v3190 = vld [vmem:[#allocation11 + $0x178] sm:$0xff]
    %v3191 = vld [vmem:[#allocation11 + $0x180] sm:$0xff]
    %v3192 = vld [vmem:[#allocation11 + $0x188] sm:$0xff]
    %v3193 = vld [vmem:[#allocation11 + $0x190] sm:$0xff]
    %v3194 = vld [vmem:[#allocation11 + $0x198] sm:$0xff]
    %v3195 = vld [vmem:[#allocation11 + $0x1a0] sm:$0xff]
    %v3196 = vld [vmem:[#allocation11 + $0x1a8] sm:$0xff]
    %v3197 = vld [vmem:[#allocation11 + $0x1b0] sm:$0xff]
    %v3198 = vld [vmem:[#allocation11 + $0x1b8] sm:$0xff]
    %v3199 = vld [vmem:[#allocation11 + $0x1c0] sm:$0xff]
    %v3200 = vld [vmem:[#allocation11 + $0x1c8] sm:$0xff]
    %v3201 = vld [vmem:[#allocation11 + $0x1d0] sm:$0xff]
    %v3202 = vld [vmem:[#allocation11 + $0x1d8] sm:$0xff]
    %v3203 = vld [vmem:[#allocation11 + $0x1e0] sm:$0xff]
    %v3204 = vld [vmem:[#allocation11 + $0x1e8] sm:$0xff]
    %v3205 = vld [vmem:[#allocation11 + $0x1f0] sm:$0xff]
    %v3206 = vld [vmem:[#allocation11 + $0x1f8] sm:$0xff]
    %3207 = vmatpush.msra.mxu0 %v3203
    %3208 = vmatpush.msra.mxu0 %v3199
    %3209 = vmatpush.msra.mxu0 %v3195
    %3210 = vmatpush.msra.mxu0 %v3191
    %3211 = vmatpush.msra.mxu0 %v3187
    %3212 = vmatpush.msra.mxu0 %v3183
    %3213 = vmatpush.msra.mxu0 %v3179
    %3214 = vmatpush.msra.mxu0 %v3175
    %3215 = vmatpush.msra.mxu0 %v3171
    %3216 = vmatpush.msra.mxu0 %v3167
    %3217 = vmatpush.msra.mxu0 %v3163
    %3218 = vmatpush.msra.mxu0 %v3159
    %3219 = vmatpush.msra.mxu0 %v3155
    %3220 = vmatpush.msra.mxu0 %v3151
    %3221 = vmatpush.msra.mxu0 %v3147
    %3222 = vmatpush.msra.mxu0 %v3143
    %3223 = vmatmul.f32.gmra.mxu0 %v3142
    %v3224 = vpop.f32.mrf.mxu0
    %v3225 = vadd.f32 0.0, %v3224
    %3226 = vdwg.mxu0
    %3227 = vmatpush.msra.mxu0 %v3204
    %3228 = vmatpush.msra.mxu0 %v3200
    %3229 = vmatpush.msra.mxu0 %v3196
    %3230 = vmatpush.msra.mxu0 %v3192
    %3231 = vmatpush.msra.mxu0 %v3188
    %3232 = vmatpush.msra.mxu0 %v3184
    %3233 = vmatpush.msra.mxu0 %v3180
    %3234 = vmatpush.msra.mxu0 %v3176
    %3235 = vmatpush.msra.mxu0 %v3172
    %3236 = vmatpush.msra.mxu0 %v3168
    %3237 = vmatpush.msra.mxu0 %v3164
    %3238 = vmatpush.msra.mxu0 %v3160
    %3239 = vmatpush.msra.mxu0 %v3156
    %3240 = vmatpush.msra.mxu0 %v3152
    %3241 = vmatpush.msra.mxu0 %v3148
    %3242 = vmatpush.msra.mxu0 %v3144
    %3243 = vmatmul.f32.gmra.mxu0 %v3142
    %v3244 = vpop.f32.mrf.mxu0
    %v3245 = vadd.f32 0.0, %v3244
    %3246 = vdwg.mxu0
    %3247 = vmatpush.msra.mxu0 %v3205
    %3248 = vmatpush.msra.mxu0 %v3201
    %3249 = vmatpush.msra.mxu0 %v3197
    %3250 = vmatpush.msra.mxu0 %v3193
    %3251 = vmatpush.msra.mxu0 %v3189
    %3252 = vmatpush.msra.mxu0 %v3185
    %3253 = vmatpush.msra.mxu0 %v3181
    %3254 = vmatpush.msra.mxu0 %v3177
    %3255 = vmatpush.msra.mxu0 %v3173
    %3256 = vmatpush.msra.mxu0 %v3169
    %3257 = vmatpush.msra.mxu0 %v3165
    %3258 = vmatpush.msra.mxu0 %v3161
    %3259 = vmatpush.msra.mxu0 %v3157
    %3260 = vmatpush.msra.mxu0 %v3153
    %3261 = vmatpush.msra.mxu0 %v3149
    %3262 = vmatpush.msra.mxu0 %v3145
    %3263 = vmatmul.f32.gmra.mxu0 %v3142
    %v3264 = vpop.f32.mrf.mxu0
    %v3265 = vadd.f32 0.0, %v3264
    %3266 = vdwg.mxu0
    %3267 = vmatpush.msra.mxu0 %v3206
    %3268 = vmatpush.msra.mxu0 %v3202
    %3269 = vmatpush.msra.mxu0 %v3198
    %3270 = vmatpush.msra.mxu0 %v3194
    %3271 = vmatpush.msra.mxu0 %v3190
    %3272 = vmatpush.msra.mxu0 %v3186
    %3273 = vmatpush.msra.mxu0 %v3182
    %3274 = vmatpush.msra.mxu0 %v3178
    %3275 = vmatpush.msra.mxu0 %v3174
    %3276 = vmatpush.msra.mxu0 %v3170
    %3277 = vmatpush.msra.mxu0 %v3166
    %3278 = vmatpush.msra.mxu0 %v3162
    %3279 = vmatpush.msra.mxu0 %v3158
    %3280 = vmatpush.msra.mxu0 %v3154
    %3281 = vmatpush.msra.mxu0 %v3150
    %3282 = vmatpush.msra.mxu0 %v3146
    %3283 = vmatmul.f32.gmra.mxu0 %v3142
    %v3284 = vpop.f32.mrf.mxu0
    %v3285 = vadd.f32 0.0, %v3284
    %3286 = vdwg.mxu0
    %v3287 = vadd.f32 %v3138, %v3225
    %v3288 = vadd.f32 %v3139, %v3245
    %v3289 = vadd.f32 %v3140, %v3265
    %v3290 = vadd.f32 %v3141, %v3285
    %v3291 = vmul.f32 %v3287, 0.5
    %v3292 = vtanh.pop %v3291
    %v3293 = vmul.f32 %v3292, 0.5
    %v3294 = vadd.f32 %v3293, 0.5
    %v3295 = vmul.f32 %v3288, 0.5
    %v3296 = vtanh.pop %v3295
    %v3297 = vmul.f32 %v3296, 0.5
    %v3298 = vadd.f32 %v3297, 0.5
    %v3299 = vtanh.pop %v3289
    %v3300 = vmul.f32 %v3290, 0.5
    %v3301 = vtanh.pop %v3300
    %v3302 = vmul.f32 %v3301, 0.5
    %v3303 = vadd.f32 %v3302, 0.5
    %v3304 = vld [vmem:[#allocation4] sm:$0xff]
    %v3305 = vmul.f32 %v3298, %v3304
    %v3306 = vmul.f32 %v3294, %v3299
    %v3307 = vadd.f32 %v3305, %v3306
    %v3308 = vtanh.pop %v3307
    %v3309 = vmul.f32 %v3303, %v3308
    %3310 = vst [vmem:[#allocation4] sm:$0xff] %v3307
    %3311 = vst [vmem:[#allocation3] sm:$0xff] %v3309
    %s3312 = scalar_lea.vmem [#allocation13], 120
    %3313 = vst [vmem:[%s3312] sm:$0xff] %v3309
    // Predicated region
    $region38: #{tpu_custom_call.1} parent=1 // pred_check
      _
    $region39: #{tpu_custom_call.1} parent=1 // pred_check_branch
      %3315 = sbr.rel (0) target = $region41
    $region40: #{tpu_custom_call.1} parent=1 // pred_region
      %3317 = vsyncadd [#allocation7], 0
      %s3318 = sshll.u32 [#allocation13], 4
      %s3319 = int_to_ptr.vmem [resolvable:$true] %s3318
      %s3320 = sshll.u32 %s4, 4
      %s3321 = int_to_ptr.hbm [resolvable:$true] %s3320
      %3326 = dma.vmem_to_hbm [thread:$0]  %s3319, 2048, %s3321, [#allocation7], 128, 128, 8
    $region41: #{tpu_custom_call.1} parent=1 // pred_fallthru
      _
    // Predicated region
    $region42: #{tpu_custom_call.1} parent=1 // pred_check
      _
    $region43: #{tpu_custom_call.1} parent=1 // pred_check_branch
      %3328 = sbr.rel (0) target = $region45
    $region44: #{tpu_custom_call.1} parent=1 // pred_region
      %3330 = dma.done [#allocation7], 2048
    $region45: #{tpu_custom_call.1} parent=1 // pred_fallthru
      _
    %3331 = vsyncpa [#allocation6], 1
    %3332 = vsyncpa [#allocation9], 1
    %3333 = vsyncpa [#allocation12], 1
    %3334 = vsyncpa [#allocation7], 1

</llo_original>
